<compile_context>
chip_gen: v7x
topology: tpu7x:2x2x1
jax: 0.10.0
libtpu: 0.0.40
codegen_flags: <defaults>
</compile_context>

<pallas_src>
import jax
import jax.numpy as jnp
from jax import lax
from jax.experimental import pallas as pl
from jax.experimental.pallas import tpu as pltpu

N_SAMPLES = 8       # samples per ray (sublane axis: exactly one vreg row-block)
HIDDEN = 32         # MLP hidden width
TILE_RAYS = 2048    # rays per grid step (lane axis of the VMEM tile)
CHUNK = 256         # inner-loop ray chunk: every [NS, CHUNK] f32 tensor is 2 vregs

assert TILE_RAYS % CHUNK == 0


def _raycast_kernel(rb_ref,                         # [8, TILE]  VMEM (o, d, near, far)
                    w1_ref, b1_ref, w2_ref, b2_ref,  # SMEM: (3,H), (H,), (H,4), (4,)
                    small_ref,                       # [8, TILE]  rows: r,g,b,disp,acc,0,0,0
                    weights_ref, alpha_ref):         # [NS, TILE] each
    f32 = jnp.float32
    NS = N_SAMPLES
    H = HIDDEN
    C = CHUNK
    n_chunks = rb_ref.shape[1] // C

    # chunk-invariant [NS, C] constants (hoisted out of the chunk loop)
    row = lax.broadcasted_iota(jnp.int32, (NS, C), 0)
    t = row.astype(f32) * (1.0 / (NS - 1))
    is_last = row == (NS - 1)

    def chunk_body(j, carry):
        start = pl.multiple_of(j * C, C)
        sl = pl.ds(start, C)

        rb = rb_ref[:, sl]                            # [8, C]
        ox, oy, oz = rb[0:1], rb[1:2], rb[2:3]
        dx, dy, dz = rb[3:4], rb[4:5], rb[5:6]
        near, far = rb[6:7], rb[7:8]                  # [1, C]

        # ---- per-ray geometry (computed up front so dx/dy/dz die before the MLP loop) ----
        span = far - near                             # [1, C]
        d_norm = jnp.sqrt(dx * dx + dy * dy + dz * dz)
        step = span * (1.0 / (NS - 1))                # linear sampling: equal gaps

        # ---- sample_pts (perturb = 0, lindisp = False) ----
        z_vals = near + span * t                      # [NS, C]
        px = ox + dx * z_vals
        py = oy + dy * z_vals
        pz = oz + dz * z_vals

        # ---- tiny NeRF MLP, exact f32 on the VPU (weights as SMEM scalars) ----
        acc_r = jnp.zeros((NS, C), f32)
        acc_g = jnp.zeros((NS, C), f32)
        acc_b = jnp.zeros((NS, C), f32)
        acc_s = jnp.zeros((NS, C), f32)
        for c in range(H):                            # static unroll, H = 32
            h_c = jnp.maximum(px * w1_ref[0, c] + py * w1_ref[1, c]
                              + pz * w1_ref[2, c] + b1_ref[c], 0.0)
            acc_r = acc_r + h_c * w2_ref[c, 0]
            acc_g = acc_g + h_c * w2_ref[c, 1]
            acc_b = acc_b + h_c * w2_ref[c, 2]
            acc_s = acc_s + h_c * w2_ref[c, 3]

        rgb_r = jax.nn.sigmoid(acc_r + b2_ref[0])     # [NS, C]
        rgb_g = jax.nn.sigmoid(acc_g + b2_ref[1])
        rgb_b = jax.nn.sigmoid(acc_b + b2_ref[2])
        sigma = jnp.maximum(acc_s + b2_ref[3], 0.0)

        # ---- raw2outputs (volume rendering) ----
        dists = jnp.where(is_last, 1e10, step) * d_norm       # [NS, C]
        alpha = 1.0 - jnp.exp(-sigma * dists)
        one_minus = 1.0 - alpha + 1e-10

        # exclusive cumulative product along the 8-row sample axis, no sublane concat:
        # splat the running product into the matching row of T_i.
        T_i = jnp.ones((NS, C), f32)
        run = jnp.ones((1, C), f32)
        for s in range(1, NS):
            run = run * one_minus[s - 1:s, :]
            T_i = jnp.where(row == s, run, T_i)
        weights = alpha * T_i                                  # [NS, C]

        acc_map = jnp.sum(weights, axis=0, keepdims=True)      # [1, C]
        depth = jnp.sum(weights * z_vals, axis=0, keepdims=True)
        r_map = jnp.sum(weights * rgb_r, axis=0, keepdims=True)
        g_map = jnp.sum(weights * rgb_g, axis=0, keepdims=True)
        b_map = jnp.sum(weights * rgb_b, axis=0, keepdims=True)

        # disp = 1 / max(1e-10, depth / max(acc, 1e-10)); divides moved to the EUP slot
        inv_acc = pl.reciprocal(jnp.maximum(acc_map, 1e-10), approx=True)
        disp = pl.reciprocal(jnp.maximum(depth * inv_acc, 1e-10), approx=True)

        # lane-dense stores into the per-step VMEM output tiles
        weights_ref[:, sl] = weights
        alpha_ref[:, sl] = alpha
        small_ref[0:1, sl] = r_map
        small_ref[1:2, sl] = g_map
        small_ref[2:3, sl] = b_map
        small_ref[3:4, sl] = disp
        small_ref[4:5, sl] = acc_map
        small_ref[5:8, sl] = jnp.zeros((3, C), f32)
        return carry

    lax.fori_loop(0, n_chunks, chunk_body, 0)


def raycast_render_rays(ray_batch, params):
    """RayCaster.render_rays hot path. ray_batch: [N_rays, >=8] f32."""
    N_rays = ray_batch.shape[0]

    w1, b1, w2_rgb, b2_rgb, w2_sig, b2_sig = params
    # fuse the two head matmuls into one [H, 4] weight / [4] bias
    w2 = jnp.concatenate([w2_rgb, w2_sig], axis=1)                  # [H, 4]
    b2 = jnp.concatenate([b2_rgb, b2_sig], axis=1).reshape(-1)      # [4]
    b1v = b1.reshape(-1)                                            # [H]

    # pad ragged ray counts to a multiple of TILE_RAYS; padded rays are sliced off below
    n_tiles = (N_rays + TILE_RAYS - 1) // TILE_RAYS
    N_pad = n_tiles * TILE_RAYS
    rb8 = ray_batch[:, :8]                                          # drop unused viewdirs
    if N_pad != N_rays:
        rb8 = jnp.concatenate(
            [rb8, jnp.zeros((N_pad - N_rays, 8), rb8.dtype)], axis=0)
    rb8_t = rb8.T                                                   # [8, N_pad], lane-dense

    grid = (n_tiles,)
    smem = pl.BlockSpec(memory_space=pltpu.MemorySpace.SMEM)

    out_shapes = (
        jax.ShapeDtypeStruct((8, N_pad), jnp.float32),              # packed rgb/disp/acc
        jax.ShapeDtypeStruct((N_SAMPLES, N_pad), jnp.float32),      # weights^T
        jax.ShapeDtypeStruct((N_SAMPLES, N_pad), jnp.float32),      # alpha^T
    )
    out_specs = [
        pl.BlockSpec((8, TILE_RAYS), lambda i: (0, i)),
        pl.BlockSpec((N_SAMPLES, TILE_RAYS), lambda i: (0, i)),
        pl.BlockSpec((N_SAMPLES, TILE_RAYS), lambda i: (0, i)),
    ]

    small_t, w_t, a_t = pl.pallas_call(
        _raycast_kernel,
        out_shape=out_shapes,
        grid_spec=pltpu.PrefetchScalarGridSpec(
            num_scalar_prefetch=0,
            grid=grid,
            in_specs=[pl.BlockSpec((8, TILE_RAYS), lambda i: (0, i)),
                      smem, smem, smem, smem],
            out_specs=out_specs,
        ),
        compiler_params=pltpu.CompilerParams(dimension_semantics=("parallel",)),
    )(rb8_t, w1, b1v, w2, b2)

    small_t = small_t[:, :N_rays]
    w_t = w_t[:, :N_rays]
    a_t = a_t[:, :N_rays]

    # mirrors RayCaster._collect_outputs (note: 'T_i' is bound to weights, as in the module)
    # TODO(synk): drop these transposes if downstream accepts [*, N_rays] layouts.
    return {
        "rgb_map": small_t[0:3].T,   # [N_rays, 3]
        "disp_map": small_t[3],      # [N_rays]
        "acc_map": small_t[4],       # [N_rays]
        "alpha": a_t.T,              # [N_rays, NS]
        "T_i": w_t.T,                # [N_rays, NS]
    }


def _reference(ray_batch, params):
    """Pure-JAX reference of the same math (for sanity checking)."""
    hp = jax.lax.Precision.HIGHEST   # scoped per-matmul; no global precision side effect
    w1, b1, w2_rgb, b2_rgb, w2_sig, b2_sig = params
    rays_o, rays_d = ray_batch[:, 0:3], ray_batch[:, 3:6]
    near, far = ray_batch[:, 6:7], ray_batch[:, 7:8]
    t = jnp.linspace(0.0, 1.0, N_SAMPLES)[None, :]
    z_vals = near * (1 - t) + far * t
    pts = rays_o[:, None, :] + rays_d[:, None, :] * z_vals[:, :, None]
    h = jnp.maximum(jnp.matmul(pts, w1, precision=hp) + b1, 0.0)
    rgb = jax.nn.sigmoid(jnp.matmul(h, w2_rgb, precision=hp) + b2_rgb)
    sigma = jnp.maximum((jnp.matmul(h, w2_sig, precision=hp) + b2_sig)[..., 0], 0.0)
    dists = jnp.concatenate([z_vals[:, 1:] - z_vals[:, :-1],
                             jnp.full((z_vals.shape[0], 1), 1e10)], -1)
    dists = dists * jnp.linalg.norm(rays_d, axis=-1, keepdims=True)
    alpha = 1.0 - jnp.exp(-sigma * dists)
    T = jnp.cumprod(jnp.concatenate(
        [jnp.ones((alpha.shape[0], 1)), 1.0 - alpha + 1e-10], -1), -1)[:, :-1]
    weights = alpha * T
    rgb_map = jnp.sum(weights[..., None] * rgb, axis=1)
    depth = jnp.sum(weights * z_vals, -1)
    acc = jnp.sum(weights, -1)
    disp = 1.0 / jnp.maximum(1e-10, depth / jnp.maximum(acc, 1e-10))
    return rgb_map, disp, acc, weights, alpha


if __name__ == "__main__":
    key = jax.random.PRNGKey(0)
    k_o, k_d, k_w1, k_b1, k_w2r, k_w2s = jax.random.split(key, 6)

    N_rays = 4096   # 2 grid steps of 2048 rays (keeps both v7x TensorCores busy)
    rays_o = jax.random.normal(k_o, (N_rays, 3), jnp.float32) * 0.1
    rays_d = jax.random.normal(k_d, (N_rays, 3), jnp.float32)
    rays_d = rays_d / jnp.linalg.norm(rays_d, axis=-1, keepdims=True)
    near = jnp.full((N_rays, 1), 2.0, jnp.float32)
    far = jnp.full((N_rays, 1), 6.0, jnp.float32)
    viewdirs = rays_d
    ray_batch = jnp.concatenate([rays_o, rays_d, near, far, viewdirs], axis=-1)  # [N, 11]

    # deterministic synthetic NeRF MLP parameters
    w1 = jax.random.normal(k_w1, (3, HIDDEN), jnp.float32) * 0.5
    b1 = jax.random.normal(k_b1, (1, HIDDEN), jnp.float32) * 0.1
    w2_rgb = jax.random.normal(k_w2r, (HIDDEN, 3), jnp.float32) * 0.3
    b2_rgb = jnp.zeros((1, 3), jnp.float32)
    w2_sig = jax.random.normal(k_w2s, (HIDDEN, 1), jnp.float32) * 0.3
    b2_sig = jnp.full((1, 1), 0.1, jnp.float32)
    params = (w1, b1, w2_rgb, b2_rgb, w2_sig, b2_sig)

    out = jax.jit(raycast_render_rays)(ray_batch, params)
    jax.block_until_ready(out)

    # sanity check against a pure-JAX reference
    ref_rgb, ref_disp, ref_acc, ref_w, ref_a = _reference(ray_batch, params)
    assert jnp.allclose(out["rgb_map"], ref_rgb, atol=1e-3, rtol=1e-3)
    # disp uses the EUP approximate reciprocal (~1e-4 rel err) -> slightly looser check
    assert jnp.allclose(out["disp_map"], ref_disp, atol=2e-3, rtol=2e-3)
    assert jnp.allclose(out["acc_map"], ref_acc, atol=1e-3, rtol=1e-3)
    assert jnp.allclose(out["T_i"], ref_w, atol=1e-3, rtol=1e-3)
    assert jnp.allclose(out["alpha"], ref_a, atol=1e-3, rtol=1e-3)

    print("KERNEL_OK")
</pallas_src>

<mosaic_0001>
module attributes {stable_mosaic.version = 11 : i64} {
  func.func @_raycast_kernel(%arg0: i32, %arg1: memref<8x2048xf32, #tpu.memory_space<vmem>>, %arg2: memref<3x32xf32, #tpu.memory_space<smem>>, %arg3: memref<32xf32, #tpu.memory_space<smem>>, %arg4: memref<32x4xf32, #tpu.memory_space<smem>>, %arg5: memref<4xf32, #tpu.memory_space<smem>>, %arg6: memref<8x2048xf32, #tpu.memory_space<vmem>>, %arg7: memref<8x2048xf32, #tpu.memory_space<vmem>>, %arg8: memref<8x2048xf32, #tpu.memory_space<vmem>>) attributes {dimension_semantics = [#tpu.dimension_semantics<parallel>], iteration_bounds = array<i64: 2>, scalar_prefetch = 0 : i64, scratch_operands = 0 : i64, tpu.core_type = #tpu.core_type<tc>, window_params = [{transform_indices = @transform_0, window_bounds = array<i64: 8, 2048>}, {transform_indices = @transform_1, window_bounds = array<i64: 3, 32>}, {transform_indices = @transform_2, window_bounds = array<i64: 32>}, {transform_indices = @transform_3, window_bounds = array<i64: 32, 4>}, {transform_indices = @transform_4, window_bounds = array<i64: 4>}, {transform_indices = @transform_5, window_bounds = array<i64: 8, 2048>}, {transform_indices = @transform_6, window_bounds = array<i64: 8, 2048>}, {transform_indices = @transform_7, window_bounds = array<i64: 8, 2048>}]} {
    %0 = tpu.iota {dimensions = array<i32: 0>} : vector<8x256xi32>
    %1 = arith.sitofp %0 : vector<8x256xi32> to vector<8x256xf32>
    %cst = arith.constant 0.142857149 : f32
    %2 = vector.broadcast %cst : f32 to vector<8x256xf32>
    %3 = arith.mulf %1, %2 : vector<8x256xf32>
    %c7_i32 = arith.constant 7 : i32
    %4 = vector.broadcast %c7_i32 : i32 to vector<8x256xi32>
    %5 = arith.cmpi eq, %0, %4 : vector<8x256xi32>
    %c0_i32 = arith.constant 0 : i32
    %c8_i32 = arith.constant 8 : i32
    %6 = arith.addi %c0_i32, %c8_i32 : i32
    %c1_i32 = arith.constant 1 : i32
    scf.for %arg9 = %c0_i32 to %6 step %c1_i32  : i32 {
      %c256_i32 = arith.constant 256 : i32
      %7 = arith.muli %arg9, %c256_i32 : i32
      %8 = tpu.assume_multiple %7, 256 : i32
      %c0 = arith.constant 0 : index
      %9 = arith.index_cast %8 : i32 to index
      %10 = vector.load %arg1[%c0, %9] : memref<8x2048xf32, #tpu.memory_space<vmem>>, vector<8x256xf32>
      %11 = vector.extract_strided_slice %10 {offsets = [0, 0], sizes = [1, 256], strides = [1, 1]} : vector<8x256xf32> to vector<1x256xf32>
      %12 = vector.extract_strided_slice %10 {offsets = [1, 0], sizes = [1, 256], strides = [1, 1]} : vector<8x256xf32> to vector<1x256xf32>
      %13 = vector.extract_strided_slice %10 {offsets = [2, 0], sizes = [1, 256], strides = [1, 1]} : vector<8x256xf32> to vector<1x256xf32>
      %14 = vector.extract_strided_slice %10 {offsets = [3, 0], sizes = [1, 256], strides = [1, 1]} : vector<8x256xf32> to vector<1x256xf32>
      %15 = vector.extract_strided_slice %10 {offsets = [4, 0], sizes = [1, 256], strides = [1, 1]} : vector<8x256xf32> to vector<1x256xf32>
      %16 = vector.extract_strided_slice %10 {offsets = [5, 0], sizes = [1, 256], strides = [1, 1]} : vector<8x256xf32> to vector<1x256xf32>
      %17 = vector.extract_strided_slice %10 {offsets = [6, 0], sizes = [1, 256], strides = [1, 1]} : vector<8x256xf32> to vector<1x256xf32>
      %18 = vector.extract_strided_slice %10 {offsets = [7, 0], sizes = [1, 256], strides = [1, 1]} : vector<8x256xf32> to vector<1x256xf32>
      %19 = arith.subf %18, %17 : vector<1x256xf32>
      %20 = arith.mulf %14, %14 : vector<1x256xf32>
      %21 = arith.mulf %15, %15 : vector<1x256xf32>
      %22 = arith.addf %20, %21 : vector<1x256xf32>
      %23 = arith.mulf %16, %16 : vector<1x256xf32>
      %24 = arith.addf %22, %23 : vector<1x256xf32>
      %25 = math.sqrt %24 : vector<1x256xf32>
      %cst_1 = arith.constant 0.142857149 : f32
      %26 = vector.broadcast %cst_1 : f32 to vector<1x256xf32>
      %27 = arith.mulf %19, %26 : vector<1x256xf32>
      %28 = vector.broadcast %19 : vector<1x256xf32> to vector<8x256xf32>
      %29 = arith.mulf %28, %3 : vector<8x256xf32>
      %30 = vector.broadcast %17 : vector<1x256xf32> to vector<8x256xf32>
      %31 = arith.addf %30, %29 : vector<8x256xf32>
      %32 = vector.broadcast %14 : vector<1x256xf32> to vector<8x256xf32>
      %33 = arith.mulf %32, %31 : vector<8x256xf32>
      %34 = vector.broadcast %11 : vector<1x256xf32> to vector<8x256xf32>
      %35 = arith.addf %34, %33 : vector<8x256xf32>
      %36 = vector.broadcast %15 : vector<1x256xf32> to vector<8x256xf32>
      %37 = arith.mulf %36, %31 : vector<8x256xf32>
      %38 = vector.broadcast %12 : vector<1x256xf32> to vector<8x256xf32>
      %39 = arith.addf %38, %37 : vector<8x256xf32>
      %40 = vector.broadcast %16 : vector<1x256xf32> to vector<8x256xf32>
      %41 = arith.mulf %40, %31 : vector<8x256xf32>
      %42 = vector.broadcast %13 : vector<1x256xf32> to vector<8x256xf32>
      %43 = arith.addf %42, %41 : vector<8x256xf32>
      %cst_2 = arith.constant 0.000000e+00 : f32
      %44 = vector.broadcast %cst_2 : f32 to vector<8x256xf32>
      %cst_3 = arith.constant 0.000000e+00 : f32
      %45 = vector.broadcast %cst_3 : f32 to vector<8x256xf32>
      %cst_4 = arith.constant 0.000000e+00 : f32
      %46 = vector.broadcast %cst_4 : f32 to vector<8x256xf32>
      %cst_5 = arith.constant 0.000000e+00 : f32
      %47 = vector.broadcast %cst_5 : f32 to vector<8x256xf32>
      %c0_6 = arith.constant 0 : index
      %c0_7 = arith.constant 0 : index
      %48 = memref.load %arg2[%c0_6, %c0_7] : memref<3x32xf32, #tpu.memory_space<smem>>
      %49 = vector.broadcast %48 : f32 to vector<8x256xf32>
      %50 = arith.mulf %35, %49 : vector<8x256xf32>
      %c1 = arith.constant 1 : index
      %c0_8 = arith.constant 0 : index
      %51 = memref.load %arg2[%c1, %c0_8] : memref<3x32xf32, #tpu.memory_space<smem>>
      %52 = vector.broadcast %51 : f32 to vector<8x256xf32>
      %53 = arith.mulf %39, %52 : vector<8x256xf32>
      %54 = arith.addf %50, %53 : vector<8x256xf32>
      %c2 = arith.constant 2 : index
      %c0_9 = arith.constant 0 : index
      %55 = memref.load %arg2[%c2, %c0_9] : memref<3x32xf32, #tpu.memory_space<smem>>
      %56 = vector.broadcast %55 : f32 to vector<8x256xf32>
      %57 = arith.mulf %43, %56 : vector<8x256xf32>
      %58 = arith.addf %54, %57 : vector<8x256xf32>
      %c0_10 = arith.constant 0 : index
      %59 = memref.load %arg3[%c0_10] : memref<32xf32, #tpu.memory_space<smem>>
      %60 = vector.broadcast %59 : f32 to vector<8x256xf32>
      %61 = arith.addf %58, %60 : vector<8x256xf32>
      %cst_11 = arith.constant 0.000000e+00 : f32
      %62 = vector.broadcast %cst_11 : f32 to vector<8x256xf32>
      %63 = arith.maximumf %61, %62 : vector<8x256xf32>
      %c0_12 = arith.constant 0 : index
      %c0_13 = arith.constant 0 : index
      %64 = memref.load %arg4[%c0_12, %c0_13] : memref<32x4xf32, #tpu.memory_space<smem>>
      %65 = vector.broadcast %64 : f32 to vector<8x256xf32>
      %66 = arith.mulf %63, %65 : vector<8x256xf32>
      %67 = arith.addf %44, %66 : vector<8x256xf32>
      %c0_14 = arith.constant 0 : index
      %c1_15 = arith.constant 1 : index
      %68 = memref.load %arg4[%c0_14, %c1_15] : memref<32x4xf32, #tpu.memory_space<smem>>
      %69 = vector.broadcast %68 : f32 to vector<8x256xf32>
      %70 = arith.mulf %63, %69 : vector<8x256xf32>
      %71 = arith.addf %45, %70 : vector<8x256xf32>
      %c0_16 = arith.constant 0 : index
      %c2_17 = arith.constant 2 : index
      %72 = memref.load %arg4[%c0_16, %c2_17] : memref<32x4xf32, #tpu.memory_space<smem>>
      %73 = vector.broadcast %72 : f32 to vector<8x256xf32>
      %74 = arith.mulf %63, %73 : vector<8x256xf32>
      %75 = arith.addf %46, %74 : vector<8x256xf32>
      %c0_18 = arith.constant 0 : index
      %c3 = arith.constant 3 : index
      %76 = memref.load %arg4[%c0_18, %c3] : memref<32x4xf32, #tpu.memory_space<smem>>
      %77 = vector.broadcast %76 : f32 to vector<8x256xf32>
      %78 = arith.mulf %63, %77 : vector<8x256xf32>
      %79 = arith.addf %47, %78 : vector<8x256xf32>
      %c0_19 = arith.constant 0 : index
      %c1_20 = arith.constant 1 : index
      %80 = memref.load %arg2[%c0_19, %c1_20] : memref<3x32xf32, #tpu.memory_space<smem>>
      %81 = vector.broadcast %80 : f32 to vector<8x256xf32>
      %82 = arith.mulf %35, %81 : vector<8x256xf32>
      %c1_21 = arith.constant 1 : index
      %c1_22 = arith.constant 1 : index
      %83 = memref.load %arg2[%c1_21, %c1_22] : memref<3x32xf32, #tpu.memory_space<smem>>
      %84 = vector.broadcast %83 : f32 to vector<8x256xf32>
      %85 = arith.mulf %39, %84 : vector<8x256xf32>
      %86 = arith.addf %82, %85 : vector<8x256xf32>
      %c2_23 = arith.constant 2 : index
      %c1_24 = arith.constant 1 : index
      %87 = memref.load %arg2[%c2_23, %c1_24] : memref<3x32xf32, #tpu.memory_space<smem>>
      %88 = vector.broadcast %87 : f32 to vector<8x256xf32>
      %89 = arith.mulf %43, %88 : vector<8x256xf32>
      %90 = arith.addf %86, %89 : vector<8x256xf32>
      %c1_25 = arith.constant 1 : index
      %91 = memref.load %arg3[%c1_25] : memref<32xf32, #tpu.memory_space<smem>>
      %92 = vector.broadcast %91 : f32 to vector<8x256xf32>
      %93 = arith.addf %90, %92 : vector<8x256xf32>
      %cst_26 = arith.constant 0.000000e+00 : f32
      %94 = vector.broadcast %cst_26 : f32 to vector<8x256xf32>
      %95 = arith.maximumf %93, %94 : vector<8x256xf32>
      %c1_27 = arith.constant 1 : index
      %c0_28 = arith.constant 0 : index
      %96 = memref.load %arg4[%c1_27, %c0_28] : memref<32x4xf32, #tpu.memory_space<smem>>
      %97 = vector.broadcast %96 : f32 to vector<8x256xf32>
      %98 = arith.mulf %95, %97 : vector<8x256xf32>
      %99 = arith.addf %67, %98 : vector<8x256xf32>
      %c1_29 = arith.constant 1 : index
      %c1_30 = arith.constant 1 : index
      %100 = memref.load %arg4[%c1_29, %c1_30] : memref<32x4xf32, #tpu.memory_space<smem>>
      %101 = vector.broadcast %100 : f32 to vector<8x256xf32>
      %102 = arith.mulf %95, %101 : vector<8x256xf32>
      %103 = arith.addf %71, %102 : vector<8x256xf32>
      %c1_31 = arith.constant 1 : index
      %c2_32 = arith.constant 2 : index
      %104 = memref.load %arg4[%c1_31, %c2_32] : memref<32x4xf32, #tpu.memory_space<smem>>
      %105 = vector.broadcast %104 : f32 to vector<8x256xf32>
      %106 = arith.mulf %95, %105 : vector<8x256xf32>
      %107 = arith.addf %75, %106 : vector<8x256xf32>
      %c1_33 = arith.constant 1 : index
      %c3_34 = arith.constant 3 : index
      %108 = memref.load %arg4[%c1_33, %c3_34] : memref<32x4xf32, #tpu.memory_space<smem>>
      %109 = vector.broadcast %108 : f32 to vector<8x256xf32>
      %110 = arith.mulf %95, %109 : vector<8x256xf32>
      %111 = arith.addf %79, %110 : vector<8x256xf32>
      %c0_35 = arith.constant 0 : index
      %c2_36 = arith.constant 2 : index
      %112 = memref.load %arg2[%c0_35, %c2_36] : memref<3x32xf32, #tpu.memory_space<smem>>
      %113 = vector.broadcast %112 : f32 to vector<8x256xf32>
      %114 = arith.mulf %35, %113 : vector<8x256xf32>
      %c1_37 = arith.constant 1 : index
      %c2_38 = arith.constant 2 : index
      %115 = memref.load %arg2[%c1_37, %c2_38] : memref<3x32xf32, #tpu.memory_space<smem>>
      %116 = vector.broadcast %115 : f32 to vector<8x256xf32>
      %117 = arith.mulf %39, %116 : vector<8x256xf32>
      %118 = arith.addf %114, %117 : vector<8x256xf32>
      %c2_39 = arith.constant 2 : index
      %c2_40 = arith.constant 2 : index
      %119 = memref.load %arg2[%c2_39, %c2_40] : memref<3x32xf32, #tpu.memory_space<smem>>
      %120 = vector.broadcast %119 : f32 to vector<8x256xf32>
      %121 = arith.mulf %43, %120 : vector<8x256xf32>
      %122 = arith.addf %118, %121 : vector<8x256xf32>
      %c2_41 = arith.constant 2 : index
      %123 = memref.load %arg3[%c2_41] : memref<32xf32, #tpu.memory_space<smem>>
      %124 = vector.broadcast %123 : f32 to vector<8x256xf32>
      %125 = arith.addf %122, %124 : vector<8x256xf32>
      %cst_42 = arith.constant 0.000000e+00 : f32
      %126 = vector.broadcast %cst_42 : f32 to vector<8x256xf32>
      %127 = arith.maximumf %125, %126 : vector<8x256xf32>
      %c2_43 = arith.constant 2 : index
      %c0_44 = arith.constant 0 : index
      %128 = memref.load %arg4[%c2_43, %c0_44] : memref<32x4xf32, #tpu.memory_space<smem>>
      %129 = vector.broadcast %128 : f32 to vector<8x256xf32>
      %130 = arith.mulf %127, %129 : vector<8x256xf32>
      %131 = arith.addf %99, %130 : vector<8x256xf32>
      %c2_45 = arith.constant 2 : index
      %c1_46 = arith.constant 1 : index
      %132 = memref.load %arg4[%c2_45, %c1_46] : memref<32x4xf32, #tpu.memory_space<smem>>
      %133 = vector.broadcast %132 : f32 to vector<8x256xf32>
      %134 = arith.mulf %127, %133 : vector<8x256xf32>
      %135 = arith.addf %103, %134 : vector<8x256xf32>
      %c2_47 = arith.constant 2 : index
      %c2_48 = arith.constant 2 : index
      %136 = memref.load %arg4[%c2_47, %c2_48] : memref<32x4xf32, #tpu.memory_space<smem>>
      %137 = vector.broadcast %136 : f32 to vector<8x256xf32>
      %138 = arith.mulf %127, %137 : vector<8x256xf32>
      %139 = arith.addf %107, %138 : vector<8x256xf32>
      %c2_49 = arith.constant 2 : index
      %c3_50 = arith.constant 3 : index
      %140 = memref.load %arg4[%c2_49, %c3_50] : memref<32x4xf32, #tpu.memory_space<smem>>
      %141 = vector.broadcast %140 : f32 to vector<8x256xf32>
      %142 = arith.mulf %127, %141 : vector<8x256xf32>
      %143 = arith.addf %111, %142 : vector<8x256xf32>
      %c0_51 = arith.constant 0 : index
      %c3_52 = arith.constant 3 : index
      %144 = memref.load %arg2[%c0_51, %c3_52] : memref<3x32xf32, #tpu.memory_space<smem>>
      %145 = vector.broadcast %144 : f32 to vector<8x256xf32>
      %146 = arith.mulf %35, %145 : vector<8x256xf32>
      %c1_53 = arith.constant 1 : index
      %c3_54 = arith.constant 3 : index
      %147 = memref.load %arg2[%c1_53, %c3_54] : memref<3x32xf32, #tpu.memory_space<smem>>
      %148 = vector.broadcast %147 : f32 to vector<8x256xf32>
      %149 = arith.mulf %39, %148 : vector<8x256xf32>
      %150 = arith.addf %146, %149 : vector<8x256xf32>
      %c2_55 = arith.constant 2 : index
      %c3_56 = arith.constant 3 : index
      %151 = memref.load %arg2[%c2_55, %c3_56] : memref<3x32xf32, #tpu.memory_space<smem>>
      %152 = vector.broadcast %151 : f32 to vector<8x256xf32>
      %153 = arith.mulf %43, %152 : vector<8x256xf32>
      %154 = arith.addf %150, %153 : vector<8x256xf32>
      %c3_57 = arith.constant 3 : index
      %155 = memref.load %arg3[%c3_57] : memref<32xf32, #tpu.memory_space<smem>>
      %156 = vector.broadcast %155 : f32 to vector<8x256xf32>
      %157 = arith.addf %154, %156 : vector<8x256xf32>
      %cst_58 = arith.constant 0.000000e+00 : f32
      %158 = vector.broadcast %cst_58 : f32 to vector<8x256xf32>
      %159 = arith.maximumf %157, %158 : vector<8x256xf32>
      %c3_59 = arith.constant 3 : index
      %c0_60 = arith.constant 0 : index
      %160 = memref.load %arg4[%c3_59, %c0_60] : memref<32x4xf32, #tpu.memory_space<smem>>
      %161 = vector.broadcast %160 : f32 to vector<8x256xf32>
      %162 = arith.mulf %159, %161 : vector<8x256xf32>
      %163 = arith.addf %131, %162 : vector<8x256xf32>
      %c3_61 = arith.constant 3 : index
      %c1_62 = arith.constant 1 : index
      %164 = memref.load %arg4[%c3_61, %c1_62] : memref<32x4xf32, #tpu.memory_space<smem>>
      %165 = vector.broadcast %164 : f32 to vector<8x256xf32>
      %166 = arith.mulf %159, %165 : vector<8x256xf32>
      %167 = arith.addf %135, %166 : vector<8x256xf32>
      %c3_63 = arith.constant 3 : index
      %c2_64 = arith.constant 2 : index
      %168 = memref.load %arg4[%c3_63, %c2_64] : memref<32x4xf32, #tpu.memory_space<smem>>
      %169 = vector.broadcast %168 : f32 to vector<8x256xf32>
      %170 = arith.mulf %159, %169 : vector<8x256xf32>
      %171 = arith.addf %139, %170 : vector<8x256xf32>
      %c3_65 = arith.constant 3 : index
      %c3_66 = arith.constant 3 : index
      %172 = memref.load %arg4[%c3_65, %c3_66] : memref<32x4xf32, #tpu.memory_space<smem>>
      %173 = vector.broadcast %172 : f32 to vector<8x256xf32>
      %174 = arith.mulf %159, %173 : vector<8x256xf32>
      %175 = arith.addf %143, %174 : vector<8x256xf32>
      %c0_67 = arith.constant 0 : index
      %c4 = arith.constant 4 : index
      %176 = memref.load %arg2[%c0_67, %c4] : memref<3x32xf32, #tpu.memory_space<smem>>
      %177 = vector.broadcast %176 : f32 to vector<8x256xf32>
      %178 = arith.mulf %35, %177 : vector<8x256xf32>
      %c1_68 = arith.constant 1 : index
      %c4_69 = arith.constant 4 : index
      %179 = memref.load %arg2[%c1_68, %c4_69] : memref<3x32xf32, #tpu.memory_space<smem>>
      %180 = vector.broadcast %179 : f32 to vector<8x256xf32>
      %181 = arith.mulf %39, %180 : vector<8x256xf32>
      %182 = arith.addf %178, %181 : vector<8x256xf32>
      %c2_70 = arith.constant 2 : index
      %c4_71 = arith.constant 4 : index
      %183 = memref.load %arg2[%c2_70, %c4_71] : memref<3x32xf32, #tpu.memory_space<smem>>
      %184 = vector.broadcast %183 : f32 to vector<8x256xf32>
      %185 = arith.mulf %43, %184 : vector<8x256xf32>
      %186 = arith.addf %182, %185 : vector<8x256xf32>
      %c4_72 = arith.constant 4 : index
      %187 = memref.load %arg3[%c4_72] : memref<32xf32, #tpu.memory_space<smem>>
      %188 = vector.broadcast %187 : f32 to vector<8x256xf32>
      %189 = arith.addf %186, %188 : vector<8x256xf32>
      %cst_73 = arith.constant 0.000000e+00 : f32
      %190 = vector.broadcast %cst_73 : f32 to vector<8x256xf32>
      %191 = arith.maximumf %189, %190 : vector<8x256xf32>
      %c4_74 = arith.constant 4 : index
      %c0_75 = arith.constant 0 : index
      %192 = memref.load %arg4[%c4_74, %c0_75] : memref<32x4xf32, #tpu.memory_space<smem>>
      %193 = vector.broadcast %192 : f32 to vector<8x256xf32>
      %194 = arith.mulf %191, %193 : vector<8x256xf32>
      %195 = arith.addf %163, %194 : vector<8x256xf32>
      %c4_76 = arith.constant 4 : index
      %c1_77 = arith.constant 1 : index
      %196 = memref.load %arg4[%c4_76, %c1_77] : memref<32x4xf32, #tpu.memory_space<smem>>
      %197 = vector.broadcast %196 : f32 to vector<8x256xf32>
      %198 = arith.mulf %191, %197 : vector<8x256xf32>
      %199 = arith.addf %167, %198 : vector<8x256xf32>
      %c4_78 = arith.constant 4 : index
      %c2_79 = arith.constant 2 : index
      %200 = memref.load %arg4[%c4_78, %c2_79] : memref<32x4xf32, #tpu.memory_space<smem>>
      %201 = vector.broadcast %200 : f32 to vector<8x256xf32>
      %202 = arith.mulf %191, %201 : vector<8x256xf32>
      %203 = arith.addf %171, %202 : vector<8x256xf32>
      %c4_80 = arith.constant 4 : index
      %c3_81 = arith.constant 3 : index
      %204 = memref.load %arg4[%c4_80, %c3_81] : memref<32x4xf32, #tpu.memory_space<smem>>
      %205 = vector.broadcast %204 : f32 to vector<8x256xf32>
      %206 = arith.mulf %191, %205 : vector<8x256xf32>
      %207 = arith.addf %175, %206 : vector<8x256xf32>
      %c0_82 = arith.constant 0 : index
      %c5 = arith.constant 5 : index
      %208 = memref.load %arg2[%c0_82, %c5] : memref<3x32xf32, #tpu.memory_space<smem>>
      %209 = vector.broadcast %208 : f32 to vector<8x256xf32>
      %210 = arith.mulf %35, %209 : vector<8x256xf32>
      %c1_83 = arith.constant 1 : index
      %c5_84 = arith.constant 5 : index
      %211 = memref.load %arg2[%c1_83, %c5_84] : memref<3x32xf32, #tpu.memory_space<smem>>
      %212 = vector.broadcast %211 : f32 to vector<8x256xf32>
      %213 = arith.mulf %39, %212 : vector<8x256xf32>
      %214 = arith.addf %210, %213 : vector<8x256xf32>
      %c2_85 = arith.constant 2 : index
      %c5_86 = arith.constant 5 : index
      %215 = memref.load %arg2[%c2_85, %c5_86] : memref<3x32xf32, #tpu.memory_space<smem>>
      %216 = vector.broadcast %215 : f32 to vector<8x256xf32>
      %217 = arith.mulf %43, %216 : vector<8x256xf32>
      %218 = arith.addf %214, %217 : vector<8x256xf32>
      %c5_87 = arith.constant 5 : index
      %219 = memref.load %arg3[%c5_87] : memref<32xf32, #tpu.memory_space<smem>>
      %220 = vector.broadcast %219 : f32 to vector<8x256xf32>
      %221 = arith.addf %218, %220 : vector<8x256xf32>
      %cst_88 = arith.constant 0.000000e+00 : f32
      %222 = vector.broadcast %cst_88 : f32 to vector<8x256xf32>
      %223 = arith.maximumf %221, %222 : vector<8x256xf32>
      %c5_89 = arith.constant 5 : index
      %c0_90 = arith.constant 0 : index
      %224 = memref.load %arg4[%c5_89, %c0_90] : memref<32x4xf32, #tpu.memory_space<smem>>
      %225 = vector.broadcast %224 : f32 to vector<8x256xf32>
      %226 = arith.mulf %223, %225 : vector<8x256xf32>
      %227 = arith.addf %195, %226 : vector<8x256xf32>
      %c5_91 = arith.constant 5 : index
      %c1_92 = arith.constant 1 : index
      %228 = memref.load %arg4[%c5_91, %c1_92] : memref<32x4xf32, #tpu.memory_space<smem>>
      %229 = vector.broadcast %228 : f32 to vector<8x256xf32>
      %230 = arith.mulf %223, %229 : vector<8x256xf32>
      %231 = arith.addf %199, %230 : vector<8x256xf32>
      %c5_93 = arith.constant 5 : index
      %c2_94 = arith.constant 2 : index
      %232 = memref.load %arg4[%c5_93, %c2_94] : memref<32x4xf32, #tpu.memory_space<smem>>
      %233 = vector.broadcast %232 : f32 to vector<8x256xf32>
      %234 = arith.mulf %223, %233 : vector<8x256xf32>
      %235 = arith.addf %203, %234 : vector<8x256xf32>
      %c5_95 = arith.constant 5 : index
      %c3_96 = arith.constant 3 : index
      %236 = memref.load %arg4[%c5_95, %c3_96] : memref<32x4xf32, #tpu.memory_space<smem>>
      %237 = vector.broadcast %236 : f32 to vector<8x256xf32>
      %238 = arith.mulf %223, %237 : vector<8x256xf32>
      %239 = arith.addf %207, %238 : vector<8x256xf32>
      %c0_97 = arith.constant 0 : index
      %c6 = arith.constant 6 : index
      %240 = memref.load %arg2[%c0_97, %c6] : memref<3x32xf32, #tpu.memory_space<smem>>
      %241 = vector.broadcast %240 : f32 to vector<8x256xf32>
      %242 = arith.mulf %35, %241 : vector<8x256xf32>
      %c1_98 = arith.constant 1 : index
      %c6_99 = arith.constant 6 : index
      %243 = memref.load %arg2[%c1_98, %c6_99] : memref<3x32xf32, #tpu.memory_space<smem>>
      %244 = vector.broadcast %243 : f32 to vector<8x256xf32>
      %245 = arith.mulf %39, %244 : vector<8x256xf32>
      %246 = arith.addf %242, %245 : vector<8x256xf32>
      %c2_100 = arith.constant 2 : index
      %c6_101 = arith.constant 6 : index
      %247 = memref.load %arg2[%c2_100, %c6_101] : memref<3x32xf32, #tpu.memory_space<smem>>
      %248 = vector.broadcast %247 : f32 to vector<8x256xf32>
      %249 = arith.mulf %43, %248 : vector<8x256xf32>
      %250 = arith.addf %246, %249 : vector<8x256xf32>
      %c6_102 = arith.constant 6 : index
      %251 = memref.load %arg3[%c6_102] : memref<32xf32, #tpu.memory_space<smem>>
      %252 = vector.broadcast %251 : f32 to vector<8x256xf32>
      %253 = arith.addf %250, %252 : vector<8x256xf32>
      %cst_103 = arith.constant 0.000000e+00 : f32
      %254 = vector.broadcast %cst_103 : f32 to vector<8x256xf32>
      %255 = arith.maximumf %253, %254 : vector<8x256xf32>
      %c6_104 = arith.constant 6 : index
      %c0_105 = arith.constant 0 : index
      %256 = memref.load %arg4[%c6_104, %c0_105] : memref<32x4xf32, #tpu.memory_space<smem>>
      %257 = vector.broadcast %256 : f32 to vector<8x256xf32>
      %258 = arith.mulf %255, %257 : vector<8x256xf32>
      %259 = arith.addf %227, %258 : vector<8x256xf32>
      %c6_106 = arith.constant 6 : index
      %c1_107 = arith.constant 1 : index
      %260 = memref.load %arg4[%c6_106, %c1_107] : memref<32x4xf32, #tpu.memory_space<smem>>
      %261 = vector.broadcast %260 : f32 to vector<8x256xf32>
      %262 = arith.mulf %255, %261 : vector<8x256xf32>
      %263 = arith.addf %231, %262 : vector<8x256xf32>
      %c6_108 = arith.constant 6 : index
      %c2_109 = arith.constant 2 : index
      %264 = memref.load %arg4[%c6_108, %c2_109] : memref<32x4xf32, #tpu.memory_space<smem>>
      %265 = vector.broadcast %264 : f32 to vector<8x256xf32>
      %266 = arith.mulf %255, %265 : vector<8x256xf32>
      %267 = arith.addf %235, %266 : vector<8x256xf32>
      %c6_110 = arith.constant 6 : index
      %c3_111 = arith.constant 3 : index
      %268 = memref.load %arg4[%c6_110, %c3_111] : memref<32x4xf32, #tpu.memory_space<smem>>
      %269 = vector.broadcast %268 : f32 to vector<8x256xf32>
      %270 = arith.mulf %255, %269 : vector<8x256xf32>
      %271 = arith.addf %239, %270 : vector<8x256xf32>
      %c0_112 = arith.constant 0 : index
      %c7 = arith.constant 7 : index
      %272 = memref.load %arg2[%c0_112, %c7] : memref<3x32xf32, #tpu.memory_space<smem>>
      %273 = vector.broadcast %272 : f32 to vector<8x256xf32>
      %274 = arith.mulf %35, %273 : vector<8x256xf32>
      %c1_113 = arith.constant 1 : index
      %c7_114 = arith.constant 7 : index
      %275 = memref.load %arg2[%c1_113, %c7_114] : memref<3x32xf32, #tpu.memory_space<smem>>
      %276 = vector.broadcast %275 : f32 to vector<8x256xf32>
      %277 = arith.mulf %39, %276 : vector<8x256xf32>
      %278 = arith.addf %274, %277 : vector<8x256xf32>
      %c2_115 = arith.constant 2 : index
      %c7_116 = arith.constant 7 : index
      %279 = memref.load %arg2[%c2_115, %c7_116] : memref<3x32xf32, #tpu.memory_space<smem>>
      %280 = vector.broadcast %279 : f32 to vector<8x256xf32>
      %281 = arith.mulf %43, %280 : vector<8x256xf32>
      %282 = arith.addf %278, %281 : vector<8x256xf32>
      %c7_117 = arith.constant 7 : index
      %283 = memref.load %arg3[%c7_117] : memref<32xf32, #tpu.memory_space<smem>>
      %284 = vector.broadcast %283 : f32 to vector<8x256xf32>
      %285 = arith.addf %282, %284 : vector<8x256xf32>
      %cst_118 = arith.constant 0.000000e+00 : f32
      %286 = vector.broadcast %cst_118 : f32 to vector<8x256xf32>
      %287 = arith.maximumf %285, %286 : vector<8x256xf32>
      %c7_119 = arith.constant 7 : index
      %c0_120 = arith.constant 0 : index
      %288 = memref.load %arg4[%c7_119, %c0_120] : memref<32x4xf32, #tpu.memory_space<smem>>
      %289 = vector.broadcast %288 : f32 to vector<8x256xf32>
      %290 = arith.mulf %287, %289 : vector<8x256xf32>
      %291 = arith.addf %259, %290 : vector<8x256xf32>
      %c7_121 = arith.constant 7 : index
      %c1_122 = arith.constant 1 : index
      %292 = memref.load %arg4[%c7_121, %c1_122] : memref<32x4xf32, #tpu.memory_space<smem>>
      %293 = vector.broadcast %292 : f32 to vector<8x256xf32>
      %294 = arith.mulf %287, %293 : vector<8x256xf32>
      %295 = arith.addf %263, %294 : vector<8x256xf32>
      %c7_123 = arith.constant 7 : index
      %c2_124 = arith.constant 2 : index
      %296 = memref.load %arg4[%c7_123, %c2_124] : memref<32x4xf32, #tpu.memory_space<smem>>
      %297 = vector.broadcast %296 : f32 to vector<8x256xf32>
      %298 = arith.mulf %287, %297 : vector<8x256xf32>
      %299 = arith.addf %267, %298 : vector<8x256xf32>
      %c7_125 = arith.constant 7 : index
      %c3_126 = arith.constant 3 : index
      %300 = memref.load %arg4[%c7_125, %c3_126] : memref<32x4xf32, #tpu.memory_space<smem>>
      %301 = vector.broadcast %300 : f32 to vector<8x256xf32>
      %302 = arith.mulf %287, %301 : vector<8x256xf32>
      %303 = arith.addf %271, %302 : vector<8x256xf32>
      %c0_127 = arith.constant 0 : index
      %c8 = arith.constant 8 : index
      %304 = memref.load %arg2[%c0_127, %c8] : memref<3x32xf32, #tpu.memory_space<smem>>
      %305 = vector.broadcast %304 : f32 to vector<8x256xf32>
      %306 = arith.mulf %35, %305 : vector<8x256xf32>
      %c1_128 = arith.constant 1 : index
      %c8_129 = arith.constant 8 : index
      %307 = memref.load %arg2[%c1_128, %c8_129] : memref<3x32xf32, #tpu.memory_space<smem>>
      %308 = vector.broadcast %307 : f32 to vector<8x256xf32>
      %309 = arith.mulf %39, %308 : vector<8x256xf32>
      %310 = arith.addf %306, %309 : vector<8x256xf32>
      %c2_130 = arith.constant 2 : index
      %c8_131 = arith.constant 8 : index
      %311 = memref.load %arg2[%c2_130, %c8_131] : memref<3x32xf32, #tpu.memory_space<smem>>
      %312 = vector.broadcast %311 : f32 to vector<8x256xf32>
      %313 = arith.mulf %43, %312 : vector<8x256xf32>
      %314 = arith.addf %310, %313 : vector<8x256xf32>
      %c8_132 = arith.constant 8 : index
      %315 = memref.load %arg3[%c8_132] : memref<32xf32, #tpu.memory_space<smem>>
      %316 = vector.broadcast %315 : f32 to vector<8x256xf32>
      %317 = arith.addf %314, %316 : vector<8x256xf32>
      %cst_133 = arith.constant 0.000000e+00 : f32
      %318 = vector.broadcast %cst_133 : f32 to vector<8x256xf32>
      %319 = arith.maximumf %317, %318 : vector<8x256xf32>
      %c8_134 = arith.constant 8 : index
      %c0_135 = arith.constant 0 : index
      %320 = memref.load %arg4[%c8_134, %c0_135] : memref<32x4xf32, #tpu.memory_space<smem>>
      %321 = vector.broadcast %320 : f32 to vector<8x256xf32>
      %322 = arith.mulf %319, %321 : vector<8x256xf32>
      %323 = arith.addf %291, %322 : vector<8x256xf32>
      %c8_136 = arith.constant 8 : index
      %c1_137 = arith.constant 1 : index
      %324 = memref.load %arg4[%c8_136, %c1_137] : memref<32x4xf32, #tpu.memory_space<smem>>
      %325 = vector.broadcast %324 : f32 to vector<8x256xf32>
      %326 = arith.mulf %319, %325 : vector<8x256xf32>
      %327 = arith.addf %295, %326 : vector<8x256xf32>
      %c8_138 = arith.constant 8 : index
      %c2_139 = arith.constant 2 : index
      %328 = memref.load %arg4[%c8_138, %c2_139] : memref<32x4xf32, #tpu.memory_space<smem>>
      %329 = vector.broadcast %328 : f32 to vector<8x256xf32>
      %330 = arith.mulf %319, %329 : vector<8x256xf32>
      %331 = arith.addf %299, %330 : vector<8x256xf32>
      %c8_140 = arith.constant 8 : index
      %c3_141 = arith.constant 3 : index
      %332 = memref.load %arg4[%c8_140, %c3_141] : memref<32x4xf32, #tpu.memory_space<smem>>
      %333 = vector.broadcast %332 : f32 to vector<8x256xf32>
      %334 = arith.mulf %319, %333 : vector<8x256xf32>
      %335 = arith.addf %303, %334 : vector<8x256xf32>
      %c0_142 = arith.constant 0 : index
      %c9 = arith.constant 9 : index
      %336 = memref.load %arg2[%c0_142, %c9] : memref<3x32xf32, #tpu.memory_space<smem>>
      %337 = vector.broadcast %336 : f32 to vector<8x256xf32>
      %338 = arith.mulf %35, %337 : vector<8x256xf32>
      %c1_143 = arith.constant 1 : index
      %c9_144 = arith.constant 9 : index
      %339 = memref.load %arg2[%c1_143, %c9_144] : memref<3x32xf32, #tpu.memory_space<smem>>
      %340 = vector.broadcast %339 : f32 to vector<8x256xf32>
      %341 = arith.mulf %39, %340 : vector<8x256xf32>
      %342 = arith.addf %338, %341 : vector<8x256xf32>
      %c2_145 = arith.constant 2 : index
      %c9_146 = arith.constant 9 : index
      %343 = memref.load %arg2[%c2_145, %c9_146] : memref<3x32xf32, #tpu.memory_space<smem>>
      %344 = vector.broadcast %343 : f32 to vector<8x256xf32>
      %345 = arith.mulf %43, %344 : vector<8x256xf32>
      %346 = arith.addf %342, %345 : vector<8x256xf32>
      %c9_147 = arith.constant 9 : index
      %347 = memref.load %arg3[%c9_147] : memref<32xf32, #tpu.memory_space<smem>>
      %348 = vector.broadcast %347 : f32 to vector<8x256xf32>
      %349 = arith.addf %346, %348 : vector<8x256xf32>
      %cst_148 = arith.constant 0.000000e+00 : f32
      %350 = vector.broadcast %cst_148 : f32 to vector<8x256xf32>
      %351 = arith.maximumf %349, %350 : vector<8x256xf32>
      %c9_149 = arith.constant 9 : index
      %c0_150 = arith.constant 0 : index
      %352 = memref.load %arg4[%c9_149, %c0_150] : memref<32x4xf32, #tpu.memory_space<smem>>
      %353 = vector.broadcast %352 : f32 to vector<8x256xf32>
      %354 = arith.mulf %351, %353 : vector<8x256xf32>
      %355 = arith.addf %323, %354 : vector<8x256xf32>
      %c9_151 = arith.constant 9 : index
      %c1_152 = arith.constant 1 : index
      %356 = memref.load %arg4[%c9_151, %c1_152] : memref<32x4xf32, #tpu.memory_space<smem>>
      %357 = vector.broadcast %356 : f32 to vector<8x256xf32>
      %358 = arith.mulf %351, %357 : vector<8x256xf32>
      %359 = arith.addf %327, %358 : vector<8x256xf32>
      %c9_153 = arith.constant 9 : index
      %c2_154 = arith.constant 2 : index
      %360 = memref.load %arg4[%c9_153, %c2_154] : memref<32x4xf32, #tpu.memory_space<smem>>
      %361 = vector.broadcast %360 : f32 to vector<8x256xf32>
      %362 = arith.mulf %351, %361 : vector<8x256xf32>
      %363 = arith.addf %331, %362 : vector<8x256xf32>
      %c9_155 = arith.constant 9 : index
      %c3_156 = arith.constant 3 : index
      %364 = memref.load %arg4[%c9_155, %c3_156] : memref<32x4xf32, #tpu.memory_space<smem>>
      %365 = vector.broadcast %364 : f32 to vector<8x256xf32>
      %366 = arith.mulf %351, %365 : vector<8x256xf32>
      %367 = arith.addf %335, %366 : vector<8x256xf32>
      %c0_157 = arith.constant 0 : index
      %c10 = arith.constant 10 : index
      %368 = memref.load %arg2[%c0_157, %c10] : memref<3x32xf32, #tpu.memory_space<smem>>
      %369 = vector.broadcast %368 : f32 to vector<8x256xf32>
      %370 = arith.mulf %35, %369 : vector<8x256xf32>
      %c1_158 = arith.constant 1 : index
      %c10_159 = arith.constant 10 : index
      %371 = memref.load %arg2[%c1_158, %c10_159] : memref<3x32xf32, #tpu.memory_space<smem>>
      %372 = vector.broadcast %371 : f32 to vector<8x256xf32>
      %373 = arith.mulf %39, %372 : vector<8x256xf32>
      %374 = arith.addf %370, %373 : vector<8x256xf32>
      %c2_160 = arith.constant 2 : index
      %c10_161 = arith.constant 10 : index
      %375 = memref.load %arg2[%c2_160, %c10_161] : memref<3x32xf32, #tpu.memory_space<smem>>
      %376 = vector.broadcast %375 : f32 to vector<8x256xf32>
      %377 = arith.mulf %43, %376 : vector<8x256xf32>
      %378 = arith.addf %374, %377 : vector<8x256xf32>
      %c10_162 = arith.constant 10 : index
      %379 = memref.load %arg3[%c10_162] : memref<32xf32, #tpu.memory_space<smem>>
      %380 = vector.broadcast %379 : f32 to vector<8x256xf32>
      %381 = arith.addf %378, %380 : vector<8x256xf32>
      %cst_163 = arith.constant 0.000000e+00 : f32
      %382 = vector.broadcast %cst_163 : f32 to vector<8x256xf32>
      %383 = arith.maximumf %381, %382 : vector<8x256xf32>
      %c10_164 = arith.constant 10 : index
      %c0_165 = arith.constant 0 : index
      %384 = memref.load %arg4[%c10_164, %c0_165] : memref<32x4xf32, #tpu.memory_space<smem>>
      %385 = vector.broadcast %384 : f32 to vector<8x256xf32>
      %386 = arith.mulf %383, %385 : vector<8x256xf32>
      %387 = arith.addf %355, %386 : vector<8x256xf32>
      %c10_166 = arith.constant 10 : index
      %c1_167 = arith.constant 1 : index
      %388 = memref.load %arg4[%c10_166, %c1_167] : memref<32x4xf32, #tpu.memory_space<smem>>
      %389 = vector.broadcast %388 : f32 to vector<8x256xf32>
      %390 = arith.mulf %383, %389 : vector<8x256xf32>
      %391 = arith.addf %359, %390 : vector<8x256xf32>
      %c10_168 = arith.constant 10 : index
      %c2_169 = arith.constant 2 : index
      %392 = memref.load %arg4[%c10_168, %c2_169] : memref<32x4xf32, #tpu.memory_space<smem>>
      %393 = vector.broadcast %392 : f32 to vector<8x256xf32>
      %394 = arith.mulf %383, %393 : vector<8x256xf32>
      %395 = arith.addf %363, %394 : vector<8x256xf32>
      %c10_170 = arith.constant 10 : index
      %c3_171 = arith.constant 3 : index
      %396 = memref.load %arg4[%c10_170, %c3_171] : memref<32x4xf32, #tpu.memory_space<smem>>
      %397 = vector.broadcast %396 : f32 to vector<8x256xf32>
      %398 = arith.mulf %383, %397 : vector<8x256xf32>
      %399 = arith.addf %367, %398 : vector<8x256xf32>
      %c0_172 = arith.constant 0 : index
      %c11 = arith.constant 11 : index
      %400 = memref.load %arg2[%c0_172, %c11] : memref<3x32xf32, #tpu.memory_space<smem>>
      %401 = vector.broadcast %400 : f32 to vector<8x256xf32>
      %402 = arith.mulf %35, %401 : vector<8x256xf32>
      %c1_173 = arith.constant 1 : index
      %c11_174 = arith.constant 11 : index
      %403 = memref.load %arg2[%c1_173, %c11_174] : memref<3x32xf32, #tpu.memory_space<smem>>
      %404 = vector.broadcast %403 : f32 to vector<8x256xf32>
      %405 = arith.mulf %39, %404 : vector<8x256xf32>
      %406 = arith.addf %402, %405 : vector<8x256xf32>
      %c2_175 = arith.constant 2 : index
      %c11_176 = arith.constant 11 : index
      %407 = memref.load %arg2[%c2_175, %c11_176] : memref<3x32xf32, #tpu.memory_space<smem>>
      %408 = vector.broadcast %407 : f32 to vector<8x256xf32>
      %409 = arith.mulf %43, %408 : vector<8x256xf32>
      %410 = arith.addf %406, %409 : vector<8x256xf32>
      %c11_177 = arith.constant 11 : index
      %411 = memref.load %arg3[%c11_177] : memref<32xf32, #tpu.memory_space<smem>>
      %412 = vector.broadcast %411 : f32 to vector<8x256xf32>
      %413 = arith.addf %410, %412 : vector<8x256xf32>
      %cst_178 = arith.constant 0.000000e+00 : f32
      %414 = vector.broadcast %cst_178 : f32 to vector<8x256xf32>
      %415 = arith.maximumf %413, %414 : vector<8x256xf32>
      %c11_179 = arith.constant 11 : index
      %c0_180 = arith.constant 0 : index
      %416 = memref.load %arg4[%c11_179, %c0_180] : memref<32x4xf32, #tpu.memory_space<smem>>
      %417 = vector.broadcast %416 : f32 to vector<8x256xf32>
      %418 = arith.mulf %415, %417 : vector<8x256xf32>
      %419 = arith.addf %387, %418 : vector<8x256xf32>
      %c11_181 = arith.constant 11 : index
      %c1_182 = arith.constant 1 : index
      %420 = memref.load %arg4[%c11_181, %c1_182] : memref<32x4xf32, #tpu.memory_space<smem>>
      %421 = vector.broadcast %420 : f32 to vector<8x256xf32>
      %422 = arith.mulf %415, %421 : vector<8x256xf32>
      %423 = arith.addf %391, %422 : vector<8x256xf32>
      %c11_183 = arith.constant 11 : index
      %c2_184 = arith.constant 2 : index
      %424 = memref.load %arg4[%c11_183, %c2_184] : memref<32x4xf32, #tpu.memory_space<smem>>
      %425 = vector.broadcast %424 : f32 to vector<8x256xf32>
      %426 = arith.mulf %415, %425 : vector<8x256xf32>
      %427 = arith.addf %395, %426 : vector<8x256xf32>
      %c11_185 = arith.constant 11 : index
      %c3_186 = arith.constant 3 : index
      %428 = memref.load %arg4[%c11_185, %c3_186] : memref<32x4xf32, #tpu.memory_space<smem>>
      %429 = vector.broadcast %428 : f32 to vector<8x256xf32>
      %430 = arith.mulf %415, %429 : vector<8x256xf32>
      %431 = arith.addf %399, %430 : vector<8x256xf32>
      %c0_187 = arith.constant 0 : index
      %c12 = arith.constant 12 : index
      %432 = memref.load %arg2[%c0_187, %c12] : memref<3x32xf32, #tpu.memory_space<smem>>
      %433 = vector.broadcast %432 : f32 to vector<8x256xf32>
      %434 = arith.mulf %35, %433 : vector<8x256xf32>
      %c1_188 = arith.constant 1 : index
      %c12_189 = arith.constant 12 : index
      %435 = memref.load %arg2[%c1_188, %c12_189] : memref<3x32xf32, #tpu.memory_space<smem>>
      %436 = vector.broadcast %435 : f32 to vector<8x256xf32>
      %437 = arith.mulf %39, %436 : vector<8x256xf32>
      %438 = arith.addf %434, %437 : vector<8x256xf32>
      %c2_190 = arith.constant 2 : index
      %c12_191 = arith.constant 12 : index
      %439 = memref.load %arg2[%c2_190, %c12_191] : memref<3x32xf32, #tpu.memory_space<smem>>
      %440 = vector.broadcast %439 : f32 to vector<8x256xf32>
      %441 = arith.mulf %43, %440 : vector<8x256xf32>
      %442 = arith.addf %438, %441 : vector<8x256xf32>
      %c12_192 = arith.constant 12 : index
      %443 = memref.load %arg3[%c12_192] : memref<32xf32, #tpu.memory_space<smem>>
      %444 = vector.broadcast %443 : f32 to vector<8x256xf32>
      %445 = arith.addf %442, %444 : vector<8x256xf32>
      %cst_193 = arith.constant 0.000000e+00 : f32
      %446 = vector.broadcast %cst_193 : f32 to vector<8x256xf32>
      %447 = arith.maximumf %445, %446 : vector<8x256xf32>
      %c12_194 = arith.constant 12 : index
      %c0_195 = arith.constant 0 : index
      %448 = memref.load %arg4[%c12_194, %c0_195] : memref<32x4xf32, #tpu.memory_space<smem>>
      %449 = vector.broadcast %448 : f32 to vector<8x256xf32>
      %450 = arith.mulf %447, %449 : vector<8x256xf32>
      %451 = arith.addf %419, %450 : vector<8x256xf32>
      %c12_196 = arith.constant 12 : index
      %c1_197 = arith.constant 1 : index
      %452 = memref.load %arg4[%c12_196, %c1_197] : memref<32x4xf32, #tpu.memory_space<smem>>
      %453 = vector.broadcast %452 : f32 to vector<8x256xf32>
      %454 = arith.mulf %447, %453 : vector<8x256xf32>
      %455 = arith.addf %423, %454 : vector<8x256xf32>
      %c12_198 = arith.constant 12 : index
      %c2_199 = arith.constant 2 : index
      %456 = memref.load %arg4[%c12_198, %c2_199] : memref<32x4xf32, #tpu.memory_space<smem>>
      %457 = vector.broadcast %456 : f32 to vector<8x256xf32>
      %458 = arith.mulf %447, %457 : vector<8x256xf32>
      %459 = arith.addf %427, %458 : vector<8x256xf32>
      %c12_200 = arith.constant 12 : index
      %c3_201 = arith.constant 3 : index
      %460 = memref.load %arg4[%c12_200, %c3_201] : memref<32x4xf32, #tpu.memory_space<smem>>
      %461 = vector.broadcast %460 : f32 to vector<8x256xf32>
      %462 = arith.mulf %447, %461 : vector<8x256xf32>
      %463 = arith.addf %431, %462 : vector<8x256xf32>
      %c0_202 = arith.constant 0 : index
      %c13 = arith.constant 13 : index
      %464 = memref.load %arg2[%c0_202, %c13] : memref<3x32xf32, #tpu.memory_space<smem>>
      %465 = vector.broadcast %464 : f32 to vector<8x256xf32>
      %466 = arith.mulf %35, %465 : vector<8x256xf32>
      %c1_203 = arith.constant 1 : index
      %c13_204 = arith.constant 13 : index
      %467 = memref.load %arg2[%c1_203, %c13_204] : memref<3x32xf32, #tpu.memory_space<smem>>
      %468 = vector.broadcast %467 : f32 to vector<8x256xf32>
      %469 = arith.mulf %39, %468 : vector<8x256xf32>
      %470 = arith.addf %466, %469 : vector<8x256xf32>
      %c2_205 = arith.constant 2 : index
      %c13_206 = arith.constant 13 : index
      %471 = memref.load %arg2[%c2_205, %c13_206] : memref<3x32xf32, #tpu.memory_space<smem>>
      %472 = vector.broadcast %471 : f32 to vector<8x256xf32>
      %473 = arith.mulf %43, %472 : vector<8x256xf32>
      %474 = arith.addf %470, %473 : vector<8x256xf32>
      %c13_207 = arith.constant 13 : index
      %475 = memref.load %arg3[%c13_207] : memref<32xf32, #tpu.memory_space<smem>>
      %476 = vector.broadcast %475 : f32 to vector<8x256xf32>
      %477 = arith.addf %474, %476 : vector<8x256xf32>
      %cst_208 = arith.constant 0.000000e+00 : f32
      %478 = vector.broadcast %cst_208 : f32 to vector<8x256xf32>
      %479 = arith.maximumf %477, %478 : vector<8x256xf32>
      %c13_209 = arith.constant 13 : index
      %c0_210 = arith.constant 0 : index
      %480 = memref.load %arg4[%c13_209, %c0_210] : memref<32x4xf32, #tpu.memory_space<smem>>
      %481 = vector.broadcast %480 : f32 to vector<8x256xf32>
      %482 = arith.mulf %479, %481 : vector<8x256xf32>
      %483 = arith.addf %451, %482 : vector<8x256xf32>
      %c13_211 = arith.constant 13 : index
      %c1_212 = arith.constant 1 : index
      %484 = memref.load %arg4[%c13_211, %c1_212] : memref<32x4xf32, #tpu.memory_space<smem>>
      %485 = vector.broadcast %484 : f32 to vector<8x256xf32>
      %486 = arith.mulf %479, %485 : vector<8x256xf32>
      %487 = arith.addf %455, %486 : vector<8x256xf32>
      %c13_213 = arith.constant 13 : index
      %c2_214 = arith.constant 2 : index
      %488 = memref.load %arg4[%c13_213, %c2_214] : memref<32x4xf32, #tpu.memory_space<smem>>
      %489 = vector.broadcast %488 : f32 to vector<8x256xf32>
      %490 = arith.mulf %479, %489 : vector<8x256xf32>
      %491 = arith.addf %459, %490 : vector<8x256xf32>
      %c13_215 = arith.constant 13 : index
      %c3_216 = arith.constant 3 : index
      %492 = memref.load %arg4[%c13_215, %c3_216] : memref<32x4xf32, #tpu.memory_space<smem>>
      %493 = vector.broadcast %492 : f32 to vector<8x256xf32>
      %494 = arith.mulf %479, %493 : vector<8x256xf32>
      %495 = arith.addf %463, %494 : vector<8x256xf32>
      %c0_217 = arith.constant 0 : index
      %c14 = arith.constant 14 : index
      %496 = memref.load %arg2[%c0_217, %c14] : memref<3x32xf32, #tpu.memory_space<smem>>
      %497 = vector.broadcast %496 : f32 to vector<8x256xf32>
      %498 = arith.mulf %35, %497 : vector<8x256xf32>
      %c1_218 = arith.constant 1 : index
      %c14_219 = arith.constant 14 : index
      %499 = memref.load %arg2[%c1_218, %c14_219] : memref<3x32xf32, #tpu.memory_space<smem>>
      %500 = vector.broadcast %499 : f32 to vector<8x256xf32>
      %501 = arith.mulf %39, %500 : vector<8x256xf32>
      %502 = arith.addf %498, %501 : vector<8x256xf32>
      %c2_220 = arith.constant 2 : index
      %c14_221 = arith.constant 14 : index
      %503 = memref.load %arg2[%c2_220, %c14_221] : memref<3x32xf32, #tpu.memory_space<smem>>
      %504 = vector.broadcast %503 : f32 to vector<8x256xf32>
      %505 = arith.mulf %43, %504 : vector<8x256xf32>
      %506 = arith.addf %502, %505 : vector<8x256xf32>
      %c14_222 = arith.constant 14 : index
      %507 = memref.load %arg3[%c14_222] : memref<32xf32, #tpu.memory_space<smem>>
      %508 = vector.broadcast %507 : f32 to vector<8x256xf32>
      %509 = arith.addf %506, %508 : vector<8x256xf32>
      %cst_223 = arith.constant 0.000000e+00 : f32
      %510 = vector.broadcast %cst_223 : f32 to vector<8x256xf32>
      %511 = arith.maximumf %509, %510 : vector<8x256xf32>
      %c14_224 = arith.constant 14 : index
      %c0_225 = arith.constant 0 : index
      %512 = memref.load %arg4[%c14_224, %c0_225] : memref<32x4xf32, #tpu.memory_space<smem>>
      %513 = vector.broadcast %512 : f32 to vector<8x256xf32>
      %514 = arith.mulf %511, %513 : vector<8x256xf32>
      %515 = arith.addf %483, %514 : vector<8x256xf32>
      %c14_226 = arith.constant 14 : index
      %c1_227 = arith.constant 1 : index
      %516 = memref.load %arg4[%c14_226, %c1_227] : memref<32x4xf32, #tpu.memory_space<smem>>
      %517 = vector.broadcast %516 : f32 to vector<8x256xf32>
      %518 = arith.mulf %511, %517 : vector<8x256xf32>
      %519 = arith.addf %487, %518 : vector<8x256xf32>
      %c14_228 = arith.constant 14 : index
      %c2_229 = arith.constant 2 : index
      %520 = memref.load %arg4[%c14_228, %c2_229] : memref<32x4xf32, #tpu.memory_space<smem>>
      %521 = vector.broadcast %520 : f32 to vector<8x256xf32>
      %522 = arith.mulf %511, %521 : vector<8x256xf32>
      %523 = arith.addf %491, %522 : vector<8x256xf32>
      %c14_230 = arith.constant 14 : index
      %c3_231 = arith.constant 3 : index
      %524 = memref.load %arg4[%c14_230, %c3_231] : memref<32x4xf32, #tpu.memory_space<smem>>
      %525 = vector.broadcast %524 : f32 to vector<8x256xf32>
      %526 = arith.mulf %511, %525 : vector<8x256xf32>
      %527 = arith.addf %495, %526 : vector<8x256xf32>
      %c0_232 = arith.constant 0 : index
      %c15 = arith.constant 15 : index
      %528 = memref.load %arg2[%c0_232, %c15] : memref<3x32xf32, #tpu.memory_space<smem>>
      %529 = vector.broadcast %528 : f32 to vector<8x256xf32>
      %530 = arith.mulf %35, %529 : vector<8x256xf32>
      %c1_233 = arith.constant 1 : index
      %c15_234 = arith.constant 15 : index
      %531 = memref.load %arg2[%c1_233, %c15_234] : memref<3x32xf32, #tpu.memory_space<smem>>
      %532 = vector.broadcast %531 : f32 to vector<8x256xf32>
      %533 = arith.mulf %39, %532 : vector<8x256xf32>
      %534 = arith.addf %530, %533 : vector<8x256xf32>
      %c2_235 = arith.constant 2 : index
      %c15_236 = arith.constant 15 : index
      %535 = memref.load %arg2[%c2_235, %c15_236] : memref<3x32xf32, #tpu.memory_space<smem>>
      %536 = vector.broadcast %535 : f32 to vector<8x256xf32>
      %537 = arith.mulf %43, %536 : vector<8x256xf32>
      %538 = arith.addf %534, %537 : vector<8x256xf32>
      %c15_237 = arith.constant 15 : index
      %539 = memref.load %arg3[%c15_237] : memref<32xf32, #tpu.memory_space<smem>>
      %540 = vector.broadcast %539 : f32 to vector<8x256xf32>
      %541 = arith.addf %538, %540 : vector<8x256xf32>
      %cst_238 = arith.constant 0.000000e+00 : f32
      %542 = vector.broadcast %cst_238 : f32 to vector<8x256xf32>
      %543 = arith.maximumf %541, %542 : vector<8x256xf32>
      %c15_239 = arith.constant 15 : index
      %c0_240 = arith.constant 0 : index
      %544 = memref.load %arg4[%c15_239, %c0_240] : memref<32x4xf32, #tpu.memory_space<smem>>
      %545 = vector.broadcast %544 : f32 to vector<8x256xf32>
      %546 = arith.mulf %543, %545 : vector<8x256xf32>
      %547 = arith.addf %515, %546 : vector<8x256xf32>
      %c15_241 = arith.constant 15 : index
      %c1_242 = arith.constant 1 : index
      %548 = memref.load %arg4[%c15_241, %c1_242] : memref<32x4xf32, #tpu.memory_space<smem>>
      %549 = vector.broadcast %548 : f32 to vector<8x256xf32>
      %550 = arith.mulf %543, %549 : vector<8x256xf32>
      %551 = arith.addf %519, %550 : vector<8x256xf32>
      %c15_243 = arith.constant 15 : index
      %c2_244 = arith.constant 2 : index
      %552 = memref.load %arg4[%c15_243, %c2_244] : memref<32x4xf32, #tpu.memory_space<smem>>
      %553 = vector.broadcast %552 : f32 to vector<8x256xf32>
      %554 = arith.mulf %543, %553 : vector<8x256xf32>
      %555 = arith.addf %523, %554 : vector<8x256xf32>
      %c15_245 = arith.constant 15 : index
      %c3_246 = arith.constant 3 : index
      %556 = memref.load %arg4[%c15_245, %c3_246] : memref<32x4xf32, #tpu.memory_space<smem>>
      %557 = vector.broadcast %556 : f32 to vector<8x256xf32>
      %558 = arith.mulf %543, %557 : vector<8x256xf32>
      %559 = arith.addf %527, %558 : vector<8x256xf32>
      %c0_247 = arith.constant 0 : index
      %c16 = arith.constant 16 : index
      %560 = memref.load %arg2[%c0_247, %c16] : memref<3x32xf32, #tpu.memory_space<smem>>
      %561 = vector.broadcast %560 : f32 to vector<8x256xf32>
      %562 = arith.mulf %35, %561 : vector<8x256xf32>
      %c1_248 = arith.constant 1 : index
      %c16_249 = arith.constant 16 : index
      %563 = memref.load %arg2[%c1_248, %c16_249] : memref<3x32xf32, #tpu.memory_space<smem>>
      %564 = vector.broadcast %563 : f32 to vector<8x256xf32>
      %565 = arith.mulf %39, %564 : vector<8x256xf32>
      %566 = arith.addf %562, %565 : vector<8x256xf32>
      %c2_250 = arith.constant 2 : index
      %c16_251 = arith.constant 16 : index
      %567 = memref.load %arg2[%c2_250, %c16_251] : memref<3x32xf32, #tpu.memory_space<smem>>
      %568 = vector.broadcast %567 : f32 to vector<8x256xf32>
      %569 = arith.mulf %43, %568 : vector<8x256xf32>
      %570 = arith.addf %566, %569 : vector<8x256xf32>
      %c16_252 = arith.constant 16 : index
      %571 = memref.load %arg3[%c16_252] : memref<32xf32, #tpu.memory_space<smem>>
      %572 = vector.broadcast %571 : f32 to vector<8x256xf32>
      %573 = arith.addf %570, %572 : vector<8x256xf32>
      %cst_253 = arith.constant 0.000000e+00 : f32
      %574 = vector.broadcast %cst_253 : f32 to vector<8x256xf32>
      %575 = arith.maximumf %573, %574 : vector<8x256xf32>
      %c16_254 = arith.constant 16 : index
      %c0_255 = arith.constant 0 : index
      %576 = memref.load %arg4[%c16_254, %c0_255] : memref<32x4xf32, #tpu.memory_space<smem>>
      %577 = vector.broadcast %576 : f32 to vector<8x256xf32>
      %578 = arith.mulf %575, %577 : vector<8x256xf32>
      %579 = arith.addf %547, %578 : vector<8x256xf32>
      %c16_256 = arith.constant 16 : index
      %c1_257 = arith.constant 1 : index
      %580 = memref.load %arg4[%c16_256, %c1_257] : memref<32x4xf32, #tpu.memory_space<smem>>
      %581 = vector.broadcast %580 : f32 to vector<8x256xf32>
      %582 = arith.mulf %575, %581 : vector<8x256xf32>
      %583 = arith.addf %551, %582 : vector<8x256xf32>
      %c16_258 = arith.constant 16 : index
      %c2_259 = arith.constant 2 : index
      %584 = memref.load %arg4[%c16_258, %c2_259] : memref<32x4xf32, #tpu.memory_space<smem>>
      %585 = vector.broadcast %584 : f32 to vector<8x256xf32>
      %586 = arith.mulf %575, %585 : vector<8x256xf32>
      %587 = arith.addf %555, %586 : vector<8x256xf32>
      %c16_260 = arith.constant 16 : index
      %c3_261 = arith.constant 3 : index
      %588 = memref.load %arg4[%c16_260, %c3_261] : memref<32x4xf32, #tpu.memory_space<smem>>
      %589 = vector.broadcast %588 : f32 to vector<8x256xf32>
      %590 = arith.mulf %575, %589 : vector<8x256xf32>
      %591 = arith.addf %559, %590 : vector<8x256xf32>
      %c0_262 = arith.constant 0 : index
      %c17 = arith.constant 17 : index
      %592 = memref.load %arg2[%c0_262, %c17] : memref<3x32xf32, #tpu.memory_space<smem>>
      %593 = vector.broadcast %592 : f32 to vector<8x256xf32>
      %594 = arith.mulf %35, %593 : vector<8x256xf32>
      %c1_263 = arith.constant 1 : index
      %c17_264 = arith.constant 17 : index
      %595 = memref.load %arg2[%c1_263, %c17_264] : memref<3x32xf32, #tpu.memory_space<smem>>
      %596 = vector.broadcast %595 : f32 to vector<8x256xf32>
      %597 = arith.mulf %39, %596 : vector<8x256xf32>
      %598 = arith.addf %594, %597 : vector<8x256xf32>
      %c2_265 = arith.constant 2 : index
      %c17_266 = arith.constant 17 : index
      %599 = memref.load %arg2[%c2_265, %c17_266] : memref<3x32xf32, #tpu.memory_space<smem>>
      %600 = vector.broadcast %599 : f32 to vector<8x256xf32>
      %601 = arith.mulf %43, %600 : vector<8x256xf32>
      %602 = arith.addf %598, %601 : vector<8x256xf32>
      %c17_267 = arith.constant 17 : index
      %603 = memref.load %arg3[%c17_267] : memref<32xf32, #tpu.memory_space<smem>>
      %604 = vector.broadcast %603 : f32 to vector<8x256xf32>
      %605 = arith.addf %602, %604 : vector<8x256xf32>
      %cst_268 = arith.constant 0.000000e+00 : f32
      %606 = vector.broadcast %cst_268 : f32 to vector<8x256xf32>
      %607 = arith.maximumf %605, %606 : vector<8x256xf32>
      %c17_269 = arith.constant 17 : index
      %c0_270 = arith.constant 0 : index
      %608 = memref.load %arg4[%c17_269, %c0_270] : memref<32x4xf32, #tpu.memory_space<smem>>
      %609 = vector.broadcast %608 : f32 to vector<8x256xf32>
      %610 = arith.mulf %607, %609 : vector<8x256xf32>
      %611 = arith.addf %579, %610 : vector<8x256xf32>
      %c17_271 = arith.constant 17 : index
      %c1_272 = arith.constant 1 : index
      %612 = memref.load %arg4[%c17_271, %c1_272] : memref<32x4xf32, #tpu.memory_space<smem>>
      %613 = vector.broadcast %612 : f32 to vector<8x256xf32>
      %614 = arith.mulf %607, %613 : vector<8x256xf32>
      %615 = arith.addf %583, %614 : vector<8x256xf32>
      %c17_273 = arith.constant 17 : index
      %c2_274 = arith.constant 2 : index
      %616 = memref.load %arg4[%c17_273, %c2_274] : memref<32x4xf32, #tpu.memory_space<smem>>
      %617 = vector.broadcast %616 : f32 to vector<8x256xf32>
      %618 = arith.mulf %607, %617 : vector<8x256xf32>
      %619 = arith.addf %587, %618 : vector<8x256xf32>
      %c17_275 = arith.constant 17 : index
      %c3_276 = arith.constant 3 : index
      %620 = memref.load %arg4[%c17_275, %c3_276] : memref<32x4xf32, #tpu.memory_space<smem>>
      %621 = vector.broadcast %620 : f32 to vector<8x256xf32>
      %622 = arith.mulf %607, %621 : vector<8x256xf32>
      %623 = arith.addf %591, %622 : vector<8x256xf32>
      %c0_277 = arith.constant 0 : index
      %c18 = arith.constant 18 : index
      %624 = memref.load %arg2[%c0_277, %c18] : memref<3x32xf32, #tpu.memory_space<smem>>
      %625 = vector.broadcast %624 : f32 to vector<8x256xf32>
      %626 = arith.mulf %35, %625 : vector<8x256xf32>
      %c1_278 = arith.constant 1 : index
      %c18_279 = arith.constant 18 : index
      %627 = memref.load %arg2[%c1_278, %c18_279] : memref<3x32xf32, #tpu.memory_space<smem>>
      %628 = vector.broadcast %627 : f32 to vector<8x256xf32>
      %629 = arith.mulf %39, %628 : vector<8x256xf32>
      %630 = arith.addf %626, %629 : vector<8x256xf32>
      %c2_280 = arith.constant 2 : index
      %c18_281 = arith.constant 18 : index
      %631 = memref.load %arg2[%c2_280, %c18_281] : memref<3x32xf32, #tpu.memory_space<smem>>
      %632 = vector.broadcast %631 : f32 to vector<8x256xf32>
      %633 = arith.mulf %43, %632 : vector<8x256xf32>
      %634 = arith.addf %630, %633 : vector<8x256xf32>
      %c18_282 = arith.constant 18 : index
      %635 = memref.load %arg3[%c18_282] : memref<32xf32, #tpu.memory_space<smem>>
      %636 = vector.broadcast %635 : f32 to vector<8x256xf32>
      %637 = arith.addf %634, %636 : vector<8x256xf32>
      %cst_283 = arith.constant 0.000000e+00 : f32
      %638 = vector.broadcast %cst_283 : f32 to vector<8x256xf32>
      %639 = arith.maximumf %637, %638 : vector<8x256xf32>
      %c18_284 = arith.constant 18 : index
      %c0_285 = arith.constant 0 : index
      %640 = memref.load %arg4[%c18_284, %c0_285] : memref<32x4xf32, #tpu.memory_space<smem>>
      %641 = vector.broadcast %640 : f32 to vector<8x256xf32>
      %642 = arith.mulf %639, %641 : vector<8x256xf32>
      %643 = arith.addf %611, %642 : vector<8x256xf32>
      %c18_286 = arith.constant 18 : index
      %c1_287 = arith.constant 1 : index
      %644 = memref.load %arg4[%c18_286, %c1_287] : memref<32x4xf32, #tpu.memory_space<smem>>
      %645 = vector.broadcast %644 : f32 to vector<8x256xf32>
      %646 = arith.mulf %639, %645 : vector<8x256xf32>
      %647 = arith.addf %615, %646 : vector<8x256xf32>
      %c18_288 = arith.constant 18 : index
      %c2_289 = arith.constant 2 : index
      %648 = memref.load %arg4[%c18_288, %c2_289] : memref<32x4xf32, #tpu.memory_space<smem>>
      %649 = vector.broadcast %648 : f32 to vector<8x256xf32>
      %650 = arith.mulf %639, %649 : vector<8x256xf32>
      %651 = arith.addf %619, %650 : vector<8x256xf32>
      %c18_290 = arith.constant 18 : index
      %c3_291 = arith.constant 3 : index
      %652 = memref.load %arg4[%c18_290, %c3_291] : memref<32x4xf32, #tpu.memory_space<smem>>
      %653 = vector.broadcast %652 : f32 to vector<8x256xf32>
      %654 = arith.mulf %639, %653 : vector<8x256xf32>
      %655 = arith.addf %623, %654 : vector<8x256xf32>
      %c0_292 = arith.constant 0 : index
      %c19 = arith.constant 19 : index
      %656 = memref.load %arg2[%c0_292, %c19] : memref<3x32xf32, #tpu.memory_space<smem>>
      %657 = vector.broadcast %656 : f32 to vector<8x256xf32>
      %658 = arith.mulf %35, %657 : vector<8x256xf32>
      %c1_293 = arith.constant 1 : index
      %c19_294 = arith.constant 19 : index
      %659 = memref.load %arg2[%c1_293, %c19_294] : memref<3x32xf32, #tpu.memory_space<smem>>
      %660 = vector.broadcast %659 : f32 to vector<8x256xf32>
      %661 = arith.mulf %39, %660 : vector<8x256xf32>
      %662 = arith.addf %658, %661 : vector<8x256xf32>
      %c2_295 = arith.constant 2 : index
      %c19_296 = arith.constant 19 : index
      %663 = memref.load %arg2[%c2_295, %c19_296] : memref<3x32xf32, #tpu.memory_space<smem>>
      %664 = vector.broadcast %663 : f32 to vector<8x256xf32>
      %665 = arith.mulf %43, %664 : vector<8x256xf32>
      %666 = arith.addf %662, %665 : vector<8x256xf32>
      %c19_297 = arith.constant 19 : index
      %667 = memref.load %arg3[%c19_297] : memref<32xf32, #tpu.memory_space<smem>>
      %668 = vector.broadcast %667 : f32 to vector<8x256xf32>
      %669 = arith.addf %666, %668 : vector<8x256xf32>
      %cst_298 = arith.constant 0.000000e+00 : f32
      %670 = vector.broadcast %cst_298 : f32 to vector<8x256xf32>
      %671 = arith.maximumf %669, %670 : vector<8x256xf32>
      %c19_299 = arith.constant 19 : index
      %c0_300 = arith.constant 0 : index
      %672 = memref.load %arg4[%c19_299, %c0_300] : memref<32x4xf32, #tpu.memory_space<smem>>
      %673 = vector.broadcast %672 : f32 to vector<8x256xf32>
      %674 = arith.mulf %671, %673 : vector<8x256xf32>
      %675 = arith.addf %643, %674 : vector<8x256xf32>
      %c19_301 = arith.constant 19 : index
      %c1_302 = arith.constant 1 : index
      %676 = memref.load %arg4[%c19_301, %c1_302] : memref<32x4xf32, #tpu.memory_space<smem>>
      %677 = vector.broadcast %676 : f32 to vector<8x256xf32>
      %678 = arith.mulf %671, %677 : vector<8x256xf32>
      %679 = arith.addf %647, %678 : vector<8x256xf32>
      %c19_303 = arith.constant 19 : index
      %c2_304 = arith.constant 2 : index
      %680 = memref.load %arg4[%c19_303, %c2_304] : memref<32x4xf32, #tpu.memory_space<smem>>
      %681 = vector.broadcast %680 : f32 to vector<8x256xf32>
      %682 = arith.mulf %671, %681 : vector<8x256xf32>
      %683 = arith.addf %651, %682 : vector<8x256xf32>
      %c19_305 = arith.constant 19 : index
      %c3_306 = arith.constant 3 : index
      %684 = memref.load %arg4[%c19_305, %c3_306] : memref<32x4xf32, #tpu.memory_space<smem>>
      %685 = vector.broadcast %684 : f32 to vector<8x256xf32>
      %686 = arith.mulf %671, %685 : vector<8x256xf32>
      %687 = arith.addf %655, %686 : vector<8x256xf32>
      %c0_307 = arith.constant 0 : index
      %c20 = arith.constant 20 : index
      %688 = memref.load %arg2[%c0_307, %c20] : memref<3x32xf32, #tpu.memory_space<smem>>
      %689 = vector.broadcast %688 : f32 to vector<8x256xf32>
      %690 = arith.mulf %35, %689 : vector<8x256xf32>
      %c1_308 = arith.constant 1 : index
      %c20_309 = arith.constant 20 : index
      %691 = memref.load %arg2[%c1_308, %c20_309] : memref<3x32xf32, #tpu.memory_space<smem>>
      %692 = vector.broadcast %691 : f32 to vector<8x256xf32>
      %693 = arith.mulf %39, %692 : vector<8x256xf32>
      %694 = arith.addf %690, %693 : vector<8x256xf32>
      %c2_310 = arith.constant 2 : index
      %c20_311 = arith.constant 20 : index
      %695 = memref.load %arg2[%c2_310, %c20_311] : memref<3x32xf32, #tpu.memory_space<smem>>
      %696 = vector.broadcast %695 : f32 to vector<8x256xf32>
      %697 = arith.mulf %43, %696 : vector<8x256xf32>
      %698 = arith.addf %694, %697 : vector<8x256xf32>
      %c20_312 = arith.constant 20 : index
      %699 = memref.load %arg3[%c20_312] : memref<32xf32, #tpu.memory_space<smem>>
      %700 = vector.broadcast %699 : f32 to vector<8x256xf32>
      %701 = arith.addf %698, %700 : vector<8x256xf32>
      %cst_313 = arith.constant 0.000000e+00 : f32
      %702 = vector.broadcast %cst_313 : f32 to vector<8x256xf32>
      %703 = arith.maximumf %701, %702 : vector<8x256xf32>
      %c20_314 = arith.constant 20 : index
      %c0_315 = arith.constant 0 : index
      %704 = memref.load %arg4[%c20_314, %c0_315] : memref<32x4xf32, #tpu.memory_space<smem>>
      %705 = vector.broadcast %704 : f32 to vector<8x256xf32>
      %706 = arith.mulf %703, %705 : vector<8x256xf32>
      %707 = arith.addf %675, %706 : vector<8x256xf32>
      %c20_316 = arith.constant 20 : index
      %c1_317 = arith.constant 1 : index
      %708 = memref.load %arg4[%c20_316, %c1_317] : memref<32x4xf32, #tpu.memory_space<smem>>
      %709 = vector.broadcast %708 : f32 to vector<8x256xf32>
      %710 = arith.mulf %703, %709 : vector<8x256xf32>
      %711 = arith.addf %679, %710 : vector<8x256xf32>
      %c20_318 = arith.constant 20 : index
      %c2_319 = arith.constant 2 : index
      %712 = memref.load %arg4[%c20_318, %c2_319] : memref<32x4xf32, #tpu.memory_space<smem>>
      %713 = vector.broadcast %712 : f32 to vector<8x256xf32>
      %714 = arith.mulf %703, %713 : vector<8x256xf32>
      %715 = arith.addf %683, %714 : vector<8x256xf32>
      %c20_320 = arith.constant 20 : index
      %c3_321 = arith.constant 3 : index
      %716 = memref.load %arg4[%c20_320, %c3_321] : memref<32x4xf32, #tpu.memory_space<smem>>
      %717 = vector.broadcast %716 : f32 to vector<8x256xf32>
      %718 = arith.mulf %703, %717 : vector<8x256xf32>
      %719 = arith.addf %687, %718 : vector<8x256xf32>
      %c0_322 = arith.constant 0 : index
      %c21 = arith.constant 21 : index
      %720 = memref.load %arg2[%c0_322, %c21] : memref<3x32xf32, #tpu.memory_space<smem>>
      %721 = vector.broadcast %720 : f32 to vector<8x256xf32>
      %722 = arith.mulf %35, %721 : vector<8x256xf32>
      %c1_323 = arith.constant 1 : index
      %c21_324 = arith.constant 21 : index
      %723 = memref.load %arg2[%c1_323, %c21_324] : memref<3x32xf32, #tpu.memory_space<smem>>
      %724 = vector.broadcast %723 : f32 to vector<8x256xf32>
      %725 = arith.mulf %39, %724 : vector<8x256xf32>
      %726 = arith.addf %722, %725 : vector<8x256xf32>
      %c2_325 = arith.constant 2 : index
      %c21_326 = arith.constant 21 : index
      %727 = memref.load %arg2[%c2_325, %c21_326] : memref<3x32xf32, #tpu.memory_space<smem>>
      %728 = vector.broadcast %727 : f32 to vector<8x256xf32>
      %729 = arith.mulf %43, %728 : vector<8x256xf32>
      %730 = arith.addf %726, %729 : vector<8x256xf32>
      %c21_327 = arith.constant 21 : index
      %731 = memref.load %arg3[%c21_327] : memref<32xf32, #tpu.memory_space<smem>>
      %732 = vector.broadcast %731 : f32 to vector<8x256xf32>
      %733 = arith.addf %730, %732 : vector<8x256xf32>
      %cst_328 = arith.constant 0.000000e+00 : f32
      %734 = vector.broadcast %cst_328 : f32 to vector<8x256xf32>
      %735 = arith.maximumf %733, %734 : vector<8x256xf32>
      %c21_329 = arith.constant 21 : index
      %c0_330 = arith.constant 0 : index
      %736 = memref.load %arg4[%c21_329, %c0_330] : memref<32x4xf32, #tpu.memory_space<smem>>
      %737 = vector.broadcast %736 : f32 to vector<8x256xf32>
      %738 = arith.mulf %735, %737 : vector<8x256xf32>
      %739 = arith.addf %707, %738 : vector<8x256xf32>
      %c21_331 = arith.constant 21 : index
      %c1_332 = arith.constant 1 : index
      %740 = memref.load %arg4[%c21_331, %c1_332] : memref<32x4xf32, #tpu.memory_space<smem>>
      %741 = vector.broadcast %740 : f32 to vector<8x256xf32>
      %742 = arith.mulf %735, %741 : vector<8x256xf32>
      %743 = arith.addf %711, %742 : vector<8x256xf32>
      %c21_333 = arith.constant 21 : index
      %c2_334 = arith.constant 2 : index
      %744 = memref.load %arg4[%c21_333, %c2_334] : memref<32x4xf32, #tpu.memory_space<smem>>
      %745 = vector.broadcast %744 : f32 to vector<8x256xf32>
      %746 = arith.mulf %735, %745 : vector<8x256xf32>
      %747 = arith.addf %715, %746 : vector<8x256xf32>
      %c21_335 = arith.constant 21 : index
      %c3_336 = arith.constant 3 : index
      %748 = memref.load %arg4[%c21_335, %c3_336] : memref<32x4xf32, #tpu.memory_space<smem>>
      %749 = vector.broadcast %748 : f32 to vector<8x256xf32>
      %750 = arith.mulf %735, %749 : vector<8x256xf32>
      %751 = arith.addf %719, %750 : vector<8x256xf32>
      %c0_337 = arith.constant 0 : index
      %c22 = arith.constant 22 : index
      %752 = memref.load %arg2[%c0_337, %c22] : memref<3x32xf32, #tpu.memory_space<smem>>
      %753 = vector.broadcast %752 : f32 to vector<8x256xf32>
      %754 = arith.mulf %35, %753 : vector<8x256xf32>
      %c1_338 = arith.constant 1 : index
      %c22_339 = arith.constant 22 : index
      %755 = memref.load %arg2[%c1_338, %c22_339] : memref<3x32xf32, #tpu.memory_space<smem>>
      %756 = vector.broadcast %755 : f32 to vector<8x256xf32>
      %757 = arith.mulf %39, %756 : vector<8x256xf32>
      %758 = arith.addf %754, %757 : vector<8x256xf32>
      %c2_340 = arith.constant 2 : index
      %c22_341 = arith.constant 22 : index
      %759 = memref.load %arg2[%c2_340, %c22_341] : memref<3x32xf32, #tpu.memory_space<smem>>
      %760 = vector.broadcast %759 : f32 to vector<8x256xf32>
      %761 = arith.mulf %43, %760 : vector<8x256xf32>
      %762 = arith.addf %758, %761 : vector<8x256xf32>
      %c22_342 = arith.constant 22 : index
      %763 = memref.load %arg3[%c22_342] : memref<32xf32, #tpu.memory_space<smem>>
      %764 = vector.broadcast %763 : f32 to vector<8x256xf32>
      %765 = arith.addf %762, %764 : vector<8x256xf32>
      %cst_343 = arith.constant 0.000000e+00 : f32
      %766 = vector.broadcast %cst_343 : f32 to vector<8x256xf32>
      %767 = arith.maximumf %765, %766 : vector<8x256xf32>
      %c22_344 = arith.constant 22 : index
      %c0_345 = arith.constant 0 : index
      %768 = memref.load %arg4[%c22_344, %c0_345] : memref<32x4xf32, #tpu.memory_space<smem>>
      %769 = vector.broadcast %768 : f32 to vector<8x256xf32>
      %770 = arith.mulf %767, %769 : vector<8x256xf32>
      %771 = arith.addf %739, %770 : vector<8x256xf32>
      %c22_346 = arith.constant 22 : index
      %c1_347 = arith.constant 1 : index
      %772 = memref.load %arg4[%c22_346, %c1_347] : memref<32x4xf32, #tpu.memory_space<smem>>
      %773 = vector.broadcast %772 : f32 to vector<8x256xf32>
      %774 = arith.mulf %767, %773 : vector<8x256xf32>
      %775 = arith.addf %743, %774 : vector<8x256xf32>
      %c22_348 = arith.constant 22 : index
      %c2_349 = arith.constant 2 : index
      %776 = memref.load %arg4[%c22_348, %c2_349] : memref<32x4xf32, #tpu.memory_space<smem>>
      %777 = vector.broadcast %776 : f32 to vector<8x256xf32>
      %778 = arith.mulf %767, %777 : vector<8x256xf32>
      %779 = arith.addf %747, %778 : vector<8x256xf32>
      %c22_350 = arith.constant 22 : index
      %c3_351 = arith.constant 3 : index
      %780 = memref.load %arg4[%c22_350, %c3_351] : memref<32x4xf32, #tpu.memory_space<smem>>
      %781 = vector.broadcast %780 : f32 to vector<8x256xf32>
      %782 = arith.mulf %767, %781 : vector<8x256xf32>
      %783 = arith.addf %751, %782 : vector<8x256xf32>
      %c0_352 = arith.constant 0 : index
      %c23 = arith.constant 23 : index
      %784 = memref.load %arg2[%c0_352, %c23] : memref<3x32xf32, #tpu.memory_space<smem>>
      %785 = vector.broadcast %784 : f32 to vector<8x256xf32>
      %786 = arith.mulf %35, %785 : vector<8x256xf32>
      %c1_353 = arith.constant 1 : index
      %c23_354 = arith.constant 23 : index
      %787 = memref.load %arg2[%c1_353, %c23_354] : memref<3x32xf32, #tpu.memory_space<smem>>
      %788 = vector.broadcast %787 : f32 to vector<8x256xf32>
      %789 = arith.mulf %39, %788 : vector<8x256xf32>
      %790 = arith.addf %786, %789 : vector<8x256xf32>
      %c2_355 = arith.constant 2 : index
      %c23_356 = arith.constant 23 : index
      %791 = memref.load %arg2[%c2_355, %c23_356] : memref<3x32xf32, #tpu.memory_space<smem>>
      %792 = vector.broadcast %791 : f32 to vector<8x256xf32>
      %793 = arith.mulf %43, %792 : vector<8x256xf32>
      %794 = arith.addf %790, %793 : vector<8x256xf32>
      %c23_357 = arith.constant 23 : index
      %795 = memref.load %arg3[%c23_357] : memref<32xf32, #tpu.memory_space<smem>>
      %796 = vector.broadcast %795 : f32 to vector<8x256xf32>
      %797 = arith.addf %794, %796 : vector<8x256xf32>
      %cst_358 = arith.constant 0.000000e+00 : f32
      %798 = vector.broadcast %cst_358 : f32 to vector<8x256xf32>
      %799 = arith.maximumf %797, %798 : vector<8x256xf32>
      %c23_359 = arith.constant 23 : index
      %c0_360 = arith.constant 0 : index
      %800 = memref.load %arg4[%c23_359, %c0_360] : memref<32x4xf32, #tpu.memory_space<smem>>
      %801 = vector.broadcast %800 : f32 to vector<8x256xf32>
      %802 = arith.mulf %799, %801 : vector<8x256xf32>
      %803 = arith.addf %771, %802 : vector<8x256xf32>
      %c23_361 = arith.constant 23 : index
      %c1_362 = arith.constant 1 : index
      %804 = memref.load %arg4[%c23_361, %c1_362] : memref<32x4xf32, #tpu.memory_space<smem>>
      %805 = vector.broadcast %804 : f32 to vector<8x256xf32>
      %806 = arith.mulf %799, %805 : vector<8x256xf32>
      %807 = arith.addf %775, %806 : vector<8x256xf32>
      %c23_363 = arith.constant 23 : index
      %c2_364 = arith.constant 2 : index
      %808 = memref.load %arg4[%c23_363, %c2_364] : memref<32x4xf32, #tpu.memory_space<smem>>
      %809 = vector.broadcast %808 : f32 to vector<8x256xf32>
      %810 = arith.mulf %799, %809 : vector<8x256xf32>
      %811 = arith.addf %779, %810 : vector<8x256xf32>
      %c23_365 = arith.constant 23 : index
      %c3_366 = arith.constant 3 : index
      %812 = memref.load %arg4[%c23_365, %c3_366] : memref<32x4xf32, #tpu.memory_space<smem>>
      %813 = vector.broadcast %812 : f32 to vector<8x256xf32>
      %814 = arith.mulf %799, %813 : vector<8x256xf32>
      %815 = arith.addf %783, %814 : vector<8x256xf32>
      %c0_367 = arith.constant 0 : index
      %c24 = arith.constant 24 : index
      %816 = memref.load %arg2[%c0_367, %c24] : memref<3x32xf32, #tpu.memory_space<smem>>
      %817 = vector.broadcast %816 : f32 to vector<8x256xf32>
      %818 = arith.mulf %35, %817 : vector<8x256xf32>
      %c1_368 = arith.constant 1 : index
      %c24_369 = arith.constant 24 : index
      %819 = memref.load %arg2[%c1_368, %c24_369] : memref<3x32xf32, #tpu.memory_space<smem>>
      %820 = vector.broadcast %819 : f32 to vector<8x256xf32>
      %821 = arith.mulf %39, %820 : vector<8x256xf32>
      %822 = arith.addf %818, %821 : vector<8x256xf32>
      %c2_370 = arith.constant 2 : index
      %c24_371 = arith.constant 24 : index
      %823 = memref.load %arg2[%c2_370, %c24_371] : memref<3x32xf32, #tpu.memory_space<smem>>
      %824 = vector.broadcast %823 : f32 to vector<8x256xf32>
      %825 = arith.mulf %43, %824 : vector<8x256xf32>
      %826 = arith.addf %822, %825 : vector<8x256xf32>
      %c24_372 = arith.constant 24 : index
      %827 = memref.load %arg3[%c24_372] : memref<32xf32, #tpu.memory_space<smem>>
      %828 = vector.broadcast %827 : f32 to vector<8x256xf32>
      %829 = arith.addf %826, %828 : vector<8x256xf32>
      %cst_373 = arith.constant 0.000000e+00 : f32
      %830 = vector.broadcast %cst_373 : f32 to vector<8x256xf32>
      %831 = arith.maximumf %829, %830 : vector<8x256xf32>
      %c24_374 = arith.constant 24 : index
      %c0_375 = arith.constant 0 : index
      %832 = memref.load %arg4[%c24_374, %c0_375] : memref<32x4xf32, #tpu.memory_space<smem>>
      %833 = vector.broadcast %832 : f32 to vector<8x256xf32>
      %834 = arith.mulf %831, %833 : vector<8x256xf32>
      %835 = arith.addf %803, %834 : vector<8x256xf32>
      %c24_376 = arith.constant 24 : index
      %c1_377 = arith.constant 1 : index
      %836 = memref.load %arg4[%c24_376, %c1_377] : memref<32x4xf32, #tpu.memory_space<smem>>
      %837 = vector.broadcast %836 : f32 to vector<8x256xf32>
      %838 = arith.mulf %831, %837 : vector<8x256xf32>
      %839 = arith.addf %807, %838 : vector<8x256xf32>
      %c24_378 = arith.constant 24 : index
      %c2_379 = arith.constant 2 : index
      %840 = memref.load %arg4[%c24_378, %c2_379] : memref<32x4xf32, #tpu.memory_space<smem>>
      %841 = vector.broadcast %840 : f32 to vector<8x256xf32>
      %842 = arith.mulf %831, %841 : vector<8x256xf32>
      %843 = arith.addf %811, %842 : vector<8x256xf32>
      %c24_380 = arith.constant 24 : index
      %c3_381 = arith.constant 3 : index
      %844 = memref.load %arg4[%c24_380, %c3_381] : memref<32x4xf32, #tpu.memory_space<smem>>
      %845 = vector.broadcast %844 : f32 to vector<8x256xf32>
      %846 = arith.mulf %831, %845 : vector<8x256xf32>
      %847 = arith.addf %815, %846 : vector<8x256xf32>
      %c0_382 = arith.constant 0 : index
      %c25 = arith.constant 25 : index
      %848 = memref.load %arg2[%c0_382, %c25] : memref<3x32xf32, #tpu.memory_space<smem>>
      %849 = vector.broadcast %848 : f32 to vector<8x256xf32>
      %850 = arith.mulf %35, %849 : vector<8x256xf32>
      %c1_383 = arith.constant 1 : index
      %c25_384 = arith.constant 25 : index
      %851 = memref.load %arg2[%c1_383, %c25_384] : memref<3x32xf32, #tpu.memory_space<smem>>
      %852 = vector.broadcast %851 : f32 to vector<8x256xf32>
      %853 = arith.mulf %39, %852 : vector<8x256xf32>
      %854 = arith.addf %850, %853 : vector<8x256xf32>
      %c2_385 = arith.constant 2 : index
      %c25_386 = arith.constant 25 : index
      %855 = memref.load %arg2[%c2_385, %c25_386] : memref<3x32xf32, #tpu.memory_space<smem>>
      %856 = vector.broadcast %855 : f32 to vector<8x256xf32>
      %857 = arith.mulf %43, %856 : vector<8x256xf32>
      %858 = arith.addf %854, %857 : vector<8x256xf32>
      %c25_387 = arith.constant 25 : index
      %859 = memref.load %arg3[%c25_387] : memref<32xf32, #tpu.memory_space<smem>>
      %860 = vector.broadcast %859 : f32 to vector<8x256xf32>
      %861 = arith.addf %858, %860 : vector<8x256xf32>
      %cst_388 = arith.constant 0.000000e+00 : f32
      %862 = vector.broadcast %cst_388 : f32 to vector<8x256xf32>
      %863 = arith.maximumf %861, %862 : vector<8x256xf32>
      %c25_389 = arith.constant 25 : index
      %c0_390 = arith.constant 0 : index
      %864 = memref.load %arg4[%c25_389, %c0_390] : memref<32x4xf32, #tpu.memory_space<smem>>
      %865 = vector.broadcast %864 : f32 to vector<8x256xf32>
      %866 = arith.mulf %863, %865 : vector<8x256xf32>
      %867 = arith.addf %835, %866 : vector<8x256xf32>
      %c25_391 = arith.constant 25 : index
      %c1_392 = arith.constant 1 : index
      %868 = memref.load %arg4[%c25_391, %c1_392] : memref<32x4xf32, #tpu.memory_space<smem>>
      %869 = vector.broadcast %868 : f32 to vector<8x256xf32>
      %870 = arith.mulf %863, %869 : vector<8x256xf32>
      %871 = arith.addf %839, %870 : vector<8x256xf32>
      %c25_393 = arith.constant 25 : index
      %c2_394 = arith.constant 2 : index
      %872 = memref.load %arg4[%c25_393, %c2_394] : memref<32x4xf32, #tpu.memory_space<smem>>
      %873 = vector.broadcast %872 : f32 to vector<8x256xf32>
      %874 = arith.mulf %863, %873 : vector<8x256xf32>
      %875 = arith.addf %843, %874 : vector<8x256xf32>
      %c25_395 = arith.constant 25 : index
      %c3_396 = arith.constant 3 : index
      %876 = memref.load %arg4[%c25_395, %c3_396] : memref<32x4xf32, #tpu.memory_space<smem>>
      %877 = vector.broadcast %876 : f32 to vector<8x256xf32>
      %878 = arith.mulf %863, %877 : vector<8x256xf32>
      %879 = arith.addf %847, %878 : vector<8x256xf32>
      %c0_397 = arith.constant 0 : index
      %c26 = arith.constant 26 : index
      %880 = memref.load %arg2[%c0_397, %c26] : memref<3x32xf32, #tpu.memory_space<smem>>
      %881 = vector.broadcast %880 : f32 to vector<8x256xf32>
      %882 = arith.mulf %35, %881 : vector<8x256xf32>
      %c1_398 = arith.constant 1 : index
      %c26_399 = arith.constant 26 : index
      %883 = memref.load %arg2[%c1_398, %c26_399] : memref<3x32xf32, #tpu.memory_space<smem>>
      %884 = vector.broadcast %883 : f32 to vector<8x256xf32>
      %885 = arith.mulf %39, %884 : vector<8x256xf32>
      %886 = arith.addf %882, %885 : vector<8x256xf32>
      %c2_400 = arith.constant 2 : index
      %c26_401 = arith.constant 26 : index
      %887 = memref.load %arg2[%c2_400, %c26_401] : memref<3x32xf32, #tpu.memory_space<smem>>
      %888 = vector.broadcast %887 : f32 to vector<8x256xf32>
      %889 = arith.mulf %43, %888 : vector<8x256xf32>
      %890 = arith.addf %886, %889 : vector<8x256xf32>
      %c26_402 = arith.constant 26 : index
      %891 = memref.load %arg3[%c26_402] : memref<32xf32, #tpu.memory_space<smem>>
      %892 = vector.broadcast %891 : f32 to vector<8x256xf32>
      %893 = arith.addf %890, %892 : vector<8x256xf32>
      %cst_403 = arith.constant 0.000000e+00 : f32
      %894 = vector.broadcast %cst_403 : f32 to vector<8x256xf32>
      %895 = arith.maximumf %893, %894 : vector<8x256xf32>
      %c26_404 = arith.constant 26 : index
      %c0_405 = arith.constant 0 : index
      %896 = memref.load %arg4[%c26_404, %c0_405] : memref<32x4xf32, #tpu.memory_space<smem>>
      %897 = vector.broadcast %896 : f32 to vector<8x256xf32>
      %898 = arith.mulf %895, %897 : vector<8x256xf32>
      %899 = arith.addf %867, %898 : vector<8x256xf32>
      %c26_406 = arith.constant 26 : index
      %c1_407 = arith.constant 1 : index
      %900 = memref.load %arg4[%c26_406, %c1_407] : memref<32x4xf32, #tpu.memory_space<smem>>
      %901 = vector.broadcast %900 : f32 to vector<8x256xf32>
      %902 = arith.mulf %895, %901 : vector<8x256xf32>
      %903 = arith.addf %871, %902 : vector<8x256xf32>
      %c26_408 = arith.constant 26 : index
      %c2_409 = arith.constant 2 : index
      %904 = memref.load %arg4[%c26_408, %c2_409] : memref<32x4xf32, #tpu.memory_space<smem>>
      %905 = vector.broadcast %904 : f32 to vector<8x256xf32>
      %906 = arith.mulf %895, %905 : vector<8x256xf32>
      %907 = arith.addf %875, %906 : vector<8x256xf32>
      %c26_410 = arith.constant 26 : index
      %c3_411 = arith.constant 3 : index
      %908 = memref.load %arg4[%c26_410, %c3_411] : memref<32x4xf32, #tpu.memory_space<smem>>
      %909 = vector.broadcast %908 : f32 to vector<8x256xf32>
      %910 = arith.mulf %895, %909 : vector<8x256xf32>
      %911 = arith.addf %879, %910 : vector<8x256xf32>
      %c0_412 = arith.constant 0 : index
      %c27 = arith.constant 27 : index
      %912 = memref.load %arg2[%c0_412, %c27] : memref<3x32xf32, #tpu.memory_space<smem>>
      %913 = vector.broadcast %912 : f32 to vector<8x256xf32>
      %914 = arith.mulf %35, %913 : vector<8x256xf32>
      %c1_413 = arith.constant 1 : index
      %c27_414 = arith.constant 27 : index
      %915 = memref.load %arg2[%c1_413, %c27_414] : memref<3x32xf32, #tpu.memory_space<smem>>
      %916 = vector.broadcast %915 : f32 to vector<8x256xf32>
      %917 = arith.mulf %39, %916 : vector<8x256xf32>
      %918 = arith.addf %914, %917 : vector<8x256xf32>
      %c2_415 = arith.constant 2 : index
      %c27_416 = arith.constant 27 : index
      %919 = memref.load %arg2[%c2_415, %c27_416] : memref<3x32xf32, #tpu.memory_space<smem>>
      %920 = vector.broadcast %919 : f32 to vector<8x256xf32>
      %921 = arith.mulf %43, %920 : vector<8x256xf32>
      %922 = arith.addf %918, %921 : vector<8x256xf32>
      %c27_417 = arith.constant 27 : index
      %923 = memref.load %arg3[%c27_417] : memref<32xf32, #tpu.memory_space<smem>>
      %924 = vector.broadcast %923 : f32 to vector<8x256xf32>
      %925 = arith.addf %922, %924 : vector<8x256xf32>
      %cst_418 = arith.constant 0.000000e+00 : f32
      %926 = vector.broadcast %cst_418 : f32 to vector<8x256xf32>
      %927 = arith.maximumf %925, %926 : vector<8x256xf32>
      %c27_419 = arith.constant 27 : index
      %c0_420 = arith.constant 0 : index
      %928 = memref.load %arg4[%c27_419, %c0_420] : memref<32x4xf32, #tpu.memory_space<smem>>
      %929 = vector.broadcast %928 : f32 to vector<8x256xf32>
      %930 = arith.mulf %927, %929 : vector<8x256xf32>
      %931 = arith.addf %899, %930 : vector<8x256xf32>
      %c27_421 = arith.constant 27 : index
      %c1_422 = arith.constant 1 : index
      %932 = memref.load %arg4[%c27_421, %c1_422] : memref<32x4xf32, #tpu.memory_space<smem>>
      %933 = vector.broadcast %932 : f32 to vector<8x256xf32>
      %934 = arith.mulf %927, %933 : vector<8x256xf32>
      %935 = arith.addf %903, %934 : vector<8x256xf32>
      %c27_423 = arith.constant 27 : index
      %c2_424 = arith.constant 2 : index
      %936 = memref.load %arg4[%c27_423, %c2_424] : memref<32x4xf32, #tpu.memory_space<smem>>
      %937 = vector.broadcast %936 : f32 to vector<8x256xf32>
      %938 = arith.mulf %927, %937 : vector<8x256xf32>
      %939 = arith.addf %907, %938 : vector<8x256xf32>
      %c27_425 = arith.constant 27 : index
      %c3_426 = arith.constant 3 : index
      %940 = memref.load %arg4[%c27_425, %c3_426] : memref<32x4xf32, #tpu.memory_space<smem>>
      %941 = vector.broadcast %940 : f32 to vector<8x256xf32>
      %942 = arith.mulf %927, %941 : vector<8x256xf32>
      %943 = arith.addf %911, %942 : vector<8x256xf32>
      %c0_427 = arith.constant 0 : index
      %c28 = arith.constant 28 : index
      %944 = memref.load %arg2[%c0_427, %c28] : memref<3x32xf32, #tpu.memory_space<smem>>
      %945 = vector.broadcast %944 : f32 to vector<8x256xf32>
      %946 = arith.mulf %35, %945 : vector<8x256xf32>
      %c1_428 = arith.constant 1 : index
      %c28_429 = arith.constant 28 : index
      %947 = memref.load %arg2[%c1_428, %c28_429] : memref<3x32xf32, #tpu.memory_space<smem>>
      %948 = vector.broadcast %947 : f32 to vector<8x256xf32>
      %949 = arith.mulf %39, %948 : vector<8x256xf32>
      %950 = arith.addf %946, %949 : vector<8x256xf32>
      %c2_430 = arith.constant 2 : index
      %c28_431 = arith.constant 28 : index
      %951 = memref.load %arg2[%c2_430, %c28_431] : memref<3x32xf32, #tpu.memory_space<smem>>
      %952 = vector.broadcast %951 : f32 to vector<8x256xf32>
      %953 = arith.mulf %43, %952 : vector<8x256xf32>
      %954 = arith.addf %950, %953 : vector<8x256xf32>
      %c28_432 = arith.constant 28 : index
      %955 = memref.load %arg3[%c28_432] : memref<32xf32, #tpu.memory_space<smem>>
      %956 = vector.broadcast %955 : f32 to vector<8x256xf32>
      %957 = arith.addf %954, %956 : vector<8x256xf32>
      %cst_433 = arith.constant 0.000000e+00 : f32
      %958 = vector.broadcast %cst_433 : f32 to vector<8x256xf32>
      %959 = arith.maximumf %957, %958 : vector<8x256xf32>
      %c28_434 = arith.constant 28 : index
      %c0_435 = arith.constant 0 : index
      %960 = memref.load %arg4[%c28_434, %c0_435] : memref<32x4xf32, #tpu.memory_space<smem>>
      %961 = vector.broadcast %960 : f32 to vector<8x256xf32>
      %962 = arith.mulf %959, %961 : vector<8x256xf32>
      %963 = arith.addf %931, %962 : vector<8x256xf32>
      %c28_436 = arith.constant 28 : index
      %c1_437 = arith.constant 1 : index
      %964 = memref.load %arg4[%c28_436, %c1_437] : memref<32x4xf32, #tpu.memory_space<smem>>
      %965 = vector.broadcast %964 : f32 to vector<8x256xf32>
      %966 = arith.mulf %959, %965 : vector<8x256xf32>
      %967 = arith.addf %935, %966 : vector<8x256xf32>
      %c28_438 = arith.constant 28 : index
      %c2_439 = arith.constant 2 : index
      %968 = memref.load %arg4[%c28_438, %c2_439] : memref<32x4xf32, #tpu.memory_space<smem>>
      %969 = vector.broadcast %968 : f32 to vector<8x256xf32>
      %970 = arith.mulf %959, %969 : vector<8x256xf32>
      %971 = arith.addf %939, %970 : vector<8x256xf32>
      %c28_440 = arith.constant 28 : index
      %c3_441 = arith.constant 3 : index
      %972 = memref.load %arg4[%c28_440, %c3_441] : memref<32x4xf32, #tpu.memory_space<smem>>
      %973 = vector.broadcast %972 : f32 to vector<8x256xf32>
      %974 = arith.mulf %959, %973 : vector<8x256xf32>
      %975 = arith.addf %943, %974 : vector<8x256xf32>
      %c0_442 = arith.constant 0 : index
      %c29 = arith.constant 29 : index
      %976 = memref.load %arg2[%c0_442, %c29] : memref<3x32xf32, #tpu.memory_space<smem>>
      %977 = vector.broadcast %976 : f32 to vector<8x256xf32>
      %978 = arith.mulf %35, %977 : vector<8x256xf32>
      %c1_443 = arith.constant 1 : index
      %c29_444 = arith.constant 29 : index
      %979 = memref.load %arg2[%c1_443, %c29_444] : memref<3x32xf32, #tpu.memory_space<smem>>
      %980 = vector.broadcast %979 : f32 to vector<8x256xf32>
      %981 = arith.mulf %39, %980 : vector<8x256xf32>
      %982 = arith.addf %978, %981 : vector<8x256xf32>
      %c2_445 = arith.constant 2 : index
      %c29_446 = arith.constant 29 : index
      %983 = memref.load %arg2[%c2_445, %c29_446] : memref<3x32xf32, #tpu.memory_space<smem>>
      %984 = vector.broadcast %983 : f32 to vector<8x256xf32>
      %985 = arith.mulf %43, %984 : vector<8x256xf32>
      %986 = arith.addf %982, %985 : vector<8x256xf32>
      %c29_447 = arith.constant 29 : index
      %987 = memref.load %arg3[%c29_447] : memref<32xf32, #tpu.memory_space<smem>>
      %988 = vector.broadcast %987 : f32 to vector<8x256xf32>
      %989 = arith.addf %986, %988 : vector<8x256xf32>
      %cst_448 = arith.constant 0.000000e+00 : f32
      %990 = vector.broadcast %cst_448 : f32 to vector<8x256xf32>
      %991 = arith.maximumf %989, %990 : vector<8x256xf32>
      %c29_449 = arith.constant 29 : index
      %c0_450 = arith.constant 0 : index
      %992 = memref.load %arg4[%c29_449, %c0_450] : memref<32x4xf32, #tpu.memory_space<smem>>
      %993 = vector.broadcast %992 : f32 to vector<8x256xf32>
      %994 = arith.mulf %991, %993 : vector<8x256xf32>
      %995 = arith.addf %963, %994 : vector<8x256xf32>
      %c29_451 = arith.constant 29 : index
      %c1_452 = arith.constant 1 : index
      %996 = memref.load %arg4[%c29_451, %c1_452] : memref<32x4xf32, #tpu.memory_space<smem>>
      %997 = vector.broadcast %996 : f32 to vector<8x256xf32>
      %998 = arith.mulf %991, %997 : vector<8x256xf32>
      %999 = arith.addf %967, %998 : vector<8x256xf32>
      %c29_453 = arith.constant 29 : index
      %c2_454 = arith.constant 2 : index
      %1000 = memref.load %arg4[%c29_453, %c2_454] : memref<32x4xf32, #tpu.memory_space<smem>>
      %1001 = vector.broadcast %1000 : f32 to vector<8x256xf32>
      %1002 = arith.mulf %991, %1001 : vector<8x256xf32>
      %1003 = arith.addf %971, %1002 : vector<8x256xf32>
      %c29_455 = arith.constant 29 : index
      %c3_456 = arith.constant 3 : index
      %1004 = memref.load %arg4[%c29_455, %c3_456] : memref<32x4xf32, #tpu.memory_space<smem>>
      %1005 = vector.broadcast %1004 : f32 to vector<8x256xf32>
      %1006 = arith.mulf %991, %1005 : vector<8x256xf32>
      %1007 = arith.addf %975, %1006 : vector<8x256xf32>
      %c0_457 = arith.constant 0 : index
      %c30 = arith.constant 30 : index
      %1008 = memref.load %arg2[%c0_457, %c30] : memref<3x32xf32, #tpu.memory_space<smem>>
      %1009 = vector.broadcast %1008 : f32 to vector<8x256xf32>
      %1010 = arith.mulf %35, %1009 : vector<8x256xf32>
      %c1_458 = arith.constant 1 : index
      %c30_459 = arith.constant 30 : index
      %1011 = memref.load %arg2[%c1_458, %c30_459] : memref<3x32xf32, #tpu.memory_space<smem>>
      %1012 = vector.broadcast %1011 : f32 to vector<8x256xf32>
      %1013 = arith.mulf %39, %1012 : vector<8x256xf32>
      %1014 = arith.addf %1010, %1013 : vector<8x256xf32>
      %c2_460 = arith.constant 2 : index
      %c30_461 = arith.constant 30 : index
      %1015 = memref.load %arg2[%c2_460, %c30_461] : memref<3x32xf32, #tpu.memory_space<smem>>
      %1016 = vector.broadcast %1015 : f32 to vector<8x256xf32>
      %1017 = arith.mulf %43, %1016 : vector<8x256xf32>
      %1018 = arith.addf %1014, %1017 : vector<8x256xf32>
      %c30_462 = arith.constant 30 : index
      %1019 = memref.load %arg3[%c30_462] : memref<32xf32, #tpu.memory_space<smem>>
      %1020 = vector.broadcast %1019 : f32 to vector<8x256xf32>
      %1021 = arith.addf %1018, %1020 : vector<8x256xf32>
      %cst_463 = arith.constant 0.000000e+00 : f32
      %1022 = vector.broadcast %cst_463 : f32 to vector<8x256xf32>
      %1023 = arith.maximumf %1021, %1022 : vector<8x256xf32>
      %c30_464 = arith.constant 30 : index
      %c0_465 = arith.constant 0 : index
      %1024 = memref.load %arg4[%c30_464, %c0_465] : memref<32x4xf32, #tpu.memory_space<smem>>
      %1025 = vector.broadcast %1024 : f32 to vector<8x256xf32>
      %1026 = arith.mulf %1023, %1025 : vector<8x256xf32>
      %1027 = arith.addf %995, %1026 : vector<8x256xf32>
      %c30_466 = arith.constant 30 : index
      %c1_467 = arith.constant 1 : index
      %1028 = memref.load %arg4[%c30_466, %c1_467] : memref<32x4xf32, #tpu.memory_space<smem>>
      %1029 = vector.broadcast %1028 : f32 to vector<8x256xf32>
      %1030 = arith.mulf %1023, %1029 : vector<8x256xf32>
      %1031 = arith.addf %999, %1030 : vector<8x256xf32>
      %c30_468 = arith.constant 30 : index
      %c2_469 = arith.constant 2 : index
      %1032 = memref.load %arg4[%c30_468, %c2_469] : memref<32x4xf32, #tpu.memory_space<smem>>
      %1033 = vector.broadcast %1032 : f32 to vector<8x256xf32>
      %1034 = arith.mulf %1023, %1033 : vector<8x256xf32>
      %1035 = arith.addf %1003, %1034 : vector<8x256xf32>
      %c30_470 = arith.constant 30 : index
      %c3_471 = arith.constant 3 : index
      %1036 = memref.load %arg4[%c30_470, %c3_471] : memref<32x4xf32, #tpu.memory_space<smem>>
      %1037 = vector.broadcast %1036 : f32 to vector<8x256xf32>
      %1038 = arith.mulf %1023, %1037 : vector<8x256xf32>
      %1039 = arith.addf %1007, %1038 : vector<8x256xf32>
      %c0_472 = arith.constant 0 : index
      %c31 = arith.constant 31 : index
      %1040 = memref.load %arg2[%c0_472, %c31] : memref<3x32xf32, #tpu.memory_space<smem>>
      %1041 = vector.broadcast %1040 : f32 to vector<8x256xf32>
      %1042 = arith.mulf %35, %1041 : vector<8x256xf32>
      %c1_473 = arith.constant 1 : index
      %c31_474 = arith.constant 31 : index
      %1043 = memref.load %arg2[%c1_473, %c31_474] : memref<3x32xf32, #tpu.memory_space<smem>>
      %1044 = vector.broadcast %1043 : f32 to vector<8x256xf32>
      %1045 = arith.mulf %39, %1044 : vector<8x256xf32>
      %1046 = arith.addf %1042, %1045 : vector<8x256xf32>
      %c2_475 = arith.constant 2 : index
      %c31_476 = arith.constant 31 : index
      %1047 = memref.load %arg2[%c2_475, %c31_476] : memref<3x32xf32, #tpu.memory_space<smem>>
      %1048 = vector.broadcast %1047 : f32 to vector<8x256xf32>
      %1049 = arith.mulf %43, %1048 : vector<8x256xf32>
      %1050 = arith.addf %1046, %1049 : vector<8x256xf32>
      %c31_477 = arith.constant 31 : index
      %1051 = memref.load %arg3[%c31_477] : memref<32xf32, #tpu.memory_space<smem>>
      %1052 = vector.broadcast %1051 : f32 to vector<8x256xf32>
      %1053 = arith.addf %1050, %1052 : vector<8x256xf32>
      %cst_478 = arith.constant 0.000000e+00 : f32
      %1054 = vector.broadcast %cst_478 : f32 to vector<8x256xf32>
      %1055 = arith.maximumf %1053, %1054 : vector<8x256xf32>
      %c31_479 = arith.constant 31 : index
      %c0_480 = arith.constant 0 : index
      %1056 = memref.load %arg4[%c31_479, %c0_480] : memref<32x4xf32, #tpu.memory_space<smem>>
      %1057 = vector.broadcast %1056 : f32 to vector<8x256xf32>
      %1058 = arith.mulf %1055, %1057 : vector<8x256xf32>
      %1059 = arith.addf %1027, %1058 : vector<8x256xf32>
      %c31_481 = arith.constant 31 : index
      %c1_482 = arith.constant 1 : index
      %1060 = memref.load %arg4[%c31_481, %c1_482] : memref<32x4xf32, #tpu.memory_space<smem>>
      %1061 = vector.broadcast %1060 : f32 to vector<8x256xf32>
      %1062 = arith.mulf %1055, %1061 : vector<8x256xf32>
      %1063 = arith.addf %1031, %1062 : vector<8x256xf32>
      %c31_483 = arith.constant 31 : index
      %c2_484 = arith.constant 2 : index
      %1064 = memref.load %arg4[%c31_483, %c2_484] : memref<32x4xf32, #tpu.memory_space<smem>>
      %1065 = vector.broadcast %1064 : f32 to vector<8x256xf32>
      %1066 = arith.mulf %1055, %1065 : vector<8x256xf32>
      %1067 = arith.addf %1035, %1066 : vector<8x256xf32>
      %c31_485 = arith.constant 31 : index
      %c3_486 = arith.constant 3 : index
      %1068 = memref.load %arg4[%c31_485, %c3_486] : memref<32x4xf32, #tpu.memory_space<smem>>
      %1069 = vector.broadcast %1068 : f32 to vector<8x256xf32>
      %1070 = arith.mulf %1055, %1069 : vector<8x256xf32>
      %1071 = arith.addf %1039, %1070 : vector<8x256xf32>
      %c0_487 = arith.constant 0 : index
      %1072 = memref.load %arg5[%c0_487] : memref<4xf32, #tpu.memory_space<smem>>
      %1073 = vector.broadcast %1072 : f32 to vector<8x256xf32>
      %1074 = arith.addf %1059, %1073 : vector<8x256xf32>
      %1075 = arith.negf %1074 : vector<8x256xf32>
      %1076 = math.exp %1075 : vector<8x256xf32>
      %cst_488 = arith.constant 1.000000e+00 : f32
      %1077 = vector.broadcast %cst_488 : f32 to vector<8x256xf32>
      %1078 = arith.addf %1077, %1076 : vector<8x256xf32>
      %1079 = arith.divf %1077, %1078 : vector<8x256xf32>
      %c1_489 = arith.constant 1 : index
      %1080 = memref.load %arg5[%c1_489] : memref<4xf32, #tpu.memory_space<smem>>
      %1081 = vector.broadcast %1080 : f32 to vector<8x256xf32>
      %1082 = arith.addf %1063, %1081 : vector<8x256xf32>
      %1083 = arith.negf %1082 : vector<8x256xf32>
      %1084 = math.exp %1083 : vector<8x256xf32>
      %cst_490 = arith.constant 1.000000e+00 : f32
      %1085 = vector.broadcast %cst_490 : f32 to vector<8x256xf32>
      %1086 = arith.addf %1085, %1084 : vector<8x256xf32>
      %1087 = arith.divf %1085, %1086 : vector<8x256xf32>
      %c2_491 = arith.constant 2 : index
      %1088 = memref.load %arg5[%c2_491] : memref<4xf32, #tpu.memory_space<smem>>
      %1089 = vector.broadcast %1088 : f32 to vector<8x256xf32>
      %1090 = arith.addf %1067, %1089 : vector<8x256xf32>
      %1091 = arith.negf %1090 : vector<8x256xf32>
      %1092 = math.exp %1091 : vector<8x256xf32>
      %cst_492 = arith.constant 1.000000e+00 : f32
      %1093 = vector.broadcast %cst_492 : f32 to vector<8x256xf32>
      %1094 = arith.addf %1093, %1092 : vector<8x256xf32>
      %1095 = arith.divf %1093, %1094 : vector<8x256xf32>
      %c3_493 = arith.constant 3 : index
      %1096 = memref.load %arg5[%c3_493] : memref<4xf32, #tpu.memory_space<smem>>
      %1097 = vector.broadcast %1096 : f32 to vector<8x256xf32>
      %1098 = arith.addf %1071, %1097 : vector<8x256xf32>
      %cst_494 = arith.constant 0.000000e+00 : f32
      %1099 = vector.broadcast %cst_494 : f32 to vector<8x256xf32>
      %1100 = arith.maximumf %1098, %1099 : vector<8x256xf32>
      %cst_495 = arith.constant 1.000000e+10 : f32
      %1101 = vector.broadcast %cst_495 : f32 to vector<8x256xf32>
      %1102 = vector.shape_cast %27 : vector<1x256xf32> to vector<1x256xf32>
      %1103 = vector.broadcast %1102 : vector<1x256xf32> to vector<8x256xf32>
      %1104 = arith.select %5, %1101, %1103 : vector<8x256xi1>, vector<8x256xf32>
      %1105 = vector.broadcast %25 : vector<1x256xf32> to vector<8x256xf32>
      %1106 = arith.mulf %1104, %1105 : vector<8x256xf32>
      %cst_496 = arith.constant 0.000000e+00 : f32
      %1107 = vector.broadcast %cst_496 : f32 to vector<8x256xf32>
      %1108 = arith.subf %1107, %1100 : vector<8x256xf32>
      %1109 = arith.mulf %1108, %1106 : vector<8x256xf32>
      %1110 = math.exp %1109 : vector<8x256xf32>
      %cst_497 = arith.constant 1.000000e+00 : f32
      %1111 = vector.broadcast %cst_497 : f32 to vector<8x256xf32>
      %1112 = arith.subf %1111, %1110 : vector<8x256xf32>
      %cst_498 = arith.constant 1.000000e+00 : f32
      %1113 = vector.broadcast %cst_498 : f32 to vector<8x256xf32>
      %1114 = arith.subf %1113, %1112 : vector<8x256xf32>
      %cst_499 = arith.constant 1.000000e-10 : f32
      %1115 = vector.broadcast %cst_499 : f32 to vector<8x256xf32>
      %1116 = arith.addf %1114, %1115 : vector<8x256xf32>
      %cst_500 = arith.constant 1.000000e+00 : f32
      %1117 = vector.broadcast %cst_500 : f32 to vector<8x256xf32>
      %cst_501 = arith.constant 1.000000e+00 : f32
      %1118 = vector.broadcast %cst_501 : f32 to vector<1x256xf32>
      %1119 = vector.extract_strided_slice %1116 {offsets = [0, 0], sizes = [1, 256], strides = [1, 1]} : vector<8x256xf32> to vector<1x256xf32>
      %1120 = arith.mulf %1118, %1119 : vector<1x256xf32>
      %c1_i32_502 = arith.constant 1 : i32
      %1121 = vector.broadcast %c1_i32_502 : i32 to vector<8x256xi32>
      %1122 = arith.cmpi eq, %0, %1121 : vector<8x256xi32>
      %1123 = vector.shape_cast %1120 : vector<1x256xf32> to vector<1x256xf32>
      %1124 = vector.broadcast %1123 : vector<1x256xf32> to vector<8x256xf32>
      %1125 = arith.select %1122, %1124, %1117 : vector<8x256xi1>, vector<8x256xf32>
      %1126 = vector.extract_strided_slice %1116 {offsets = [1, 0], sizes = [1, 256], strides = [1, 1]} : vector<8x256xf32> to vector<1x256xf32>
      %1127 = arith.mulf %1120, %1126 : vector<1x256xf32>
      %c2_i32 = arith.constant 2 : i32
      %1128 = vector.broadcast %c2_i32 : i32 to vector<8x256xi32>
      %1129 = arith.cmpi eq, %0, %1128 : vector<8x256xi32>
      %1130 = vector.shape_cast %1127 : vector<1x256xf32> to vector<1x256xf32>
      %1131 = vector.broadcast %1130 : vector<1x256xf32> to vector<8x256xf32>
      %1132 = arith.select %1129, %1131, %1125 : vector<8x256xi1>, vector<8x256xf32>
      %1133 = vector.extract_strided_slice %1116 {offsets = [2, 0], sizes = [1, 256], strides = [1, 1]} : vector<8x256xf32> to vector<1x256xf32>
      %1134 = arith.mulf %1127, %1133 : vector<1x256xf32>
      %c3_i32 = arith.constant 3 : i32
      %1135 = vector.broadcast %c3_i32 : i32 to vector<8x256xi32>
      %1136 = arith.cmpi eq, %0, %1135 : vector<8x256xi32>
      %1137 = vector.shape_cast %1134 : vector<1x256xf32> to vector<1x256xf32>
      %1138 = vector.broadcast %1137 : vector<1x256xf32> to vector<8x256xf32>
      %1139 = arith.select %1136, %1138, %1132 : vector<8x256xi1>, vector<8x256xf32>
      %1140 = vector.extract_strided_slice %1116 {offsets = [3, 0], sizes = [1, 256], strides = [1, 1]} : vector<8x256xf32> to vector<1x256xf32>
      %1141 = arith.mulf %1134, %1140 : vector<1x256xf32>
      %c4_i32 = arith.constant 4 : i32
      %1142 = vector.broadcast %c4_i32 : i32 to vector<8x256xi32>
      %1143 = arith.cmpi eq, %0, %1142 : vector<8x256xi32>
      %1144 = vector.shape_cast %1141 : vector<1x256xf32> to vector<1x256xf32>
      %1145 = vector.broadcast %1144 : vector<1x256xf32> to vector<8x256xf32>
      %1146 = arith.select %1143, %1145, %1139 : vector<8x256xi1>, vector<8x256xf32>
      %1147 = vector.extract_strided_slice %1116 {offsets = [4, 0], sizes = [1, 256], strides = [1, 1]} : vector<8x256xf32> to vector<1x256xf32>
      %1148 = arith.mulf %1141, %1147 : vector<1x256xf32>
      %c5_i32 = arith.constant 5 : i32
      %1149 = vector.broadcast %c5_i32 : i32 to vector<8x256xi32>
      %1150 = arith.cmpi eq, %0, %1149 : vector<8x256xi32>
      %1151 = vector.shape_cast %1148 : vector<1x256xf32> to vector<1x256xf32>
      %1152 = vector.broadcast %1151 : vector<1x256xf32> to vector<8x256xf32>
      %1153 = arith.select %1150, %1152, %1146 : vector<8x256xi1>, vector<8x256xf32>
      %1154 = vector.extract_strided_slice %1116 {offsets = [5, 0], sizes = [1, 256], strides = [1, 1]} : vector<8x256xf32> to vector<1x256xf32>
      %1155 = arith.mulf %1148, %1154 : vector<1x256xf32>
      %c6_i32 = arith.constant 6 : i32
      %1156 = vector.broadcast %c6_i32 : i32 to vector<8x256xi32>
      %1157 = arith.cmpi eq, %0, %1156 : vector<8x256xi32>
      %1158 = vector.shape_cast %1155 : vector<1x256xf32> to vector<1x256xf32>
      %1159 = vector.broadcast %1158 : vector<1x256xf32> to vector<8x256xf32>
      %1160 = arith.select %1157, %1159, %1153 : vector<8x256xi1>, vector<8x256xf32>
      %1161 = vector.extract_strided_slice %1116 {offsets = [6, 0], sizes = [1, 256], strides = [1, 1]} : vector<8x256xf32> to vector<1x256xf32>
      %1162 = arith.mulf %1155, %1161 : vector<1x256xf32>
      %c7_i32_503 = arith.constant 7 : i32
      %1163 = vector.broadcast %c7_i32_503 : i32 to vector<8x256xi32>
      %1164 = arith.cmpi eq, %0, %1163 : vector<8x256xi32>
      %1165 = vector.shape_cast %1162 : vector<1x256xf32> to vector<1x256xf32>
      %1166 = vector.broadcast %1165 : vector<1x256xf32> to vector<8x256xf32>
      %1167 = arith.select %1164, %1166, %1160 : vector<8x256xi1>, vector<8x256xf32>
      %1168 = arith.mulf %1112, %1167 : vector<8x256xf32>
      %cst_504 = arith.constant dense<0.000000e+00> : vector<256xf32>
      %1169 = vector.multi_reduction <add>, %1168, %cst_504 [0] : vector<8x256xf32> to vector<256xf32>
      %1170 = vector.shape_cast %1169 : vector<256xf32> to vector<1x256xf32>
      %1171 = arith.mulf %1168, %31 : vector<8x256xf32>
      %cst_505 = arith.constant dense<0.000000e+00> : vector<256xf32>
      %1172 = vector.multi_reduction <add>, %1171, %cst_505 [0] : vector<8x256xf32> to vector<256xf32>
      %1173 = vector.shape_cast %1172 : vector<256xf32> to vector<1x256xf32>
      %1174 = arith.mulf %1168, %1079 : vector<8x256xf32>
      %cst_506 = arith.constant dense<0.000000e+00> : vector<256xf32>
      %1175 = vector.multi_reduction <add>, %1174, %cst_506 [0] : vector<8x256xf32> to vector<256xf32>
      %1176 = vector.shape_cast %1175 : vector<256xf32> to vector<1x256xf32>
      %1177 = arith.mulf %1168, %1087 : vector<8x256xf32>
      %cst_507 = arith.constant dense<0.000000e+00> : vector<256xf32>
      %1178 = vector.multi_reduction <add>, %1177, %cst_507 [0] : vector<8x256xf32> to vector<256xf32>
      %1179 = vector.shape_cast %1178 : vector<256xf32> to vector<1x256xf32>
      %1180 = arith.mulf %1168, %1095 : vector<8x256xf32>
      %cst_508 = arith.constant dense<0.000000e+00> : vector<256xf32>
      %1181 = vector.multi_reduction <add>, %1180, %cst_508 [0] : vector<8x256xf32> to vector<256xf32>
      %1182 = vector.shape_cast %1181 : vector<256xf32> to vector<1x256xf32>
      %cst_509 = arith.constant 1.000000e-10 : f32
      %1183 = vector.broadcast %cst_509 : f32 to vector<1x256xf32>
      %1184 = arith.maximumf %1170, %1183 : vector<1x256xf32>
      %1185 = tpu.reciprocal %1184 {approx = true} : vector<1x256xf32> -> vector<1x256xf32>
      %1186 = arith.mulf %1173, %1185 : vector<1x256xf32>
      %cst_510 = arith.constant 1.000000e-10 : f32
      %1187 = vector.broadcast %cst_510 : f32 to vector<1x256xf32>
      %1188 = arith.maximumf %1186, %1187 : vector<1x256xf32>
      %1189 = tpu.reciprocal %1188 {approx = true} : vector<1x256xf32> -> vector<1x256xf32>
      %c0_511 = arith.constant 0 : index
      %1190 = arith.index_cast %8 : i32 to index
      %1191 = vector.load %arg7[%c0_511, %1190] : memref<8x2048xf32, #tpu.memory_space<vmem>>, vector<8x256xf32>
      tpu.vector_store %arg7[%c0_511, %1190], %1168 {strides = array<i32>} : memref<8x2048xf32, #tpu.memory_space<vmem>>, vector<8x256xf32>,
      %c0_512 = arith.constant 0 : index
      %1192 = arith.index_cast %8 : i32 to index
      %1193 = vector.load %arg8[%c0_512, %1192] : memref<8x2048xf32, #tpu.memory_space<vmem>>, vector<8x256xf32>
      tpu.vector_store %arg8[%c0_512, %1192], %1112 {strides = array<i32>} : memref<8x2048xf32, #tpu.memory_space<vmem>>, vector<8x256xf32>,
      %c0_513 = arith.constant 0 : index
      %1194 = arith.index_cast %8 : i32 to index
      %1195 = vector.load %arg6[%c0_513, %1194] : memref<8x2048xf32, #tpu.memory_space<vmem>>, vector<1x256xf32>
      tpu.vector_store %arg6[%c0_513, %1194], %1176 {strides = array<i32>} : memref<8x2048xf32, #tpu.memory_space<vmem>>, vector<1x256xf32>,
      %c1_514 = arith.constant 1 : index
      %1196 = arith.index_cast %8 : i32 to index
      %1197 = vector.load %arg6[%c1_514, %1196] : memref<8x2048xf32, #tpu.memory_space<vmem>>, vector<1x256xf32>
      tpu.vector_store %arg6[%c1_514, %1196], %1179 {strides = array<i32>} : memref<8x2048xf32, #tpu.memory_space<vmem>>, vector<1x256xf32>,
      %c2_515 = arith.constant 2 : index
      %1198 = arith.index_cast %8 : i32 to index
      %1199 = vector.load %arg6[%c2_515, %1198] : memref<8x2048xf32, #tpu.memory_space<vmem>>, vector<1x256xf32>
      tpu.vector_store %arg6[%c2_515, %1198], %1182 {strides = array<i32>} : memref<8x2048xf32, #tpu.memory_space<vmem>>, vector<1x256xf32>,
      %c3_516 = arith.constant 3 : index
      %1200 = arith.index_cast %8 : i32 to index
      %1201 = vector.load %arg6[%c3_516, %1200] : memref<8x2048xf32, #tpu.memory_space<vmem>>, vector<1x256xf32>
      tpu.vector_store %arg6[%c3_516, %1200], %1189 {strides = array<i32>} : memref<8x2048xf32, #tpu.memory_space<vmem>>, vector<1x256xf32>,
      %c4_517 = arith.constant 4 : index
      %1202 = arith.index_cast %8 : i32 to index
      %1203 = vector.load %arg6[%c4_517, %1202] : memref<8x2048xf32, #tpu.memory_space<vmem>>, vector<1x256xf32>
      tpu.vector_store %arg6[%c4_517, %1202], %1170 {strides = array<i32>} : memref<8x2048xf32, #tpu.memory_space<vmem>>, vector<1x256xf32>,
      %cst_518 = arith.constant 0.000000e+00 : f32
      %1204 = vector.broadcast %cst_518 : f32 to vector<3x256xf32>
      %c5_519 = arith.constant 5 : index
      %1205 = arith.index_cast %8 : i32 to index
      %1206 = vector.load %arg6[%c5_519, %1205] : memref<8x2048xf32, #tpu.memory_space<vmem>>, vector<3x256xf32>
      tpu.vector_store %arg6[%c5_519, %1205], %1204 {strides = array<i32>} : memref<8x2048xf32, #tpu.memory_space<vmem>>, vector<3x256xf32>,
    }
    %c8_i32_0 = arith.constant 8 : i32
    return
  }
  func.func @transform_0(%arg0: i32) -> (i32, i32) {
    %c0_i32 = arith.constant 0 : i32
    %c0_i32_0 = arith.constant 0 : i32
    return %c0_i32, %arg0 : i32, i32
  }
  func.func @transform_1(%arg0: i32) -> (i32, i32) {
    %c0_i32 = arith.constant 0 : i32
    %c0_i32_0 = arith.constant 0 : i32
    %c0_i32_1 = arith.constant 0 : i32
    return %c0_i32, %c0_i32_0 : i32, i32
  }
  func.func @transform_2(%arg0: i32) -> i32 {
    %c0_i32 = arith.constant 0 : i32
    %c0_i32_0 = arith.constant 0 : i32
    return %c0_i32 : i32
  }
  func.func @transform_3(%arg0: i32) -> (i32, i32) {
    %c0_i32 = arith.constant 0 : i32
    %c0_i32_0 = arith.constant 0 : i32
    %c0_i32_1 = arith.constant 0 : i32
    return %c0_i32, %c0_i32_0 : i32, i32
  }
  func.func @transform_4(%arg0: i32) -> i32 {
    %c0_i32 = arith.constant 0 : i32
    %c0_i32_0 = arith.constant 0 : i32
    return %c0_i32 : i32
  }
  func.func @transform_5(%arg0: i32) -> (i32, i32) {
    %c0_i32 = arith.constant 0 : i32
    %c0_i32_0 = arith.constant 0 : i32
    return %c0_i32, %arg0 : i32, i32
  }
  func.func @transform_6(%arg0: i32) -> (i32, i32) {
    %c0_i32 = arith.constant 0 : i32
    %c0_i32_0 = arith.constant 0 : i32
    return %c0_i32, %arg0 : i32, i32
  }
  func.func @transform_7(%arg0: i32) -> (i32, i32) {
    %c0_i32 = arith.constant 0 : i32
    %c0_i32_0 = arith.constant 0 : i32
    return %c0_i32, %arg0 : i32, i32
  }
}

</mosaic_0001>

<llo_original>
// kernel: raycast_render_rays.1
$region0: #{raycast_render_rays.1}
  #allocation0 [shape = 'u32[]', space=smem, size = 0x4, offset = 0x4, fixed_abs, tag = 'smem constant byte address 0x4 - core index']
  #allocation1 [shape = 'u32[144,128]{1,0:T(1,128)}', space=vmem, size = 0x12000, scoped, tag = 'internal scratch']
  %s0 = inlined_call_operand.vmem [shape: f32[8,4096], index: 0, kind: input, shape index: {}]
  %s1 = inlined_call_operand.vmem [shape: f32[3,32], index: 1, kind: input, shape index: {}]
  %s2 = inlined_call_operand.vmem [shape: f32[32], index: 2, kind: input, shape index: {}]
  %s3 = inlined_call_operand.vmem [shape: f32[32,4], index: 3, kind: input, shape index: {}]
  %s4 = inlined_call_operand.vmem [shape: f32[4], index: 4, kind: input, shape index: {}]
  %s5 = inlined_call_operand.vmem [shape: f32[8,4096], index: 5, kind: output, shape index: {0}]
  %s6 = inlined_call_operand.hbm [shape: f32[8,4096], index: 6, kind: output, shape index: {1}]
  %s7 = inlined_call_operand.hbm [shape: f32[8,4096], index: 7, kind: output, shape index: {2}]
  %8 = xla_tuple %s5, %s6, %s7
  %s9 = sld [smem:[#allocation0]]
  $region92: #{raycast_render_rays.1} parent=0
    _
  %s11 = ssub.s32 1, %s9
  %s12 = scalar_select 0, %s11, %s9
  $region1: #{raycast_render_rays.1} parent=0
    #allocation2 [shape = 'u8[2048]{0}', space=smem, size = 0x800, scoped, tag = 'input window, operand 1, single buffered']
    #allocation3 [shape = 's32[2]{0}', space=sflag, size = 0x8, scoped, tag = 'scoped memory for raycast_render_rays.1']
    #allocation4 [shape = 's32[2]{0}', space=sflag, size = 0x8, scoped, tag = 'scoped memory for raycast_render_rays.1']
    #allocation5 [shape = 'u8[512]{0}', space=smem, size = 0x200, scoped, tag = 'input window, operand 2, single buffered']
    #allocation6 [shape = 's32[1]{0}', space=sflag, size = 0x4, scoped, tag = 'scoped memory for raycast_render_rays.1']
    #allocation7 [shape = 'u8[16384]{0}', space=smem, size = 0x4000, scoped, tag = 'input window, operand 3, single buffered']
    #allocation8 [shape = 'u8[512]{0}', space=smem, size = 0x200, scoped, tag = 'input window, operand 4, single buffered']
    #allocation9 [shape = 's32[1]{0}', space=sflag, size = 0x4, scoped, tag = 'scoped memory for raycast_render_rays.1']
    #allocation10 [shape = 'u8[131072]{0}', space=vmem, size = 0x20000, scoped, tag = 'output window, operand 1']
    #allocation11 [shape = 'u8[131072]{0}', space=vmem, size = 0x20000, scoped, tag = 'output window, operand 2']
    #allocation12 [shape = 's32[2]{0}', space=sflag, size = 0x8, scoped, tag = 'scoped memory for raycast_render_rays.1']
    %13 = vsyncpa [#allocation4], 0
    %14 = vsyncpa [#allocation6], 0
    %15 = vsyncpa [#allocation9], 0
    %16 = vsyncpa [#allocation3], 0
    %s17 = scalar_lea.sflag [#allocation3], 1
    %18 = vsyncpa %s17, 0
    %19 = vsyncpa [#allocation12], 0
    %s20 = scalar_lea.sflag [#allocation12], 1
    %21 = vsyncpa %s20, 0
    loop: start=0, step=1, limit=4
    $region2: #{raycast_render_rays.1} parent=1 // loop_pre_header
      _
    $region3: #{raycast_render_rays.1} parent=1 // loop_header
      %s23 = sphi 0, %s27
      %p24 = scmp.ge.s32.totalorder %s23, 4
      %s33 = sphi 0, %s35
      %s36 = sphi 0, %s33
      %s37 = sphi 0, %s36
      %s53 = sphi 0, %s37
      %s57 = sphi 0, %s57
      %s59 = sphi 0, %s57
      %s60 = sphi 0, %s59
      %s74 = sphi 0, %s60
      %s78 = sphi 0, %s78
      %s80 = sphi 0, %s78
      %s81 = sphi 0, %s80
      %s95 = sphi 0, %s81
      %s99 = sphi 0, %s99
      %s101 = sphi 0, %s99
      %s102 = sphi 0, %s101
      %s116 = sphi 0, %s102
      %s120 = sphi 0, %s120
      %s122 = sphi 0, %s120
      %s123 = sphi 0, %s122
      %s137 = sphi 0, %s123
      %s143 = sphi 0, %s145
      %s146 = sphi 0, %s143
      %s147 = sphi 0, %s146
      %s163 = sphi 0, %s147
      %s169 = sphi 0, %s171
      %s172 = sphi 0, %s169
      %s173 = sphi 0, %s172
      %s189 = sphi 0, %s173
      %s195 = sphi 0, %s197
      %s198 = sphi 0, %s195
      %s199 = sphi 0, %s198
      %s215 = sphi 0, %s199
    $region4: #{raycast_render_rays.1} parent=1 // loop_header_branch
      %26 = sbr.rel (%p24) target = $region8
    $region5: #{raycast_render_rays.1} parent=1 // loop_body
      %s28 = ssub.s32 %s23, 1
      %s29 = ssub.s32 %s23, 2
      %s30 = sadd.s32 %s23, 1
      %s31 = ssub.s32 %s23, %s30
      %p32 = scmp.eq.s32.totalorder %s31, 0
      %s34 = sadd.s32 %s33, 1
      %s35 = scalar_select %p32, %s33, %s34
      %p38 = pneg %p32
      %p39 = scmp.eq.s32.totalorder %s23, 1
      %p40 = por %p38, %p39
      %p41 = scmp.ne.s32.totalorder %s33, %s36
      %p42 = scmp.eq.s32.totalorder %s23, 0
      %p43 = por %p41, %p42
      %p44 = scmp.ne.s32.totalorder %s33, %s36
      %p45 = scmp.eq.s32.totalorder %s28, 1
      %p46 = por %p44, %p45
      %p47 = scmp.ne.s32.totalorder %s36, %s37
      %p48 = scmp.eq.s32.totalorder %s28, 0
      %p49 = por %p47, %p48
      %p50 = scmp.ne.s32.totalorder %s36, %s37
      %p51 = scmp.eq.s32.totalorder %s29, 1
      %p52 = por %p50, %p51
      %p54 = scmp.ne.s32.totalorder %s37, %s53
      %p55 = scmp.eq.s32.totalorder %s29, 0
      %p56 = por %p54, %p55
      %s58 = sadd.s32 %s57, 1
      %p61 = scmp.eq.s32.totalorder %s23, 1
      %p62 = scmp.ne.s32.totalorder %s57, %s59
      %p63 = scmp.eq.s32.totalorder %s23, 0
      %p64 = por %p62, %p63
      %p65 = scmp.ne.s32.totalorder %s57, %s59
      %p66 = scmp.eq.s32.totalorder %s28, 1
      %p67 = por %p65, %p66
      %p68 = scmp.ne.s32.totalorder %s59, %s60
      %p69 = scmp.eq.s32.totalorder %s28, 0
      %p70 = por %p68, %p69
      %p71 = scmp.ne.s32.totalorder %s59, %s60
      %p72 = scmp.eq.s32.totalorder %s29, 1
      %p73 = por %p71, %p72
      %p75 = scmp.ne.s32.totalorder %s60, %s74
      %p76 = scmp.eq.s32.totalorder %s29, 0
      %p77 = por %p75, %p76
      %s79 = sadd.s32 %s78, 1
      %p82 = scmp.eq.s32.totalorder %s23, 1
      %p83 = scmp.ne.s32.totalorder %s78, %s80
      %p84 = scmp.eq.s32.totalorder %s23, 0
      %p85 = por %p83, %p84
      %p86 = scmp.ne.s32.totalorder %s78, %s80
      %p87 = scmp.eq.s32.totalorder %s28, 1
      %p88 = por %p86, %p87
      %p89 = scmp.ne.s32.totalorder %s80, %s81
      %p90 = scmp.eq.s32.totalorder %s28, 0
      %p91 = por %p89, %p90
      %p92 = scmp.ne.s32.totalorder %s80, %s81
      %p93 = scmp.eq.s32.totalorder %s29, 1
      %p94 = por %p92, %p93
      %p96 = scmp.ne.s32.totalorder %s81, %s95
      %p97 = scmp.eq.s32.totalorder %s29, 0
      %p98 = por %p96, %p97
      %s100 = sadd.s32 %s99, 1
      %p103 = scmp.eq.s32.totalorder %s23, 1
      %p104 = scmp.ne.s32.totalorder %s99, %s101
      %p105 = scmp.eq.s32.totalorder %s23, 0
      %p106 = por %p104, %p105
      %p107 = scmp.ne.s32.totalorder %s99, %s101
      %p108 = scmp.eq.s32.totalorder %s28, 1
      %p109 = por %p107, %p108
      %p110 = scmp.ne.s32.totalorder %s101, %s102
      %p111 = scmp.eq.s32.totalorder %s28, 0
      %p112 = por %p110, %p111
      %p113 = scmp.ne.s32.totalorder %s101, %s102
      %p114 = scmp.eq.s32.totalorder %s29, 1
      %p115 = por %p113, %p114
      %p117 = scmp.ne.s32.totalorder %s102, %s116
      %p118 = scmp.eq.s32.totalorder %s29, 0
      %p119 = por %p117, %p118
      %s121 = sadd.s32 %s120, 1
      %p124 = scmp.eq.s32.totalorder %s23, 1
      %p125 = scmp.ne.s32.totalorder %s120, %s122
      %p126 = scmp.eq.s32.totalorder %s23, 0
      %p127 = por %p125, %p126
      %p128 = scmp.ne.s32.totalorder %s120, %s122
      %p129 = scmp.eq.s32.totalorder %s28, 1
      %p130 = por %p128, %p129
      %p131 = scmp.ne.s32.totalorder %s122, %s123
      %p132 = scmp.eq.s32.totalorder %s28, 0
      %p133 = por %p131, %p132
      %p134 = scmp.ne.s32.totalorder %s122, %s123
      %p135 = scmp.eq.s32.totalorder %s29, 1
      %p136 = por %p134, %p135
      %p138 = scmp.ne.s32.totalorder %s123, %s137
      %p139 = scmp.eq.s32.totalorder %s29, 0
      %p140 = por %p138, %p139
      %s141 = ssub.s32 %s23, %s30
      %p142 = scmp.eq.s32.totalorder %s141, 0
      %s144 = sadd.s32 %s143, 1
      %s145 = scalar_select %p142, %s143, %s144
      %p148 = pneg %p142
      %p149 = scmp.eq.s32.totalorder %s23, 1
      %p150 = por %p148, %p149
      %p151 = scmp.ne.s32.totalorder %s143, %s146
      %p152 = scmp.eq.s32.totalorder %s23, 0
      %p153 = por %p151, %p152
      %p154 = scmp.ne.s32.totalorder %s143, %s146
      %p155 = scmp.eq.s32.totalorder %s28, 1
      %p156 = por %p154, %p155
      %p157 = scmp.ne.s32.totalorder %s146, %s147
      %p158 = scmp.eq.s32.totalorder %s28, 0
      %p159 = por %p157, %p158
      %p160 = scmp.ne.s32.totalorder %s146, %s147
      %p161 = scmp.eq.s32.totalorder %s29, 1
      %p162 = por %p160, %p161
      %p164 = scmp.ne.s32.totalorder %s147, %s163
      %p165 = scmp.eq.s32.totalorder %s29, 0
      %p166 = por %p164, %p165
      %s167 = ssub.s32 %s23, %s30
      %p168 = scmp.eq.s32.totalorder %s167, 0
      %s170 = sadd.s32 %s169, 1
      %s171 = scalar_select %p168, %s169, %s170
      %p174 = pneg %p168
      %p175 = scmp.eq.s32.totalorder %s23, 1
      %p176 = por %p174, %p175
      %p177 = scmp.ne.s32.totalorder %s169, %s172
      %p178 = scmp.eq.s32.totalorder %s23, 0
      %p179 = por %p177, %p178
      %p180 = scmp.ne.s32.totalorder %s169, %s172
      %p181 = scmp.eq.s32.totalorder %s28, 1
      %p182 = por %p180, %p181
      %p183 = scmp.ne.s32.totalorder %s172, %s173
      %p184 = scmp.eq.s32.totalorder %s28, 0
      %p185 = por %p183, %p184
      %p186 = scmp.ne.s32.totalorder %s172, %s173
      %p187 = scmp.eq.s32.totalorder %s29, 1
      %p188 = por %p186, %p187
      %p190 = scmp.ne.s32.totalorder %s173, %s189
      %p191 = scmp.eq.s32.totalorder %s29, 0
      %p192 = por %p190, %p191
      %s193 = ssub.s32 %s23, %s30
      %p194 = scmp.eq.s32.totalorder %s193, 0
      %s196 = sadd.s32 %s195, 1
      %s197 = scalar_select %p194, %s195, %s196
      %p200 = pneg %p194
      %p201 = scmp.eq.s32.totalorder %s23, 1
      %p202 = por %p200, %p201
      %p203 = scmp.ne.s32.totalorder %s195, %s198
      %p204 = scmp.eq.s32.totalorder %s23, 0
      %p205 = por %p203, %p204
      %p206 = scmp.ne.s32.totalorder %s195, %s198
      %p207 = scmp.eq.s32.totalorder %s28, 1
      %p208 = por %p206, %p207
      %p209 = scmp.ne.s32.totalorder %s198, %s199
      %p210 = scmp.eq.s32.totalorder %s28, 0
      %p211 = por %p209, %p210
      %p212 = scmp.ne.s32.totalorder %s198, %s199
      %p213 = scmp.eq.s32.totalorder %s29, 1
      %p214 = por %p212, %p213
      %p216 = scmp.ne.s32.totalorder %s199, %s215
      %p217 = scmp.eq.s32.totalorder %s29, 0
      %p218 = por %p216, %p217
      %p219 = scmp.le.s32.totalorder 1, %s23
      %p220 = scmp.lt.s32.totalorder %s23, 3
      %p221 = pnand %p219, %p220
      %p222 = pneg %p221
      // Predicated region
      $region9: #{raycast_render_rays.1} parent=5 // pred_check
        _
      $region10: #{raycast_render_rays.1} parent=5 // pred_check_branch
        %224 = sbr.rel (%p221) target = $region12
      $region11: #{raycast_render_rays.1} parent=5 // pred_region
        %s225 = ssub.s32 %s23, 1
        // Predicated region
        $region13: #{raycast_render_rays.1} parent=11 // pred_check
          %p226 = pneg %p70
        $region14: #{raycast_render_rays.1} parent=11 // pred_check_branch
          %228 = sbr.rel (%p226) target = $region16
        $region15: #{raycast_render_rays.1} parent=11 // pred_region
          %s230 = ssub.s32 64, 64
          %231 = vsyncadd [#allocation4], %s230
          %s233 = sshll.u32 %s1, 4
          %s234 = int_to_ptr.vmem [resolvable:$true] %s233
          %236 = dma.vmem_to_smem %s234, 64, [#allocation2], [#allocation4]
        $region16: #{raycast_render_rays.1} parent=11 // pred_fallthru
          _
        // Predicated region
        $region17: #{raycast_render_rays.1} parent=11 // pred_check
          %p237 = pneg %p91
        $region18: #{raycast_render_rays.1} parent=11 // pred_check_branch
          %239 = sbr.rel (%p237) target = $region20
        $region19: #{raycast_render_rays.1} parent=11 // pred_region
          %s241 = ssub.s32 16, 16
          %242 = vsyncadd [#allocation6], %s241
          %s244 = sshll.u32 %s2, 4
          %s245 = int_to_ptr.vmem [resolvable:$true] %s244
          %247 = dma.vmem_to_smem %s245, 16, [#allocation5], [#allocation6]
        $region20: #{raycast_render_rays.1} parent=11 // pred_fallthru
          _
        // Predicated region
        $region21: #{raycast_render_rays.1} parent=11 // pred_check
          %p248 = pneg %p112
        $region22: #{raycast_render_rays.1} parent=11 // pred_check_branch
          %250 = sbr.rel (%p248) target = $region24
        $region23: #{raycast_render_rays.1} parent=11 // pred_region
          %s252 = ssub.s32 512, 512
          %253 = vsyncadd [#allocation6], %s252
          %s254 = sshll.u32 %s3, 4
          %s255 = int_to_ptr.vmem [resolvable:$true] %s254
          %260 = dma.vmem_to_smem %s255, 512, [#allocation7], [#allocation6], 128, 128, 8
        $region24: #{raycast_render_rays.1} parent=11 // pred_fallthru
          _
        // Predicated region
        $region25: #{raycast_render_rays.1} parent=11 // pred_check
          %p261 = pneg %p133
        $region26: #{raycast_render_rays.1} parent=11 // pred_check_branch
          %263 = sbr.rel (%p261) target = $region28
        $region27: #{raycast_render_rays.1} parent=11 // pred_region
          %s265 = ssub.s32 16, 16
          %266 = vsyncadd [#allocation9], %s265
          %s268 = sshll.u32 %s4, 4
          %s269 = int_to_ptr.vmem [resolvable:$true] %s268
          %271 = dma.vmem_to_smem %s269, 16, [#allocation8], [#allocation9]
        $region28: #{raycast_render_rays.1} parent=11 // pred_fallthru
          _
      $region12: #{raycast_render_rays.1} parent=5 // pred_fallthru
        _
      %p272 = scmp.lt.s32.totalorder %s23, 2
      // Predicated region
      $region29: #{raycast_render_rays.1} parent=5 // pred_check
        %p273 = pneg %p272
      $region30: #{raycast_render_rays.1} parent=5 // pred_check_branch
        %275 = sbr.rel (%p273) target = $region32
      $region31: #{raycast_render_rays.1} parent=5 // pred_region
        // Predicated region
        $region33: #{raycast_render_rays.1} parent=31 // pred_check
          %p276 = pneg %p43
        $region34: #{raycast_render_rays.1} parent=31 // pred_check_branch
          %278 = sbr.rel (%p276) target = $region36
        $region35: #{raycast_render_rays.1} parent=31 // pred_region
          %s279 = smul.u32 16, %s23
          %p280 = scmp.lt.s32.totalorder %s279, 31
          %s281 = scalar_select %p280, %s279, 31
          %s282 = smul.addr %s281, 8
          %s283 = scalar_lea.vmem %s0, %s282
          %s284 = smul.u32 16, %s23
        $region36: #{raycast_render_rays.1} parent=31 // pred_fallthru
          _
      $region32: #{raycast_render_rays.1} parent=5 // pred_fallthru
        _
      %p285 = scmp.le.s32.totalorder 1, %s23
      %p286 = scmp.lt.s32.totalorder %s23, 3
      %p287 = pnand %p285, %p286
      %p288 = pneg %p287
      // Predicated region
      $region37: #{raycast_render_rays.1} parent=5 // pred_check
        _
      $region38: #{raycast_render_rays.1} parent=5 // pred_check_branch
        %290 = sbr.rel (%p287) target = $region40
      $region39: #{raycast_render_rays.1} parent=5 // pred_region
        %s291 = ssub.s32 %s23, 1
        // Predicated region
        $region41: #{raycast_render_rays.1} parent=39 // pred_check
          %p292 = pneg %p70
        $region42: #{raycast_render_rays.1} parent=39 // pred_check_branch
          %294 = sbr.rel (%p292) target = $region44
        $region43: #{raycast_render_rays.1} parent=39 // pred_region
          %295 = dma.done [#allocation4], 64
        $region44: #{raycast_render_rays.1} parent=39 // pred_fallthru
          _
        // Predicated region
        $region45: #{raycast_render_rays.1} parent=39 // pred_check
          %p296 = pneg %p91
        $region46: #{raycast_render_rays.1} parent=39 // pred_check_branch
          %298 = sbr.rel (%p296) target = $region48
        $region47: #{raycast_render_rays.1} parent=39 // pred_region
          %299 = dma.done [#allocation6], 16
        $region48: #{raycast_render_rays.1} parent=39 // pred_fallthru
          _
        // Predicated region
        $region49: #{raycast_render_rays.1} parent=39 // pred_check
          %p300 = pneg %p112
        $region50: #{raycast_render_rays.1} parent=39 // pred_check_branch
          %302 = sbr.rel (%p300) target = $region52
        $region51: #{raycast_render_rays.1} parent=39 // pred_region
          %303 = dma.done [#allocation6], 512
        $region52: #{raycast_render_rays.1} parent=39 // pred_fallthru
          _
        // Predicated region
        $region53: #{raycast_render_rays.1} parent=39 // pred_check
          %p304 = pneg %p133
        $region54: #{raycast_render_rays.1} parent=39 // pred_check_branch
          %306 = sbr.rel (%p304) target = $region56
        $region55: #{raycast_render_rays.1} parent=39 // pred_region
          %307 = dma.done [#allocation9], 16
        $region56: #{raycast_render_rays.1} parent=39 // pred_fallthru
          _
        %308 = sfence
        %s309 = smul.u32 16, %s28
        %p310 = scmp.lt.s32.totalorder %s309, 31
        %s311 = scalar_select %p310, %s309, 31
        %s312 = smul.addr %s311, 8
        %s313 = scalar_lea.vmem %s0, %s312
        %p314 = pneg %p49
        %p315 = pneg %p46
        %p316 = pneg %p70
        %p317 = pneg %p67
        %p318 = pneg %p91
        %p319 = pneg %p88
        %p320 = pneg %p112
        %p321 = pneg %p109
        %p322 = pneg %p133
        %p323 = pneg %p130
        %p324 = pneg %p159
        %p325 = pneg %p156
        %s326 = smul.u32 16, %s28
        %p327 = scmp.lt.s32.totalorder %s326, 31
        %s328 = scalar_select %p327, %s326, 31
        %s329 = smul.addr %s328, 8
        %s330 = scalar_lea.vmem %s5, %s329
        %p331 = pneg %p185
        %p332 = pneg %p182
        %s333 = sand.u32 %s172, 1
        %s334 = scalar_lea.sflag [#allocation3], %s333
        %s335 = sand.u32 %s172, 1
        %s336 = smul.addr %s335, 128
        %s337 = scalar_lea.vmem [#allocation10], %s336
        %p338 = pneg %p211
        %p339 = pneg %p208
        %s340 = sand.u32 %s198, 1
        %s341 = scalar_lea.sflag [#allocation12], %s340
        %s342 = sand.u32 %s198, 1
        %s343 = smul.addr %s342, 128
        %s344 = scalar_lea.vmem [#allocation11], %s343
        %s345 = smul.u32 16, %s28
        %p346 = scmp.lt.s32.totalorder %s345, 31
        %s347 = scalar_select %p346, %s345, 31
        %s348 = smul.addr %s347, 8
        %s349 = scalar_lea.vmem %s0, %s348
        %s350 = smul.u32 16, %s28
        %s351 = smul.u32 16, %s28
        %p352 = scmp.lt.s32.totalorder %s351, 31
        %s353 = scalar_select %p352, %s351, 31
        %s354 = smul.addr %s353, 8
        %s355 = scalar_lea.vmem %s5, %s354
        %s356 = smul.u32 16, %s28
        %s357 = smul.u32 16, %s28
        %s358 = smul.u32 16, %s28
        %v359 = vlaneseq
        %v360 = vshrl.u32 %v359, 7
        %v361 = vcvt.s32.f32 %v360
        %v362 = vmul.f32 %v361, 0.14285715
        %vm363 = vcmp.eq.s32.totalorder %v360, 7
        loop: start=0, step=1, limit=8
        $region57: #{raycast_render_rays.1} parent=39 // loop_pre_header
          _
        $region58: #{raycast_render_rays.1} parent=39 // loop_header
          %s365 = sphi 0, %s369
          %p366 = scmp.ge.s32.totalorder %s365, 8
        $region59: #{raycast_render_rays.1} parent=39 // loop_header_branch
          %368 = sbr.rel (%p366) target = $region63
        $region60: #{raycast_render_rays.1} parent=39 // loop_body
          %s370 = smul.u32 %s365, 256
          %s371 = sshra.s32 %s370, 7
          %s372 = sand.u32 %s370, 127
          %s373 = smul.addr %s371, 8
          %s374 = scalar_lea.vmem %s349, %s373
          %v375 = vld [vmem:[%s374] sm:$0xff]
          %v376 = vld [vmem:[%s374 + $0x8] sm:$0xff]
          %v379 = vrot.slane %v375, 7
          %v380 = vrot.slane %v376, 7
          %v383 = vsub.f32 %v375, %v379
          %v384 = vsub.f32 %v376, %v380
          %v385 = vmul.f32 %v375, %v375
          %v386 = vmul.f32 %v376, %v376
          %v389 = vrot.slane %v385, 1
          %v390 = vrot.slane %v386, 1
          %v393 = vadd.f32 %v385, %v389
          %v394 = vadd.f32 %v386, %v390
          %v395 = vrot.slane %v385, 2
          %v396 = vrot.slane %v386, 2
          %v399 = vadd.f32 %v393, %v395
          %v400 = vadd.f32 %v394, %v396
          %v401 = vrsqrt.pop %v399
          %v402 = vmul.f32 %v399, %v401
          %vm403 = vcmp.eq.f32.partialorder %v399, inf
          %v404 = vsel %vm403, %v399, %v402
          %vm405 = vcmp.eq.f32.partialorder %v399, 0.0
          %v406 = vand.u32 %v399, 2147483648
          %v407 = vsel %vm405, %v406, %v404
          %v408 = vrsqrt.pop %v400
          %v409 = vmul.f32 %v400, %v408
          %vm410 = vcmp.eq.f32.partialorder %v400, inf
          %v411 = vsel %vm410, %v400, %v409
          %vm412 = vcmp.eq.f32.partialorder %v400, 0.0
          %v413 = vand.u32 %v400, 2147483648
          %v414 = vsel %vm412, %v413, %v411
          %v415 = vmul.f32 %v383, 0.14285715
          %v416 = vmul.f32 %v384, 0.14285715
          %v417 = vlaneseq
          %v418 = vshrl.u32 %v417, 7
          %v419 = vsub.s32 7, %v418
          %v420 = vrot.slane %v383, %v419
          %v421 = vlaneseq
          %v422 = vshrl.u32 %v421, 7
          %v423 = vsub.s32 7, %v422
          %v424 = vrot.slane %v384, %v423
          %v425 = vmul.f32 %v420, %v362
          %v426 = vmul.f32 %v424, %v362
          %v427 = vlaneseq
          %v428 = vshrl.u32 %v427, 7
          %v429 = vsub.s32 6, %v428
          %v430 = vrot.slane %v375, %v429
          %v431 = vlaneseq
          %v432 = vshrl.u32 %v431, 7
          %v433 = vsub.s32 6, %v432
          %v434 = vrot.slane %v376, %v433
          %v435 = vadd.f32 %v430, %v425
          %v436 = vadd.f32 %v434, %v426
          %v437 = vlaneseq
          %v438 = vshrl.u32 %v437, 7
          %v439 = vsub.s32 3, %v438
          %v440 = vrot.slane %v375, %v439
          %v441 = vlaneseq
          %v442 = vshrl.u32 %v441, 7
          %v443 = vsub.s32 3, %v442
          %v444 = vrot.slane %v376, %v443
          %v445 = vmul.f32 %v440, %v435
          %v446 = vmul.f32 %v444, %v436
          %v447 = vlaneseq
          %v448 = vshrl.u32 %v447, 7
          %v449 = vsub.s32 0, %v448
          %v450 = vrot.slane %v375, %v449
          %v451 = vlaneseq
          %v452 = vshrl.u32 %v451, 7
          %v453 = vsub.s32 0, %v452
          %v454 = vrot.slane %v376, %v453
          %v455 = vadd.f32 %v450, %v445
          %v456 = vadd.f32 %v454, %v446
          %v457 = vlaneseq
          %v458 = vshrl.u32 %v457, 7
          %v459 = vsub.s32 4, %v458
          %v460 = vrot.slane %v375, %v459
          %v461 = vlaneseq
          %v462 = vshrl.u32 %v461, 7
          %v463 = vsub.s32 4, %v462
          %v464 = vrot.slane %v376, %v463
          %v465 = vmul.f32 %v460, %v435
          %v466 = vmul.f32 %v464, %v436
          %v467 = vlaneseq
          %v468 = vshrl.u32 %v467, 7
          %v469 = vsub.s32 1, %v468
          %v470 = vrot.slane %v375, %v469
          %v471 = vlaneseq
          %v472 = vshrl.u32 %v471, 7
          %v473 = vsub.s32 1, %v472
          %v474 = vrot.slane %v376, %v473
          %v475 = vadd.f32 %v470, %v465
          %v476 = vadd.f32 %v474, %v466
          %v477 = vlaneseq
          %v478 = vshrl.u32 %v477, 7
          %v479 = vsub.s32 5, %v478
          %v480 = vrot.slane %v375, %v479
          %v481 = vlaneseq
          %v482 = vshrl.u32 %v481, 7
          %v483 = vsub.s32 5, %v482
          %v484 = vrot.slane %v376, %v483
          %v485 = vmul.f32 %v480, %v435
          %v486 = vmul.f32 %v484, %v436
          %v487 = vlaneseq
          %v488 = vshrl.u32 %v487, 7
          %v489 = vsub.s32 2, %v488
          %v490 = vrot.slane %v375, %v489
          %v491 = vlaneseq
          %v492 = vshrl.u32 %v491, 7
          %v493 = vsub.s32 2, %v492
          %v494 = vrot.slane %v376, %v493
          %v495 = vadd.f32 %v490, %v485
          %v496 = vadd.f32 %v494, %v486
          %s497 = sld [smem:[#allocation2]]
          %v498 = vstv %s497
          %v499 = vmul.f32 %v455, %v498
          %v500 = vmul.f32 %v456, %v498
          %s501 = sld [smem:[#allocation2 + $0x80]]
          %v502 = vstv %s501
          %v503 = vmul.f32 %v475, %v502
          %v504 = vmul.f32 %v476, %v502
          %v505 = vadd.f32 %v499, %v503
          %v506 = vadd.f32 %v500, %v504
          %s507 = sld [smem:[#allocation2 + $0x100]]
          %v508 = vstv %s507
          %v509 = vmul.f32 %v495, %v508
          %v510 = vmul.f32 %v496, %v508
          %v511 = vadd.f32 %v505, %v509
          %v512 = vadd.f32 %v506, %v510
          %s513 = sld [smem:[#allocation5]]
          %v514 = vstv %s513
          %v515 = vadd.f32 %v511, %v514
          %v516 = vadd.f32 %v512, %v514
          %v517 = vmax.f32 %v515, 0.0
          %v518 = vmax.f32 %v516, 0.0
          %s519 = sld [smem:[#allocation7]]
          %v520 = vstv %s519
          %v521 = vmul.f32 %v517, %v520
          %v522 = vmul.f32 %v518, %v520
          %v523 = vadd.f32 %v521, 0.0
          %v524 = vadd.f32 %v522, 0.0
          %s525 = sld [smem:[#allocation7 + $0x1]]
          %v526 = vstv %s525
          %v527 = vmul.f32 %v517, %v526
          %v528 = vmul.f32 %v518, %v526
          %v529 = vadd.f32 %v527, 0.0
          %v530 = vadd.f32 %v528, 0.0
          %s531 = sld [smem:[#allocation7 + $0x2]]
          %v532 = vstv %s531
          %v533 = vmul.f32 %v517, %v532
          %v534 = vmul.f32 %v518, %v532
          %v535 = vadd.f32 %v533, 0.0
          %v536 = vadd.f32 %v534, 0.0
          %s537 = sld [smem:[#allocation7 + $0x3]]
          %v538 = vstv %s537
          %v539 = vmul.f32 %v517, %v538
          %v540 = vmul.f32 %v518, %v538
          %v541 = vadd.f32 %v539, 0.0
          %v542 = vadd.f32 %v540, 0.0
          %s543 = sld [smem:[#allocation2 + $0x1]]
          %v544 = vstv %s543
          %v545 = vmul.f32 %v455, %v544
          %v546 = vmul.f32 %v456, %v544
          %s547 = sld [smem:[#allocation2 + $0x81]]
          %v548 = vstv %s547
          %v549 = vmul.f32 %v475, %v548
          %v550 = vmul.f32 %v476, %v548
          %v551 = vadd.f32 %v545, %v549
          %v552 = vadd.f32 %v546, %v550
          %s553 = sld [smem:[#allocation2 + $0x101]]
          %v554 = vstv %s553
          %v555 = vmul.f32 %v495, %v554
          %v556 = vmul.f32 %v496, %v554
          %v557 = vadd.f32 %v551, %v555
          %v558 = vadd.f32 %v552, %v556
          %s559 = sld [smem:[#allocation5 + $0x1]]
          %v560 = vstv %s559
          %v561 = vadd.f32 %v557, %v560
          %v562 = vadd.f32 %v558, %v560
          %v563 = vmax.f32 %v561, 0.0
          %v564 = vmax.f32 %v562, 0.0
          %s565 = sld [smem:[#allocation7 + $0x80]]
          %v566 = vstv %s565
          %v567 = vmul.f32 %v563, %v566
          %v568 = vmul.f32 %v564, %v566
          %v569 = vadd.f32 %v523, %v567
          %v570 = vadd.f32 %v524, %v568
          %s571 = sld [smem:[#allocation7 + $0x81]]
          %v572 = vstv %s571
          %v573 = vmul.f32 %v563, %v572
          %v574 = vmul.f32 %v564, %v572
          %v575 = vadd.f32 %v529, %v573
          %v576 = vadd.f32 %v530, %v574
          %s577 = sld [smem:[#allocation7 + $0x82]]
          %v578 = vstv %s577
          %v579 = vmul.f32 %v563, %v578
          %v580 = vmul.f32 %v564, %v578
          %v581 = vadd.f32 %v535, %v579
          %v582 = vadd.f32 %v536, %v580
          %s583 = sld [smem:[#allocation7 + $0x83]]
          %v584 = vstv %s583
          %v585 = vmul.f32 %v563, %v584
          %v586 = vmul.f32 %v564, %v584
          %v587 = vadd.f32 %v541, %v585
          %v588 = vadd.f32 %v542, %v586
          %s589 = sld [smem:[#allocation2 + $0x2]]
          %v590 = vstv %s589
          %v591 = vmul.f32 %v455, %v590
          %v592 = vmul.f32 %v456, %v590
          %s593 = sld [smem:[#allocation2 + $0x82]]
          %v594 = vstv %s593
          %v595 = vmul.f32 %v475, %v594
          %v596 = vmul.f32 %v476, %v594
          %v597 = vadd.f32 %v591, %v595
          %v598 = vadd.f32 %v592, %v596
          %s599 = sld [smem:[#allocation2 + $0x102]]
          %v600 = vstv %s599
          %v601 = vmul.f32 %v495, %v600
          %v602 = vmul.f32 %v496, %v600
          %v603 = vadd.f32 %v597, %v601
          %v604 = vadd.f32 %v598, %v602
          %s605 = sld [smem:[#allocation5 + $0x2]]
          %v606 = vstv %s605
          %v607 = vadd.f32 %v603, %v606
          %v608 = vadd.f32 %v604, %v606
          %v609 = vmax.f32 %v607, 0.0
          %v610 = vmax.f32 %v608, 0.0
          %s611 = sld [smem:[#allocation7 + $0x100]]
          %v612 = vstv %s611
          %v613 = vmul.f32 %v609, %v612
          %v614 = vmul.f32 %v610, %v612
          %v615 = vadd.f32 %v569, %v613
          %v616 = vadd.f32 %v570, %v614
          %s617 = sld [smem:[#allocation7 + $0x101]]
          %v618 = vstv %s617
          %v619 = vmul.f32 %v609, %v618
          %v620 = vmul.f32 %v610, %v618
          %v621 = vadd.f32 %v575, %v619
          %v622 = vadd.f32 %v576, %v620
          %s623 = sld [smem:[#allocation7 + $0x102]]
          %v624 = vstv %s623
          %v625 = vmul.f32 %v609, %v624
          %v626 = vmul.f32 %v610, %v624
          %v627 = vadd.f32 %v581, %v625
          %v628 = vadd.f32 %v582, %v626
          %s629 = sld [smem:[#allocation7 + $0x103]]
          %v630 = vstv %s629
          %v631 = vmul.f32 %v609, %v630
          %v632 = vmul.f32 %v610, %v630
          %v633 = vadd.f32 %v587, %v631
          %v634 = vadd.f32 %v588, %v632
          %s635 = sld [smem:[#allocation2 + $0x3]]
          %v636 = vstv %s635
          %v637 = vmul.f32 %v455, %v636
          %v638 = vmul.f32 %v456, %v636
          %s639 = sld [smem:[#allocation2 + $0x83]]
          %v640 = vstv %s639
          %v641 = vmul.f32 %v475, %v640
          %v642 = vmul.f32 %v476, %v640
          %v643 = vadd.f32 %v637, %v641
          %v644 = vadd.f32 %v638, %v642
          %s645 = sld [smem:[#allocation2 + $0x103]]
          %v646 = vstv %s645
          %v647 = vmul.f32 %v495, %v646
          %v648 = vmul.f32 %v496, %v646
          %v649 = vadd.f32 %v643, %v647
          %v650 = vadd.f32 %v644, %v648
          %s651 = sld [smem:[#allocation5 + $0x3]]
          %v652 = vstv %s651
          %v653 = vadd.f32 %v649, %v652
          %v654 = vadd.f32 %v650, %v652
          %v655 = vmax.f32 %v653, 0.0
          %v656 = vmax.f32 %v654, 0.0
          %s657 = sld [smem:[#allocation7 + $0x180]]
          %v658 = vstv %s657
          %v659 = vmul.f32 %v655, %v658
          %v660 = vmul.f32 %v656, %v658
          %v661 = vadd.f32 %v615, %v659
          %v662 = vadd.f32 %v616, %v660
          %s663 = sld [smem:[#allocation7 + $0x181]]
          %v664 = vstv %s663
          %v665 = vmul.f32 %v655, %v664
          %v666 = vmul.f32 %v656, %v664
          %v667 = vadd.f32 %v621, %v665
          %v668 = vadd.f32 %v622, %v666
          %s669 = sld [smem:[#allocation7 + $0x182]]
          %v670 = vstv %s669
          %v671 = vmul.f32 %v655, %v670
          %v672 = vmul.f32 %v656, %v670
          %v673 = vadd.f32 %v627, %v671
          %v674 = vadd.f32 %v628, %v672
          %s675 = sld [smem:[#allocation7 + $0x183]]
          %v676 = vstv %s675
          %v677 = vmul.f32 %v655, %v676
          %v678 = vmul.f32 %v656, %v676
          %v679 = vadd.f32 %v633, %v677
          %v680 = vadd.f32 %v634, %v678
          %s681 = sld [smem:[#allocation2 + $0x4]]
          %v682 = vstv %s681
          %v683 = vmul.f32 %v455, %v682
          %v684 = vmul.f32 %v456, %v682
          %s685 = sld [smem:[#allocation2 + $0x84]]
          %v686 = vstv %s685
          %v687 = vmul.f32 %v475, %v686
          %v688 = vmul.f32 %v476, %v686
          %v689 = vadd.f32 %v683, %v687
          %v690 = vadd.f32 %v684, %v688
          %s691 = sld [smem:[#allocation2 + $0x104]]
          %v692 = vstv %s691
          %v693 = vmul.f32 %v495, %v692
          %v694 = vmul.f32 %v496, %v692
          %v695 = vadd.f32 %v689, %v693
          %v696 = vadd.f32 %v690, %v694
          %s697 = sld [smem:[#allocation5 + $0x4]]
          %v698 = vstv %s697
          %v699 = vadd.f32 %v695, %v698
          %v700 = vadd.f32 %v696, %v698
          %v701 = vmax.f32 %v699, 0.0
          %v702 = vmax.f32 %v700, 0.0
          %s703 = sld [smem:[#allocation7 + $0x200]]
          %v704 = vstv %s703
          %v705 = vmul.f32 %v701, %v704
          %v706 = vmul.f32 %v702, %v704
          %v707 = vadd.f32 %v661, %v705
          %v708 = vadd.f32 %v662, %v706
          %s709 = sld [smem:[#allocation7 + $0x201]]
          %v710 = vstv %s709
          %v711 = vmul.f32 %v701, %v710
          %v712 = vmul.f32 %v702, %v710
          %v713 = vadd.f32 %v667, %v711
          %v714 = vadd.f32 %v668, %v712
          %s715 = sld [smem:[#allocation7 + $0x202]]
          %v716 = vstv %s715
          %v717 = vmul.f32 %v701, %v716
          %v718 = vmul.f32 %v702, %v716
          %v719 = vadd.f32 %v673, %v717
          %v720 = vadd.f32 %v674, %v718
          %s721 = sld [smem:[#allocation7 + $0x203]]
          %v722 = vstv %s721
          %v723 = vmul.f32 %v701, %v722
          %v724 = vmul.f32 %v702, %v722
          %v725 = vadd.f32 %v679, %v723
          %v726 = vadd.f32 %v680, %v724
          %s727 = sld [smem:[#allocation2 + $0x5]]
          %v728 = vstv %s727
          %v729 = vmul.f32 %v455, %v728
          %v730 = vmul.f32 %v456, %v728
          %s731 = sld [smem:[#allocation2 + $0x85]]
          %v732 = vstv %s731
          %v733 = vmul.f32 %v475, %v732
          %v734 = vmul.f32 %v476, %v732
          %v735 = vadd.f32 %v729, %v733
          %v736 = vadd.f32 %v730, %v734
          %s737 = sld [smem:[#allocation2 + $0x105]]
          %v738 = vstv %s737
          %v739 = vmul.f32 %v495, %v738
          %v740 = vmul.f32 %v496, %v738
          %v741 = vadd.f32 %v735, %v739
          %v742 = vadd.f32 %v736, %v740
          %s743 = sld [smem:[#allocation5 + $0x5]]
          %v744 = vstv %s743
          %v745 = vadd.f32 %v741, %v744
          %v746 = vadd.f32 %v742, %v744
          %v747 = vmax.f32 %v745, 0.0
          %v748 = vmax.f32 %v746, 0.0
          %s749 = sld [smem:[#allocation7 + $0x280]]
          %v750 = vstv %s749
          %v751 = vmul.f32 %v747, %v750
          %v752 = vmul.f32 %v748, %v750
          %v753 = vadd.f32 %v707, %v751
          %v754 = vadd.f32 %v708, %v752
          %s755 = sld [smem:[#allocation7 + $0x281]]
          %v756 = vstv %s755
          %v757 = vmul.f32 %v747, %v756
          %v758 = vmul.f32 %v748, %v756
          %v759 = vadd.f32 %v713, %v757
          %v760 = vadd.f32 %v714, %v758
          %s761 = sld [smem:[#allocation7 + $0x282]]
          %v762 = vstv %s761
          %v763 = vmul.f32 %v747, %v762
          %v764 = vmul.f32 %v748, %v762
          %v765 = vadd.f32 %v719, %v763
          %v766 = vadd.f32 %v720, %v764
          %s767 = sld [smem:[#allocation7 + $0x283]]
          %v768 = vstv %s767
          %v769 = vmul.f32 %v747, %v768
          %v770 = vmul.f32 %v748, %v768
          %v771 = vadd.f32 %v725, %v769
          %v772 = vadd.f32 %v726, %v770
          %s773 = sld [smem:[#allocation2 + $0x6]]
          %v774 = vstv %s773
          %v775 = vmul.f32 %v455, %v774
          %v776 = vmul.f32 %v456, %v774
          %s777 = sld [smem:[#allocation2 + $0x86]]
          %v778 = vstv %s777
          %v779 = vmul.f32 %v475, %v778
          %v780 = vmul.f32 %v476, %v778
          %v781 = vadd.f32 %v775, %v779
          %v782 = vadd.f32 %v776, %v780
          %s783 = sld [smem:[#allocation2 + $0x106]]
          %v784 = vstv %s783
          %v785 = vmul.f32 %v495, %v784
          %v786 = vmul.f32 %v496, %v784
          %v787 = vadd.f32 %v781, %v785
          %v788 = vadd.f32 %v782, %v786
          %s789 = sld [smem:[#allocation5 + $0x6]]
          %v790 = vstv %s789
          %v791 = vadd.f32 %v787, %v790
          %v792 = vadd.f32 %v788, %v790
          %v793 = vmax.f32 %v791, 0.0
          %v794 = vmax.f32 %v792, 0.0
          %s795 = sld [smem:[#allocation7 + $0x300]]
          %v796 = vstv %s795
          %v797 = vmul.f32 %v793, %v796
          %v798 = vmul.f32 %v794, %v796
          %v799 = vadd.f32 %v753, %v797
          %v800 = vadd.f32 %v754, %v798
          %s801 = sld [smem:[#allocation7 + $0x301]]
          %v802 = vstv %s801
          %v803 = vmul.f32 %v793, %v802
          %v804 = vmul.f32 %v794, %v802
          %v805 = vadd.f32 %v759, %v803
          %v806 = vadd.f32 %v760, %v804
          %s807 = sld [smem:[#allocation7 + $0x302]]
          %v808 = vstv %s807
          %v809 = vmul.f32 %v793, %v808
          %v810 = vmul.f32 %v794, %v808
          %v811 = vadd.f32 %v765, %v809
          %v812 = vadd.f32 %v766, %v810
          %s813 = sld [smem:[#allocation7 + $0x303]]
          %v814 = vstv %s813
          %v815 = vmul.f32 %v793, %v814
          %v816 = vmul.f32 %v794, %v814
          %v817 = vadd.f32 %v771, %v815
          %v818 = vadd.f32 %v772, %v816
          %s819 = sld [smem:[#allocation2 + $0x7]]
          %v820 = vstv %s819
          %v821 = vmul.f32 %v455, %v820
          %v822 = vmul.f32 %v456, %v820
          %s823 = sld [smem:[#allocation2 + $0x87]]
          %v824 = vstv %s823
          %v825 = vmul.f32 %v475, %v824
          %v826 = vmul.f32 %v476, %v824
          %v827 = vadd.f32 %v821, %v825
          %v828 = vadd.f32 %v822, %v826
          %s829 = sld [smem:[#allocation2 + $0x107]]
          %v830 = vstv %s829
          %v831 = vmul.f32 %v495, %v830
          %v832 = vmul.f32 %v496, %v830
          %v833 = vadd.f32 %v827, %v831
          %v834 = vadd.f32 %v828, %v832
          %s835 = sld [smem:[#allocation5 + $0x7]]
          %v836 = vstv %s835
          %v837 = vadd.f32 %v833, %v836
          %v838 = vadd.f32 %v834, %v836
          %v839 = vmax.f32 %v837, 0.0
          %v840 = vmax.f32 %v838, 0.0
          %s841 = sld [smem:[#allocation7 + $0x380]]
          %v842 = vstv %s841
          %v843 = vmul.f32 %v839, %v842
          %v844 = vmul.f32 %v840, %v842
          %v845 = vadd.f32 %v799, %v843
          %v846 = vadd.f32 %v800, %v844
          %s847 = sld [smem:[#allocation7 + $0x381]]
          %v848 = vstv %s847
          %v849 = vmul.f32 %v839, %v848
          %v850 = vmul.f32 %v840, %v848
          %v851 = vadd.f32 %v805, %v849
          %v852 = vadd.f32 %v806, %v850
          %s853 = sld [smem:[#allocation7 + $0x382]]
          %v854 = vstv %s853
          %v855 = vmul.f32 %v839, %v854
          %v856 = vmul.f32 %v840, %v854
          %v857 = vadd.f32 %v811, %v855
          %v858 = vadd.f32 %v812, %v856
          %s859 = sld [smem:[#allocation7 + $0x383]]
          %v860 = vstv %s859
          %v861 = vmul.f32 %v839, %v860
          %v862 = vmul.f32 %v840, %v860
          %v863 = vadd.f32 %v817, %v861
          %v864 = vadd.f32 %v818, %v862
          %s865 = sld [smem:[#allocation2 + $0x8]]
          %v866 = vstv %s865
          %v867 = vmul.f32 %v455, %v866
          %v868 = vmul.f32 %v456, %v866
          %s869 = sld [smem:[#allocation2 + $0x88]]
          %v870 = vstv %s869
          %v871 = vmul.f32 %v475, %v870
          %v872 = vmul.f32 %v476, %v870
          %v873 = vadd.f32 %v867, %v871
          %v874 = vadd.f32 %v868, %v872
          %s875 = sld [smem:[#allocation2 + $0x108]]
          %v876 = vstv %s875
          %v877 = vmul.f32 %v495, %v876
          %v878 = vmul.f32 %v496, %v876
          %v879 = vadd.f32 %v873, %v877
          %v880 = vadd.f32 %v874, %v878
          %s881 = sld [smem:[#allocation5 + $0x8]]
          %v882 = vstv %s881
          %v883 = vadd.f32 %v879, %v882
          %v884 = vadd.f32 %v880, %v882
          %v885 = vmax.f32 %v883, 0.0
          %v886 = vmax.f32 %v884, 0.0
          %s887 = sld [smem:[#allocation7 + $0x400]]
          %v888 = vstv %s887
          %v889 = vmul.f32 %v885, %v888
          %v890 = vmul.f32 %v886, %v888
          %v891 = vadd.f32 %v845, %v889
          %v892 = vadd.f32 %v846, %v890
          %s893 = sld [smem:[#allocation7 + $0x401]]
          %v894 = vstv %s893
          %v895 = vmul.f32 %v885, %v894
          %v896 = vmul.f32 %v886, %v894
          %v897 = vadd.f32 %v851, %v895
          %v898 = vadd.f32 %v852, %v896
          %s899 = sld [smem:[#allocation7 + $0x402]]
          %v900 = vstv %s899
          %v901 = vmul.f32 %v885, %v900
          %v902 = vmul.f32 %v886, %v900
          %v903 = vadd.f32 %v857, %v901
          %v904 = vadd.f32 %v858, %v902
          %s905 = sld [smem:[#allocation7 + $0x403]]
          %v906 = vstv %s905
          %v907 = vmul.f32 %v885, %v906
          %v908 = vmul.f32 %v886, %v906
          %v909 = vadd.f32 %v863, %v907
          %v910 = vadd.f32 %v864, %v908
          %s911 = sld [smem:[#allocation2 + $0x9]]
          %v912 = vstv %s911
          %v913 = vmul.f32 %v455, %v912
          %v914 = vmul.f32 %v456, %v912
          %s915 = sld [smem:[#allocation2 + $0x89]]
          %v916 = vstv %s915
          %v917 = vmul.f32 %v475, %v916
          %v918 = vmul.f32 %v476, %v916
          %v919 = vadd.f32 %v913, %v917
          %v920 = vadd.f32 %v914, %v918
          %s921 = sld [smem:[#allocation2 + $0x109]]
          %v922 = vstv %s921
          %v923 = vmul.f32 %v495, %v922
          %v924 = vmul.f32 %v496, %v922
          %v925 = vadd.f32 %v919, %v923
          %v926 = vadd.f32 %v920, %v924
          %s927 = sld [smem:[#allocation5 + $0x9]]
          %v928 = vstv %s927
          %v929 = vadd.f32 %v925, %v928
          %v930 = vadd.f32 %v926, %v928
          %v931 = vmax.f32 %v929, 0.0
          %v932 = vmax.f32 %v930, 0.0
          %s933 = sld [smem:[#allocation7 + $0x480]]
          %v934 = vstv %s933
          %v935 = vmul.f32 %v931, %v934
          %v936 = vmul.f32 %v932, %v934
          %v937 = vadd.f32 %v891, %v935
          %v938 = vadd.f32 %v892, %v936
          %s939 = sld [smem:[#allocation7 + $0x481]]
          %v940 = vstv %s939
          %v941 = vmul.f32 %v931, %v940
          %v942 = vmul.f32 %v932, %v940
          %v943 = vadd.f32 %v897, %v941
          %v944 = vadd.f32 %v898, %v942
          %s945 = sld [smem:[#allocation7 + $0x482]]
          %v946 = vstv %s945
          %v947 = vmul.f32 %v931, %v946
          %v948 = vmul.f32 %v932, %v946
          %v949 = vadd.f32 %v903, %v947
          %v950 = vadd.f32 %v904, %v948
          %s951 = sld [smem:[#allocation7 + $0x483]]
          %v952 = vstv %s951
          %v953 = vmul.f32 %v931, %v952
          %v954 = vmul.f32 %v932, %v952
          %v955 = vadd.f32 %v909, %v953
          %v956 = vadd.f32 %v910, %v954
          %s957 = sld [smem:[#allocation2 + $0xa]]
          %v958 = vstv %s957
          %v959 = vmul.f32 %v455, %v958
          %v960 = vmul.f32 %v456, %v958
          %s961 = sld [smem:[#allocation2 + $0x8a]]
          %v962 = vstv %s961
          %v963 = vmul.f32 %v475, %v962
          %v964 = vmul.f32 %v476, %v962
          %v965 = vadd.f32 %v959, %v963
          %v966 = vadd.f32 %v960, %v964
          %s967 = sld [smem:[#allocation2 + $0x10a]]
          %v968 = vstv %s967
          %v969 = vmul.f32 %v495, %v968
          %v970 = vmul.f32 %v496, %v968
          %v971 = vadd.f32 %v965, %v969
          %v972 = vadd.f32 %v966, %v970
          %s973 = sld [smem:[#allocation5 + $0xa]]
          %v974 = vstv %s973
          %v975 = vadd.f32 %v971, %v974
          %v976 = vadd.f32 %v972, %v974
          %v977 = vmax.f32 %v975, 0.0
          %v978 = vmax.f32 %v976, 0.0
          %s979 = sld [smem:[#allocation7 + $0x500]]
          %v980 = vstv %s979
          %v981 = vmul.f32 %v977, %v980
          %v982 = vmul.f32 %v978, %v980
          %v983 = vadd.f32 %v937, %v981
          %v984 = vadd.f32 %v938, %v982
          %s985 = sld [smem:[#allocation7 + $0x501]]
          %v986 = vstv %s985
          %v987 = vmul.f32 %v977, %v986
          %v988 = vmul.f32 %v978, %v986
          %v989 = vadd.f32 %v943, %v987
          %v990 = vadd.f32 %v944, %v988
          %s991 = sld [smem:[#allocation7 + $0x502]]
          %v992 = vstv %s991
          %v993 = vmul.f32 %v977, %v992
          %v994 = vmul.f32 %v978, %v992
          %v995 = vadd.f32 %v949, %v993
          %v996 = vadd.f32 %v950, %v994
          %s997 = sld [smem:[#allocation7 + $0x503]]
          %v998 = vstv %s997
          %v999 = vmul.f32 %v977, %v998
          %v1000 = vmul.f32 %v978, %v998
          %v1001 = vadd.f32 %v955, %v999
          %v1002 = vadd.f32 %v956, %v1000
          %s1003 = sld [smem:[#allocation2 + $0xb]]
          %v1004 = vstv %s1003
          %v1005 = vmul.f32 %v455, %v1004
          %v1006 = vmul.f32 %v456, %v1004
          %s1007 = sld [smem:[#allocation2 + $0x8b]]
          %v1008 = vstv %s1007
          %v1009 = vmul.f32 %v475, %v1008
          %v1010 = vmul.f32 %v476, %v1008
          %v1011 = vadd.f32 %v1005, %v1009
          %v1012 = vadd.f32 %v1006, %v1010
          %s1013 = sld [smem:[#allocation2 + $0x10b]]
          %v1014 = vstv %s1013
          %v1015 = vmul.f32 %v495, %v1014
          %v1016 = vmul.f32 %v496, %v1014
          %v1017 = vadd.f32 %v1011, %v1015
          %v1018 = vadd.f32 %v1012, %v1016
          %s1019 = sld [smem:[#allocation5 + $0xb]]
          %v1020 = vstv %s1019
          %v1021 = vadd.f32 %v1017, %v1020
          %v1022 = vadd.f32 %v1018, %v1020
          %v1023 = vmax.f32 %v1021, 0.0
          %v1024 = vmax.f32 %v1022, 0.0
          %s1025 = sld [smem:[#allocation7 + $0x580]]
          %v1026 = vstv %s1025
          %v1027 = vmul.f32 %v1023, %v1026
          %v1028 = vmul.f32 %v1024, %v1026
          %v1029 = vadd.f32 %v983, %v1027
          %v1030 = vadd.f32 %v984, %v1028
          %s1031 = sld [smem:[#allocation7 + $0x581]]
          %v1032 = vstv %s1031
          %v1033 = vmul.f32 %v1023, %v1032
          %v1034 = vmul.f32 %v1024, %v1032
          %v1035 = vadd.f32 %v989, %v1033
          %v1036 = vadd.f32 %v990, %v1034
          %s1037 = sld [smem:[#allocation7 + $0x582]]
          %v1038 = vstv %s1037
          %v1039 = vmul.f32 %v1023, %v1038
          %v1040 = vmul.f32 %v1024, %v1038
          %v1041 = vadd.f32 %v995, %v1039
          %v1042 = vadd.f32 %v996, %v1040
          %s1043 = sld [smem:[#allocation7 + $0x583]]
          %v1044 = vstv %s1043
          %v1045 = vmul.f32 %v1023, %v1044
          %v1046 = vmul.f32 %v1024, %v1044
          %v1047 = vadd.f32 %v1001, %v1045
          %v1048 = vadd.f32 %v1002, %v1046
          %s1049 = sld [smem:[#allocation2 + $0xc]]
          %v1050 = vstv %s1049
          %v1051 = vmul.f32 %v455, %v1050
          %v1052 = vmul.f32 %v456, %v1050
          %s1053 = sld [smem:[#allocation2 + $0x8c]]
          %v1054 = vstv %s1053
          %v1055 = vmul.f32 %v475, %v1054
          %v1056 = vmul.f32 %v476, %v1054
          %v1057 = vadd.f32 %v1051, %v1055
          %v1058 = vadd.f32 %v1052, %v1056
          %s1059 = sld [smem:[#allocation2 + $0x10c]]
          %v1060 = vstv %s1059
          %v1061 = vmul.f32 %v495, %v1060
          %v1062 = vmul.f32 %v496, %v1060
          %v1063 = vadd.f32 %v1057, %v1061
          %v1064 = vadd.f32 %v1058, %v1062
          %s1065 = sld [smem:[#allocation5 + $0xc]]
          %v1066 = vstv %s1065
          %v1067 = vadd.f32 %v1063, %v1066
          %v1068 = vadd.f32 %v1064, %v1066
          %v1069 = vmax.f32 %v1067, 0.0
          %v1070 = vmax.f32 %v1068, 0.0
          %s1071 = sld [smem:[#allocation7 + $0x600]]
          %v1072 = vstv %s1071
          %v1073 = vmul.f32 %v1069, %v1072
          %v1074 = vmul.f32 %v1070, %v1072
          %v1075 = vadd.f32 %v1029, %v1073
          %v1076 = vadd.f32 %v1030, %v1074
          %s1077 = sld [smem:[#allocation7 + $0x601]]
          %v1078 = vstv %s1077
          %v1079 = vmul.f32 %v1069, %v1078
          %v1080 = vmul.f32 %v1070, %v1078
          %v1081 = vadd.f32 %v1035, %v1079
          %v1082 = vadd.f32 %v1036, %v1080
          %s1083 = sld [smem:[#allocation7 + $0x602]]
          %v1084 = vstv %s1083
          %v1085 = vmul.f32 %v1069, %v1084
          %v1086 = vmul.f32 %v1070, %v1084
          %v1087 = vadd.f32 %v1041, %v1085
          %v1088 = vadd.f32 %v1042, %v1086
          %s1089 = sld [smem:[#allocation7 + $0x603]]
          %v1090 = vstv %s1089
          %v1091 = vmul.f32 %v1069, %v1090
          %v1092 = vmul.f32 %v1070, %v1090
          %v1093 = vadd.f32 %v1047, %v1091
          %v1094 = vadd.f32 %v1048, %v1092
          %s1095 = sld [smem:[#allocation2 + $0xd]]
          %v1096 = vstv %s1095
          %v1097 = vmul.f32 %v455, %v1096
          %v1098 = vmul.f32 %v456, %v1096
          %s1099 = sld [smem:[#allocation2 + $0x8d]]
          %v1100 = vstv %s1099
          %v1101 = vmul.f32 %v475, %v1100
          %v1102 = vmul.f32 %v476, %v1100
          %v1103 = vadd.f32 %v1097, %v1101
          %v1104 = vadd.f32 %v1098, %v1102
          %s1105 = sld [smem:[#allocation2 + $0x10d]]
          %v1106 = vstv %s1105
          %v1107 = vmul.f32 %v495, %v1106
          %v1108 = vmul.f32 %v496, %v1106
          %v1109 = vadd.f32 %v1103, %v1107
          %v1110 = vadd.f32 %v1104, %v1108
          %s1111 = sld [smem:[#allocation5 + $0xd]]
          %v1112 = vstv %s1111
          %v1113 = vadd.f32 %v1109, %v1112
          %v1114 = vadd.f32 %v1110, %v1112
          %v1115 = vmax.f32 %v1113, 0.0
          %v1116 = vmax.f32 %v1114, 0.0
          %s1117 = sld [smem:[#allocation7 + $0x680]]
          %v1118 = vstv %s1117
          %v1119 = vmul.f32 %v1115, %v1118
          %v1120 = vmul.f32 %v1116, %v1118
          %v1121 = vadd.f32 %v1075, %v1119
          %v1122 = vadd.f32 %v1076, %v1120
          %s1123 = sld [smem:[#allocation7 + $0x681]]
          %v1124 = vstv %s1123
          %v1125 = vmul.f32 %v1115, %v1124
          %v1126 = vmul.f32 %v1116, %v1124
          %v1127 = vadd.f32 %v1081, %v1125
          %v1128 = vadd.f32 %v1082, %v1126
          %s1129 = sld [smem:[#allocation7 + $0x682]]
          %v1130 = vstv %s1129
          %v1131 = vmul.f32 %v1115, %v1130
          %v1132 = vmul.f32 %v1116, %v1130
          %v1133 = vadd.f32 %v1087, %v1131
          %v1134 = vadd.f32 %v1088, %v1132
          %s1135 = sld [smem:[#allocation7 + $0x683]]
          %v1136 = vstv %s1135
          %v1137 = vmul.f32 %v1115, %v1136
          %v1138 = vmul.f32 %v1116, %v1136
          %v1139 = vadd.f32 %v1093, %v1137
          %v1140 = vadd.f32 %v1094, %v1138
          %s1141 = sld [smem:[#allocation2 + $0xe]]
          %v1142 = vstv %s1141
          %v1143 = vmul.f32 %v455, %v1142
          %v1144 = vmul.f32 %v456, %v1142
          %s1145 = sld [smem:[#allocation2 + $0x8e]]
          %v1146 = vstv %s1145
          %v1147 = vmul.f32 %v475, %v1146
          %v1148 = vmul.f32 %v476, %v1146
          %v1149 = vadd.f32 %v1143, %v1147
          %v1150 = vadd.f32 %v1144, %v1148
          %s1151 = sld [smem:[#allocation2 + $0x10e]]
          %v1152 = vstv %s1151
          %v1153 = vmul.f32 %v495, %v1152
          %v1154 = vmul.f32 %v496, %v1152
          %v1155 = vadd.f32 %v1149, %v1153
          %v1156 = vadd.f32 %v1150, %v1154
          %s1157 = sld [smem:[#allocation5 + $0xe]]
          %v1158 = vstv %s1157
          %v1159 = vadd.f32 %v1155, %v1158
          %v1160 = vadd.f32 %v1156, %v1158
          %v1161 = vmax.f32 %v1159, 0.0
          %v1162 = vmax.f32 %v1160, 0.0
          %s1163 = sld [smem:[#allocation7 + $0x700]]
          %v1164 = vstv %s1163
          %v1165 = vmul.f32 %v1161, %v1164
          %v1166 = vmul.f32 %v1162, %v1164
          %v1167 = vadd.f32 %v1121, %v1165
          %v1168 = vadd.f32 %v1122, %v1166
          %s1169 = sld [smem:[#allocation7 + $0x701]]
          %v1170 = vstv %s1169
          %v1171 = vmul.f32 %v1161, %v1170
          %v1172 = vmul.f32 %v1162, %v1170
          %v1173 = vadd.f32 %v1127, %v1171
          %v1174 = vadd.f32 %v1128, %v1172
          %s1175 = sld [smem:[#allocation7 + $0x702]]
          %v1176 = vstv %s1175
          %v1177 = vmul.f32 %v1161, %v1176
          %v1178 = vmul.f32 %v1162, %v1176
          %v1179 = vadd.f32 %v1133, %v1177
          %v1180 = vadd.f32 %v1134, %v1178
          %s1181 = sld [smem:[#allocation7 + $0x703]]
          %v1182 = vstv %s1181
          %v1183 = vmul.f32 %v1161, %v1182
          %v1184 = vmul.f32 %v1162, %v1182
          %v1185 = vadd.f32 %v1139, %v1183
          %v1186 = vadd.f32 %v1140, %v1184
          %s1187 = sld [smem:[#allocation2 + $0xf]]
          %v1188 = vstv %s1187
          %v1189 = vmul.f32 %v455, %v1188
          %v1190 = vmul.f32 %v456, %v1188
          %s1191 = sld [smem:[#allocation2 + $0x8f]]
          %v1192 = vstv %s1191
          %v1193 = vmul.f32 %v475, %v1192
          %v1194 = vmul.f32 %v476, %v1192
          %v1195 = vadd.f32 %v1189, %v1193
          %v1196 = vadd.f32 %v1190, %v1194
          %s1197 = sld [smem:[#allocation2 + $0x10f]]
          %v1198 = vstv %s1197
          %v1199 = vmul.f32 %v495, %v1198
          %v1200 = vmul.f32 %v496, %v1198
          %v1201 = vadd.f32 %v1195, %v1199
          %v1202 = vadd.f32 %v1196, %v1200
          %s1203 = sld [smem:[#allocation5 + $0xf]]
          %v1204 = vstv %s1203
          %v1205 = vadd.f32 %v1201, %v1204
          %v1206 = vadd.f32 %v1202, %v1204
          %v1207 = vmax.f32 %v1205, 0.0
          %v1208 = vmax.f32 %v1206, 0.0
          %s1209 = sld [smem:[#allocation7 + $0x780]]
          %v1210 = vstv %s1209
          %v1211 = vmul.f32 %v1207, %v1210
          %v1212 = vmul.f32 %v1208, %v1210
          %v1213 = vadd.f32 %v1167, %v1211
          %v1214 = vadd.f32 %v1168, %v1212
          %s1215 = sld [smem:[#allocation7 + $0x781]]
          %v1216 = vstv %s1215
          %v1217 = vmul.f32 %v1207, %v1216
          %v1218 = vmul.f32 %v1208, %v1216
          %v1219 = vadd.f32 %v1173, %v1217
          %v1220 = vadd.f32 %v1174, %v1218
          %s1221 = sld [smem:[#allocation7 + $0x782]]
          %v1222 = vstv %s1221
          %v1223 = vmul.f32 %v1207, %v1222
          %v1224 = vmul.f32 %v1208, %v1222
          %v1225 = vadd.f32 %v1179, %v1223
          %v1226 = vadd.f32 %v1180, %v1224
          %s1227 = sld [smem:[#allocation7 + $0x783]]
          %v1228 = vstv %s1227
          %v1229 = vmul.f32 %v1207, %v1228
          %v1230 = vmul.f32 %v1208, %v1228
          %v1231 = vadd.f32 %v1185, %v1229
          %v1232 = vadd.f32 %v1186, %v1230
          %s1233 = sld [smem:[#allocation2 + $0x10]]
          %v1234 = vstv %s1233
          %v1235 = vmul.f32 %v455, %v1234
          %v1236 = vmul.f32 %v456, %v1234
          %s1237 = sld [smem:[#allocation2 + $0x90]]
          %v1238 = vstv %s1237
          %v1239 = vmul.f32 %v475, %v1238
          %v1240 = vmul.f32 %v476, %v1238
          %v1241 = vadd.f32 %v1235, %v1239
          %v1242 = vadd.f32 %v1236, %v1240
          %s1243 = sld [smem:[#allocation2 + $0x110]]
          %v1244 = vstv %s1243
          %v1245 = vmul.f32 %v495, %v1244
          %v1246 = vmul.f32 %v496, %v1244
          %v1247 = vadd.f32 %v1241, %v1245
          %v1248 = vadd.f32 %v1242, %v1246
          %s1249 = sld [smem:[#allocation5 + $0x10]]
          %v1250 = vstv %s1249
          %v1251 = vadd.f32 %v1247, %v1250
          %v1252 = vadd.f32 %v1248, %v1250
          %v1253 = vmax.f32 %v1251, 0.0
          %v1254 = vmax.f32 %v1252, 0.0
          %s1255 = sld [smem:[#allocation7 + $0x800]]
          %v1256 = vstv %s1255
          %v1257 = vmul.f32 %v1253, %v1256
          %v1258 = vmul.f32 %v1254, %v1256
          %v1259 = vadd.f32 %v1213, %v1257
          %v1260 = vadd.f32 %v1214, %v1258
          %s1261 = sld [smem:[#allocation7 + $0x801]]
          %v1262 = vstv %s1261
          %v1263 = vmul.f32 %v1253, %v1262
          %v1264 = vmul.f32 %v1254, %v1262
          %v1265 = vadd.f32 %v1219, %v1263
          %v1266 = vadd.f32 %v1220, %v1264
          %s1267 = sld [smem:[#allocation7 + $0x802]]
          %v1268 = vstv %s1267
          %v1269 = vmul.f32 %v1253, %v1268
          %v1270 = vmul.f32 %v1254, %v1268
          %v1271 = vadd.f32 %v1225, %v1269
          %v1272 = vadd.f32 %v1226, %v1270
          %s1273 = sld [smem:[#allocation7 + $0x803]]
          %v1274 = vstv %s1273
          %v1275 = vmul.f32 %v1253, %v1274
          %v1276 = vmul.f32 %v1254, %v1274
          %v1277 = vadd.f32 %v1231, %v1275
          %v1278 = vadd.f32 %v1232, %v1276
          %s1279 = sld [smem:[#allocation2 + $0x11]]
          %v1280 = vstv %s1279
          %v1281 = vmul.f32 %v455, %v1280
          %v1282 = vmul.f32 %v456, %v1280
          %s1283 = sld [smem:[#allocation2 + $0x91]]
          %v1284 = vstv %s1283
          %v1285 = vmul.f32 %v475, %v1284
          %v1286 = vmul.f32 %v476, %v1284
          %v1287 = vadd.f32 %v1281, %v1285
          %v1288 = vadd.f32 %v1282, %v1286
          %s1289 = sld [smem:[#allocation2 + $0x111]]
          %v1290 = vstv %s1289
          %v1291 = vmul.f32 %v495, %v1290
          %v1292 = vmul.f32 %v496, %v1290
          %v1293 = vadd.f32 %v1287, %v1291
          %v1294 = vadd.f32 %v1288, %v1292
          %s1295 = sld [smem:[#allocation5 + $0x11]]
          %v1296 = vstv %s1295
          %v1297 = vadd.f32 %v1293, %v1296
          %v1298 = vadd.f32 %v1294, %v1296
          %v1299 = vmax.f32 %v1297, 0.0
          %v1300 = vmax.f32 %v1298, 0.0
          %s1301 = sld [smem:[#allocation7 + $0x880]]
          %v1302 = vstv %s1301
          %v1303 = vmul.f32 %v1299, %v1302
          %v1304 = vmul.f32 %v1300, %v1302
          %v1305 = vadd.f32 %v1259, %v1303
          %v1306 = vadd.f32 %v1260, %v1304
          %s1307 = sld [smem:[#allocation7 + $0x881]]
          %v1308 = vstv %s1307
          %v1309 = vmul.f32 %v1299, %v1308
          %v1310 = vmul.f32 %v1300, %v1308
          %v1311 = vadd.f32 %v1265, %v1309
          %v1312 = vadd.f32 %v1266, %v1310
          %s1313 = sld [smem:[#allocation7 + $0x882]]
          %v1314 = vstv %s1313
          %v1315 = vmul.f32 %v1299, %v1314
          %v1316 = vmul.f32 %v1300, %v1314
          %v1317 = vadd.f32 %v1271, %v1315
          %v1318 = vadd.f32 %v1272, %v1316
          %s1319 = sld [smem:[#allocation7 + $0x883]]
          %v1320 = vstv %s1319
          %v1321 = vmul.f32 %v1299, %v1320
          %v1322 = vmul.f32 %v1300, %v1320
          %v1323 = vadd.f32 %v1277, %v1321
          %v1324 = vadd.f32 %v1278, %v1322
          %s1325 = sld [smem:[#allocation2 + $0x12]]
          %v1326 = vstv %s1325
          %v1327 = vmul.f32 %v455, %v1326
          %v1328 = vmul.f32 %v456, %v1326
          %s1329 = sld [smem:[#allocation2 + $0x92]]
          %v1330 = vstv %s1329
          %v1331 = vmul.f32 %v475, %v1330
          %v1332 = vmul.f32 %v476, %v1330
          %v1333 = vadd.f32 %v1327, %v1331
          %v1334 = vadd.f32 %v1328, %v1332
          %s1335 = sld [smem:[#allocation2 + $0x112]]
          %v1336 = vstv %s1335
          %v1337 = vmul.f32 %v495, %v1336
          %v1338 = vmul.f32 %v496, %v1336
          %v1339 = vadd.f32 %v1333, %v1337
          %v1340 = vadd.f32 %v1334, %v1338
          %s1341 = sld [smem:[#allocation5 + $0x12]]
          %v1342 = vstv %s1341
          %v1343 = vadd.f32 %v1339, %v1342
          %v1344 = vadd.f32 %v1340, %v1342
          %v1345 = vmax.f32 %v1343, 0.0
          %v1346 = vmax.f32 %v1344, 0.0
          %s1347 = sld [smem:[#allocation7 + $0x900]]
          %v1348 = vstv %s1347
          %v1349 = vmul.f32 %v1345, %v1348
          %v1350 = vmul.f32 %v1346, %v1348
          %v1351 = vadd.f32 %v1305, %v1349
          %v1352 = vadd.f32 %v1306, %v1350
          %s1353 = sld [smem:[#allocation7 + $0x901]]
          %v1354 = vstv %s1353
          %v1355 = vmul.f32 %v1345, %v1354
          %v1356 = vmul.f32 %v1346, %v1354
          %v1357 = vadd.f32 %v1311, %v1355
          %v1358 = vadd.f32 %v1312, %v1356
          %s1359 = sld [smem:[#allocation7 + $0x902]]
          %v1360 = vstv %s1359
          %v1361 = vmul.f32 %v1345, %v1360
          %v1362 = vmul.f32 %v1346, %v1360
          %v1363 = vadd.f32 %v1317, %v1361
          %v1364 = vadd.f32 %v1318, %v1362
          %s1365 = sld [smem:[#allocation7 + $0x903]]
          %v1366 = vstv %s1365
          %v1367 = vmul.f32 %v1345, %v1366
          %v1368 = vmul.f32 %v1346, %v1366
          %v1369 = vadd.f32 %v1323, %v1367
          %v1370 = vadd.f32 %v1324, %v1368
          %s1371 = sld [smem:[#allocation2 + $0x13]]
          %v1372 = vstv %s1371
          %v1373 = vmul.f32 %v455, %v1372
          %v1374 = vmul.f32 %v456, %v1372
          %s1375 = sld [smem:[#allocation2 + $0x93]]
          %v1376 = vstv %s1375
          %v1377 = vmul.f32 %v475, %v1376
          %v1378 = vmul.f32 %v476, %v1376
          %v1379 = vadd.f32 %v1373, %v1377
          %v1380 = vadd.f32 %v1374, %v1378
          %s1381 = sld [smem:[#allocation2 + $0x113]]
          %v1382 = vstv %s1381
          %v1383 = vmul.f32 %v495, %v1382
          %v1384 = vmul.f32 %v496, %v1382
          %v1385 = vadd.f32 %v1379, %v1383
          %v1386 = vadd.f32 %v1380, %v1384
          %s1387 = sld [smem:[#allocation5 + $0x13]]
          %v1388 = vstv %s1387
          %v1389 = vadd.f32 %v1385, %v1388
          %v1390 = vadd.f32 %v1386, %v1388
          %v1391 = vmax.f32 %v1389, 0.0
          %v1392 = vmax.f32 %v1390, 0.0
          %s1393 = sld [smem:[#allocation7 + $0x980]]
          %v1394 = vstv %s1393
          %v1395 = vmul.f32 %v1391, %v1394
          %v1396 = vmul.f32 %v1392, %v1394
          %v1397 = vadd.f32 %v1351, %v1395
          %v1398 = vadd.f32 %v1352, %v1396
          %s1399 = sld [smem:[#allocation7 + $0x981]]
          %v1400 = vstv %s1399
          %v1401 = vmul.f32 %v1391, %v1400
          %v1402 = vmul.f32 %v1392, %v1400
          %v1403 = vadd.f32 %v1357, %v1401
          %v1404 = vadd.f32 %v1358, %v1402
          %s1405 = sld [smem:[#allocation7 + $0x982]]
          %v1406 = vstv %s1405
          %v1407 = vmul.f32 %v1391, %v1406
          %v1408 = vmul.f32 %v1392, %v1406
          %v1409 = vadd.f32 %v1363, %v1407
          %v1410 = vadd.f32 %v1364, %v1408
          %s1411 = sld [smem:[#allocation7 + $0x983]]
          %v1412 = vstv %s1411
          %v1413 = vmul.f32 %v1391, %v1412
          %v1414 = vmul.f32 %v1392, %v1412
          %v1415 = vadd.f32 %v1369, %v1413
          %v1416 = vadd.f32 %v1370, %v1414
          %s1417 = sld [smem:[#allocation2 + $0x14]]
          %v1418 = vstv %s1417
          %v1419 = vmul.f32 %v455, %v1418
          %v1420 = vmul.f32 %v456, %v1418
          %s1421 = sld [smem:[#allocation2 + $0x94]]
          %v1422 = vstv %s1421
          %v1423 = vmul.f32 %v475, %v1422
          %v1424 = vmul.f32 %v476, %v1422
          %v1425 = vadd.f32 %v1419, %v1423
          %v1426 = vadd.f32 %v1420, %v1424
          %s1427 = sld [smem:[#allocation2 + $0x114]]
          %v1428 = vstv %s1427
          %v1429 = vmul.f32 %v495, %v1428
          %v1430 = vmul.f32 %v496, %v1428
          %v1431 = vadd.f32 %v1425, %v1429
          %v1432 = vadd.f32 %v1426, %v1430
          %s1433 = sld [smem:[#allocation5 + $0x14]]
          %v1434 = vstv %s1433
          %v1435 = vadd.f32 %v1431, %v1434
          %v1436 = vadd.f32 %v1432, %v1434
          %v1437 = vmax.f32 %v1435, 0.0
          %v1438 = vmax.f32 %v1436, 0.0
          %s1439 = sld [smem:[#allocation7 + $0xa00]]
          %v1440 = vstv %s1439
          %v1441 = vmul.f32 %v1437, %v1440
          %v1442 = vmul.f32 %v1438, %v1440
          %v1443 = vadd.f32 %v1397, %v1441
          %v1444 = vadd.f32 %v1398, %v1442
          %s1445 = sld [smem:[#allocation7 + $0xa01]]
          %v1446 = vstv %s1445
          %v1447 = vmul.f32 %v1437, %v1446
          %v1448 = vmul.f32 %v1438, %v1446
          %v1449 = vadd.f32 %v1403, %v1447
          %v1450 = vadd.f32 %v1404, %v1448
          %s1451 = sld [smem:[#allocation7 + $0xa02]]
          %v1452 = vstv %s1451
          %v1453 = vmul.f32 %v1437, %v1452
          %v1454 = vmul.f32 %v1438, %v1452
          %v1455 = vadd.f32 %v1409, %v1453
          %v1456 = vadd.f32 %v1410, %v1454
          %s1457 = sld [smem:[#allocation7 + $0xa03]]
          %v1458 = vstv %s1457
          %v1459 = vmul.f32 %v1437, %v1458
          %v1460 = vmul.f32 %v1438, %v1458
          %v1461 = vadd.f32 %v1415, %v1459
          %v1462 = vadd.f32 %v1416, %v1460
          %s1463 = sld [smem:[#allocation2 + $0x15]]
          %v1464 = vstv %s1463
          %v1465 = vmul.f32 %v455, %v1464
          %v1466 = vmul.f32 %v456, %v1464
          %s1467 = sld [smem:[#allocation2 + $0x95]]
          %v1468 = vstv %s1467
          %v1469 = vmul.f32 %v475, %v1468
          %v1470 = vmul.f32 %v476, %v1468
          %v1471 = vadd.f32 %v1465, %v1469
          %v1472 = vadd.f32 %v1466, %v1470
          %s1473 = sld [smem:[#allocation2 + $0x115]]
          %v1474 = vstv %s1473
          %v1475 = vmul.f32 %v495, %v1474
          %v1476 = vmul.f32 %v496, %v1474
          %v1477 = vadd.f32 %v1471, %v1475
          %v1478 = vadd.f32 %v1472, %v1476
          %s1479 = sld [smem:[#allocation5 + $0x15]]
          %v1480 = vstv %s1479
          %v1481 = vadd.f32 %v1477, %v1480
          %v1482 = vadd.f32 %v1478, %v1480
          %v1483 = vmax.f32 %v1481, 0.0
          %v1484 = vmax.f32 %v1482, 0.0
          %s1485 = sld [smem:[#allocation7 + $0xa80]]
          %v1486 = vstv %s1485
          %v1487 = vmul.f32 %v1483, %v1486
          %v1488 = vmul.f32 %v1484, %v1486
          %v1489 = vadd.f32 %v1443, %v1487
          %v1490 = vadd.f32 %v1444, %v1488
          %s1491 = sld [smem:[#allocation7 + $0xa81]]
          %v1492 = vstv %s1491
          %v1493 = vmul.f32 %v1483, %v1492
          %v1494 = vmul.f32 %v1484, %v1492
          %v1495 = vadd.f32 %v1449, %v1493
          %v1496 = vadd.f32 %v1450, %v1494
          %s1497 = sld [smem:[#allocation7 + $0xa82]]
          %v1498 = vstv %s1497
          %v1499 = vmul.f32 %v1483, %v1498
          %v1500 = vmul.f32 %v1484, %v1498
          %v1501 = vadd.f32 %v1455, %v1499
          %v1502 = vadd.f32 %v1456, %v1500
          %s1503 = sld [smem:[#allocation7 + $0xa83]]
          %v1504 = vstv %s1503
          %v1505 = vmul.f32 %v1483, %v1504
          %v1506 = vmul.f32 %v1484, %v1504
          %v1507 = vadd.f32 %v1461, %v1505
          %v1508 = vadd.f32 %v1462, %v1506
          %s1509 = sld [smem:[#allocation2 + $0x16]]
          %v1510 = vstv %s1509
          %v1511 = vmul.f32 %v455, %v1510
          %v1512 = vmul.f32 %v456, %v1510
          %s1513 = sld [smem:[#allocation2 + $0x96]]
          %v1514 = vstv %s1513
          %v1515 = vmul.f32 %v475, %v1514
          %v1516 = vmul.f32 %v476, %v1514
          %v1517 = vadd.f32 %v1511, %v1515
          %v1518 = vadd.f32 %v1512, %v1516
          %s1519 = sld [smem:[#allocation2 + $0x116]]
          %v1520 = vstv %s1519
          %v1521 = vmul.f32 %v495, %v1520
          %v1522 = vmul.f32 %v496, %v1520
          %v1523 = vadd.f32 %v1517, %v1521
          %v1524 = vadd.f32 %v1518, %v1522
          %s1525 = sld [smem:[#allocation5 + $0x16]]
          %v1526 = vstv %s1525
          %v1527 = vadd.f32 %v1523, %v1526
          %v1528 = vadd.f32 %v1524, %v1526
          %v1529 = vmax.f32 %v1527, 0.0
          %v1530 = vmax.f32 %v1528, 0.0
          %s1531 = sld [smem:[#allocation7 + $0xb00]]
          %v1532 = vstv %s1531
          %v1533 = vmul.f32 %v1529, %v1532
          %v1534 = vmul.f32 %v1530, %v1532
          %v1535 = vadd.f32 %v1489, %v1533
          %v1536 = vadd.f32 %v1490, %v1534
          %s1537 = sld [smem:[#allocation7 + $0xb01]]
          %v1538 = vstv %s1537
          %v1539 = vmul.f32 %v1529, %v1538
          %v1540 = vmul.f32 %v1530, %v1538
          %v1541 = vadd.f32 %v1495, %v1539
          %v1542 = vadd.f32 %v1496, %v1540
          %s1543 = sld [smem:[#allocation7 + $0xb02]]
          %v1544 = vstv %s1543
          %v1545 = vmul.f32 %v1529, %v1544
          %v1546 = vmul.f32 %v1530, %v1544
          %v1547 = vadd.f32 %v1501, %v1545
          %v1548 = vadd.f32 %v1502, %v1546
          %s1549 = sld [smem:[#allocation7 + $0xb03]]
          %v1550 = vstv %s1549
          %v1551 = vmul.f32 %v1529, %v1550
          %v1552 = vmul.f32 %v1530, %v1550
          %v1553 = vadd.f32 %v1507, %v1551
          %v1554 = vadd.f32 %v1508, %v1552
          %s1555 = sld [smem:[#allocation2 + $0x17]]
          %v1556 = vstv %s1555
          %v1557 = vmul.f32 %v455, %v1556
          %v1558 = vmul.f32 %v456, %v1556
          %s1559 = sld [smem:[#allocation2 + $0x97]]
          %v1560 = vstv %s1559
          %v1561 = vmul.f32 %v475, %v1560
          %v1562 = vmul.f32 %v476, %v1560
          %v1563 = vadd.f32 %v1557, %v1561
          %v1564 = vadd.f32 %v1558, %v1562
          %s1565 = sld [smem:[#allocation2 + $0x117]]
          %v1566 = vstv %s1565
          %v1567 = vmul.f32 %v495, %v1566
          %v1568 = vmul.f32 %v496, %v1566
          %v1569 = vadd.f32 %v1563, %v1567
          %v1570 = vadd.f32 %v1564, %v1568
          %s1571 = sld [smem:[#allocation5 + $0x17]]
          %v1572 = vstv %s1571
          %v1573 = vadd.f32 %v1569, %v1572
          %v1574 = vadd.f32 %v1570, %v1572
          %v1575 = vmax.f32 %v1573, 0.0
          %v1576 = vmax.f32 %v1574, 0.0
          %s1577 = sld [smem:[#allocation7 + $0xb80]]
          %v1578 = vstv %s1577
          %v1579 = vmul.f32 %v1575, %v1578
          %v1580 = vmul.f32 %v1576, %v1578
          %v1581 = vadd.f32 %v1535, %v1579
          %v1582 = vadd.f32 %v1536, %v1580
          %s1583 = sld [smem:[#allocation7 + $0xb81]]
          %v1584 = vstv %s1583
          %v1585 = vmul.f32 %v1575, %v1584
          %v1586 = vmul.f32 %v1576, %v1584
          %v1587 = vadd.f32 %v1541, %v1585
          %v1588 = vadd.f32 %v1542, %v1586
          %s1589 = sld [smem:[#allocation7 + $0xb82]]
          %v1590 = vstv %s1589
          %v1591 = vmul.f32 %v1575, %v1590
          %v1592 = vmul.f32 %v1576, %v1590
          %v1593 = vadd.f32 %v1547, %v1591
          %v1594 = vadd.f32 %v1548, %v1592
          %s1595 = sld [smem:[#allocation7 + $0xb83]]
          %v1596 = vstv %s1595
          %v1597 = vmul.f32 %v1575, %v1596
          %v1598 = vmul.f32 %v1576, %v1596
          %v1599 = vadd.f32 %v1553, %v1597
          %v1600 = vadd.f32 %v1554, %v1598
          %s1601 = sld [smem:[#allocation2 + $0x18]]
          %v1602 = vstv %s1601
          %v1603 = vmul.f32 %v455, %v1602
          %v1604 = vmul.f32 %v456, %v1602
          %s1605 = sld [smem:[#allocation2 + $0x98]]
          %v1606 = vstv %s1605
          %v1607 = vmul.f32 %v475, %v1606
          %v1608 = vmul.f32 %v476, %v1606
          %v1609 = vadd.f32 %v1603, %v1607
          %v1610 = vadd.f32 %v1604, %v1608
          %s1611 = sld [smem:[#allocation2 + $0x118]]
          %v1612 = vstv %s1611
          %v1613 = vmul.f32 %v495, %v1612
          %v1614 = vmul.f32 %v496, %v1612
          %v1615 = vadd.f32 %v1609, %v1613
          %v1616 = vadd.f32 %v1610, %v1614
          %s1617 = sld [smem:[#allocation5 + $0x18]]
          %v1618 = vstv %s1617
          %v1619 = vadd.f32 %v1615, %v1618
          %v1620 = vadd.f32 %v1616, %v1618
          %v1621 = vmax.f32 %v1619, 0.0
          %v1622 = vmax.f32 %v1620, 0.0
          %s1623 = sld [smem:[#allocation7 + $0xc00]]
          %v1624 = vstv %s1623
          %v1625 = vmul.f32 %v1621, %v1624
          %v1626 = vmul.f32 %v1622, %v1624
          %v1627 = vadd.f32 %v1581, %v1625
          %v1628 = vadd.f32 %v1582, %v1626
          %s1629 = sld [smem:[#allocation7 + $0xc01]]
          %v1630 = vstv %s1629
          %v1631 = vmul.f32 %v1621, %v1630
          %v1632 = vmul.f32 %v1622, %v1630
          %v1633 = vadd.f32 %v1587, %v1631
          %v1634 = vadd.f32 %v1588, %v1632
          %s1635 = sld [smem:[#allocation7 + $0xc02]]
          %v1636 = vstv %s1635
          %v1637 = vmul.f32 %v1621, %v1636
          %v1638 = vmul.f32 %v1622, %v1636
          %v1639 = vadd.f32 %v1593, %v1637
          %v1640 = vadd.f32 %v1594, %v1638
          %s1641 = sld [smem:[#allocation7 + $0xc03]]
          %v1642 = vstv %s1641
          %v1643 = vmul.f32 %v1621, %v1642
          %v1644 = vmul.f32 %v1622, %v1642
          %v1645 = vadd.f32 %v1599, %v1643
          %v1646 = vadd.f32 %v1600, %v1644
          %s1647 = sld [smem:[#allocation2 + $0x19]]
          %v1648 = vstv %s1647
          %v1649 = vmul.f32 %v455, %v1648
          %v1650 = vmul.f32 %v456, %v1648
          %s1651 = sld [smem:[#allocation2 + $0x99]]
          %v1652 = vstv %s1651
          %v1653 = vmul.f32 %v475, %v1652
          %v1654 = vmul.f32 %v476, %v1652
          %v1655 = vadd.f32 %v1649, %v1653
          %v1656 = vadd.f32 %v1650, %v1654
          %s1657 = sld [smem:[#allocation2 + $0x119]]
          %v1658 = vstv %s1657
          %v1659 = vmul.f32 %v495, %v1658
          %v1660 = vmul.f32 %v496, %v1658
          %v1661 = vadd.f32 %v1655, %v1659
          %v1662 = vadd.f32 %v1656, %v1660
          %s1663 = sld [smem:[#allocation5 + $0x19]]
          %v1664 = vstv %s1663
          %v1665 = vadd.f32 %v1661, %v1664
          %v1666 = vadd.f32 %v1662, %v1664
          %v1667 = vmax.f32 %v1665, 0.0
          %v1668 = vmax.f32 %v1666, 0.0
          %s1669 = sld [smem:[#allocation7 + $0xc80]]
          %v1670 = vstv %s1669
          %v1671 = vmul.f32 %v1667, %v1670
          %v1672 = vmul.f32 %v1668, %v1670
          %v1673 = vadd.f32 %v1627, %v1671
          %v1674 = vadd.f32 %v1628, %v1672
          %s1675 = sld [smem:[#allocation7 + $0xc81]]
          %v1676 = vstv %s1675
          %v1677 = vmul.f32 %v1667, %v1676
          %v1678 = vmul.f32 %v1668, %v1676
          %v1679 = vadd.f32 %v1633, %v1677
          %v1680 = vadd.f32 %v1634, %v1678
          %s1681 = sld [smem:[#allocation7 + $0xc82]]
          %v1682 = vstv %s1681
          %v1683 = vmul.f32 %v1667, %v1682
          %v1684 = vmul.f32 %v1668, %v1682
          %v1685 = vadd.f32 %v1639, %v1683
          %v1686 = vadd.f32 %v1640, %v1684
          %s1687 = sld [smem:[#allocation7 + $0xc83]]
          %v1688 = vstv %s1687
          %v1689 = vmul.f32 %v1667, %v1688
          %v1690 = vmul.f32 %v1668, %v1688
          %v1691 = vadd.f32 %v1645, %v1689
          %v1692 = vadd.f32 %v1646, %v1690
          %s1693 = sld [smem:[#allocation2 + $0x1a]]
          %v1694 = vstv %s1693
          %v1695 = vmul.f32 %v455, %v1694
          %v1696 = vmul.f32 %v456, %v1694
          %s1697 = sld [smem:[#allocation2 + $0x9a]]
          %v1698 = vstv %s1697
          %v1699 = vmul.f32 %v475, %v1698
          %v1700 = vmul.f32 %v476, %v1698
          %v1701 = vadd.f32 %v1695, %v1699
          %v1702 = vadd.f32 %v1696, %v1700
          %s1703 = sld [smem:[#allocation2 + $0x11a]]
          %v1704 = vstv %s1703
          %v1705 = vmul.f32 %v495, %v1704
          %v1706 = vmul.f32 %v496, %v1704
          %v1707 = vadd.f32 %v1701, %v1705
          %v1708 = vadd.f32 %v1702, %v1706
          %s1709 = sld [smem:[#allocation5 + $0x1a]]
          %v1710 = vstv %s1709
          %v1711 = vadd.f32 %v1707, %v1710
          %v1712 = vadd.f32 %v1708, %v1710
          %v1713 = vmax.f32 %v1711, 0.0
          %v1714 = vmax.f32 %v1712, 0.0
          %s1715 = sld [smem:[#allocation7 + $0xd00]]
          %v1716 = vstv %s1715
          %v1717 = vmul.f32 %v1713, %v1716
          %v1718 = vmul.f32 %v1714, %v1716
          %v1719 = vadd.f32 %v1673, %v1717
          %v1720 = vadd.f32 %v1674, %v1718
          %s1721 = sld [smem:[#allocation7 + $0xd01]]
          %v1722 = vstv %s1721
          %v1723 = vmul.f32 %v1713, %v1722
          %v1724 = vmul.f32 %v1714, %v1722
          %v1725 = vadd.f32 %v1679, %v1723
          %v1726 = vadd.f32 %v1680, %v1724
          %s1727 = sld [smem:[#allocation7 + $0xd02]]
          %v1728 = vstv %s1727
          %v1729 = vmul.f32 %v1713, %v1728
          %v1730 = vmul.f32 %v1714, %v1728
          %v1731 = vadd.f32 %v1685, %v1729
          %v1732 = vadd.f32 %v1686, %v1730
          %s1733 = sld [smem:[#allocation7 + $0xd03]]
          %v1734 = vstv %s1733
          %v1735 = vmul.f32 %v1713, %v1734
          %v1736 = vmul.f32 %v1714, %v1734
          %v1737 = vadd.f32 %v1691, %v1735
          %v1738 = vadd.f32 %v1692, %v1736
          %s1739 = sld [smem:[#allocation2 + $0x1b]]
          %v1740 = vstv %s1739
          %v1741 = vmul.f32 %v455, %v1740
          %v1742 = vmul.f32 %v456, %v1740
          %s1743 = sld [smem:[#allocation2 + $0x9b]]
          %v1744 = vstv %s1743
          %v1745 = vmul.f32 %v475, %v1744
          %v1746 = vmul.f32 %v476, %v1744
          %v1747 = vadd.f32 %v1741, %v1745
          %v1748 = vadd.f32 %v1742, %v1746
          %s1749 = sld [smem:[#allocation2 + $0x11b]]
          %v1750 = vstv %s1749
          %v1751 = vmul.f32 %v495, %v1750
          %v1752 = vmul.f32 %v496, %v1750
          %v1753 = vadd.f32 %v1747, %v1751
          %v1754 = vadd.f32 %v1748, %v1752
          %s1755 = sld [smem:[#allocation5 + $0x1b]]
          %v1756 = vstv %s1755
          %v1757 = vadd.f32 %v1753, %v1756
          %v1758 = vadd.f32 %v1754, %v1756
          %v1759 = vmax.f32 %v1757, 0.0
          %v1760 = vmax.f32 %v1758, 0.0
          %s1761 = sld [smem:[#allocation7 + $0xd80]]
          %v1762 = vstv %s1761
          %v1763 = vmul.f32 %v1759, %v1762
          %v1764 = vmul.f32 %v1760, %v1762
          %v1765 = vadd.f32 %v1719, %v1763
          %v1766 = vadd.f32 %v1720, %v1764
          %s1767 = sld [smem:[#allocation7 + $0xd81]]
          %v1768 = vstv %s1767
          %v1769 = vmul.f32 %v1759, %v1768
          %v1770 = vmul.f32 %v1760, %v1768
          %v1771 = vadd.f32 %v1725, %v1769
          %v1772 = vadd.f32 %v1726, %v1770
          %s1773 = sld [smem:[#allocation7 + $0xd82]]
          %v1774 = vstv %s1773
          %v1775 = vmul.f32 %v1759, %v1774
          %v1776 = vmul.f32 %v1760, %v1774
          %v1777 = vadd.f32 %v1731, %v1775
          %v1778 = vadd.f32 %v1732, %v1776
          %s1779 = sld [smem:[#allocation7 + $0xd83]]
          %v1780 = vstv %s1779
          %v1781 = vmul.f32 %v1759, %v1780
          %v1782 = vmul.f32 %v1760, %v1780
          %v1783 = vadd.f32 %v1737, %v1781
          %v1784 = vadd.f32 %v1738, %v1782
          %s1785 = sld [smem:[#allocation2 + $0x1c]]
          %v1786 = vstv %s1785
          %v1787 = vmul.f32 %v455, %v1786
          %v1788 = vmul.f32 %v456, %v1786
          %s1789 = sld [smem:[#allocation2 + $0x9c]]
          %v1790 = vstv %s1789
          %v1791 = vmul.f32 %v475, %v1790
          %v1792 = vmul.f32 %v476, %v1790
          %v1793 = vadd.f32 %v1787, %v1791
          %v1794 = vadd.f32 %v1788, %v1792
          %s1795 = sld [smem:[#allocation2 + $0x11c]]
          %v1796 = vstv %s1795
          %v1797 = vmul.f32 %v495, %v1796
          %v1798 = vmul.f32 %v496, %v1796
          %v1799 = vadd.f32 %v1793, %v1797
          %v1800 = vadd.f32 %v1794, %v1798
          %s1801 = sld [smem:[#allocation5 + $0x1c]]
          %v1802 = vstv %s1801
          %v1803 = vadd.f32 %v1799, %v1802
          %v1804 = vadd.f32 %v1800, %v1802
          %v1805 = vmax.f32 %v1803, 0.0
          %v1806 = vmax.f32 %v1804, 0.0
          %s1807 = sld [smem:[#allocation7 + $0xe00]]
          %v1808 = vstv %s1807
          %v1809 = vmul.f32 %v1805, %v1808
          %v1810 = vmul.f32 %v1806, %v1808
          %v1811 = vadd.f32 %v1765, %v1809
          %v1812 = vadd.f32 %v1766, %v1810
          %s1813 = sld [smem:[#allocation7 + $0xe01]]
          %v1814 = vstv %s1813
          %v1815 = vmul.f32 %v1805, %v1814
          %v1816 = vmul.f32 %v1806, %v1814
          %v1817 = vadd.f32 %v1771, %v1815
          %v1818 = vadd.f32 %v1772, %v1816
          %s1819 = sld [smem:[#allocation7 + $0xe02]]
          %v1820 = vstv %s1819
          %v1821 = vmul.f32 %v1805, %v1820
          %v1822 = vmul.f32 %v1806, %v1820
          %v1823 = vadd.f32 %v1777, %v1821
          %v1824 = vadd.f32 %v1778, %v1822
          %s1825 = sld [smem:[#allocation7 + $0xe03]]
          %v1826 = vstv %s1825
          %v1827 = vmul.f32 %v1805, %v1826
          %v1828 = vmul.f32 %v1806, %v1826
          %v1829 = vadd.f32 %v1783, %v1827
          %v1830 = vadd.f32 %v1784, %v1828
          %s1831 = sld [smem:[#allocation2 + $0x1d]]
          %v1832 = vstv %s1831
          %v1833 = vmul.f32 %v455, %v1832
          %v1834 = vmul.f32 %v456, %v1832
          %s1835 = sld [smem:[#allocation2 + $0x9d]]
          %v1836 = vstv %s1835
          %v1837 = vmul.f32 %v475, %v1836
          %v1838 = vmul.f32 %v476, %v1836
          %v1839 = vadd.f32 %v1833, %v1837
          %v1840 = vadd.f32 %v1834, %v1838
          %s1841 = sld [smem:[#allocation2 + $0x11d]]
          %v1842 = vstv %s1841
          %v1843 = vmul.f32 %v495, %v1842
          %v1844 = vmul.f32 %v496, %v1842
          %v1845 = vadd.f32 %v1839, %v1843
          %v1846 = vadd.f32 %v1840, %v1844
          %s1847 = sld [smem:[#allocation5 + $0x1d]]
          %v1848 = vstv %s1847
          %v1849 = vadd.f32 %v1845, %v1848
          %v1850 = vadd.f32 %v1846, %v1848
          %v1851 = vmax.f32 %v1849, 0.0
          %v1852 = vmax.f32 %v1850, 0.0
          %s1853 = sld [smem:[#allocation7 + $0xe80]]
          %v1854 = vstv %s1853
          %v1855 = vmul.f32 %v1851, %v1854
          %v1856 = vmul.f32 %v1852, %v1854
          %v1857 = vadd.f32 %v1811, %v1855
          %v1858 = vadd.f32 %v1812, %v1856
          %s1859 = sld [smem:[#allocation7 + $0xe81]]
          %v1860 = vstv %s1859
          %v1861 = vmul.f32 %v1851, %v1860
          %v1862 = vmul.f32 %v1852, %v1860
          %v1863 = vadd.f32 %v1817, %v1861
          %v1864 = vadd.f32 %v1818, %v1862
          %s1865 = sld [smem:[#allocation7 + $0xe82]]
          %v1866 = vstv %s1865
          %v1867 = vmul.f32 %v1851, %v1866
          %v1868 = vmul.f32 %v1852, %v1866
          %v1869 = vadd.f32 %v1823, %v1867
          %v1870 = vadd.f32 %v1824, %v1868
          %s1871 = sld [smem:[#allocation7 + $0xe83]]
          %v1872 = vstv %s1871
          %v1873 = vmul.f32 %v1851, %v1872
          %v1874 = vmul.f32 %v1852, %v1872
          %v1875 = vadd.f32 %v1829, %v1873
          %v1876 = vadd.f32 %v1830, %v1874
          %s1877 = sld [smem:[#allocation2 + $0x1e]]
          %v1878 = vstv %s1877
          %v1879 = vmul.f32 %v455, %v1878
          %v1880 = vmul.f32 %v456, %v1878
          %s1881 = sld [smem:[#allocation2 + $0x9e]]
          %v1882 = vstv %s1881
          %v1883 = vmul.f32 %v475, %v1882
          %v1884 = vmul.f32 %v476, %v1882
          %v1885 = vadd.f32 %v1879, %v1883
          %v1886 = vadd.f32 %v1880, %v1884
          %s1887 = sld [smem:[#allocation2 + $0x11e]]
          %v1888 = vstv %s1887
          %v1889 = vmul.f32 %v495, %v1888
          %v1890 = vmul.f32 %v496, %v1888
          %v1891 = vadd.f32 %v1885, %v1889
          %v1892 = vadd.f32 %v1886, %v1890
          %s1893 = sld [smem:[#allocation5 + $0x1e]]
          %v1894 = vstv %s1893
          %v1895 = vadd.f32 %v1891, %v1894
          %v1896 = vadd.f32 %v1892, %v1894
          %v1897 = vmax.f32 %v1895, 0.0
          %v1898 = vmax.f32 %v1896, 0.0
          %s1899 = sld [smem:[#allocation7 + $0xf00]]
          %v1900 = vstv %s1899
          %v1901 = vmul.f32 %v1897, %v1900
          %v1902 = vmul.f32 %v1898, %v1900
          %v1903 = vadd.f32 %v1857, %v1901
          %v1904 = vadd.f32 %v1858, %v1902
          %s1905 = sld [smem:[#allocation7 + $0xf01]]
          %v1906 = vstv %s1905
          %v1907 = vmul.f32 %v1897, %v1906
          %v1908 = vmul.f32 %v1898, %v1906
          %v1909 = vadd.f32 %v1863, %v1907
          %v1910 = vadd.f32 %v1864, %v1908
          %s1911 = sld [smem:[#allocation7 + $0xf02]]
          %v1912 = vstv %s1911
          %v1913 = vmul.f32 %v1897, %v1912
          %v1914 = vmul.f32 %v1898, %v1912
          %v1915 = vadd.f32 %v1869, %v1913
          %v1916 = vadd.f32 %v1870, %v1914
          %s1917 = sld [smem:[#allocation7 + $0xf03]]
          %v1918 = vstv %s1917
          %v1919 = vmul.f32 %v1897, %v1918
          %v1920 = vmul.f32 %v1898, %v1918
          %v1921 = vadd.f32 %v1875, %v1919
          %v1922 = vadd.f32 %v1876, %v1920
          %s1923 = sld [smem:[#allocation2 + $0x1f]]
          %v1924 = vstv %s1923
          %v1925 = vmul.f32 %v455, %v1924
          %v1926 = vmul.f32 %v456, %v1924
          %s1927 = sld [smem:[#allocation2 + $0x9f]]
          %v1928 = vstv %s1927
          %v1929 = vmul.f32 %v475, %v1928
          %v1930 = vmul.f32 %v476, %v1928
          %v1931 = vadd.f32 %v1925, %v1929
          %v1932 = vadd.f32 %v1926, %v1930
          %s1933 = sld [smem:[#allocation2 + $0x11f]]
          %v1934 = vstv %s1933
          %v1935 = vmul.f32 %v495, %v1934
          %v1936 = vmul.f32 %v496, %v1934
          %v1937 = vadd.f32 %v1931, %v1935
          %v1938 = vadd.f32 %v1932, %v1936
          %s1939 = sld [smem:[#allocation5 + $0x1f]]
          %v1940 = vstv %s1939
          %v1941 = vadd.f32 %v1937, %v1940
          %v1942 = vadd.f32 %v1938, %v1940
          %v1943 = vmax.f32 %v1941, 0.0
          %v1944 = vmax.f32 %v1942, 0.0
          %s1945 = sld [smem:[#allocation7 + $0xf80]]
          %v1946 = vstv %s1945
          %v1947 = vmul.f32 %v1943, %v1946
          %v1948 = vmul.f32 %v1944, %v1946
          %v1949 = vadd.f32 %v1903, %v1947
          %v1950 = vadd.f32 %v1904, %v1948
          %s1951 = sld [smem:[#allocation7 + $0xf81]]
          %v1952 = vstv %s1951
          %v1953 = vmul.f32 %v1943, %v1952
          %v1954 = vmul.f32 %v1944, %v1952
          %v1955 = vadd.f32 %v1909, %v1953
          %v1956 = vadd.f32 %v1910, %v1954
          %s1957 = sld [smem:[#allocation7 + $0xf82]]
          %v1958 = vstv %s1957
          %v1959 = vmul.f32 %v1943, %v1958
          %v1960 = vmul.f32 %v1944, %v1958
          %v1961 = vadd.f32 %v1915, %v1959
          %v1962 = vadd.f32 %v1916, %v1960
          %s1963 = sld [smem:[#allocation7 + $0xf83]]
          %v1964 = vstv %s1963
          %v1965 = vmul.f32 %v1943, %v1964
          %v1966 = vmul.f32 %v1944, %v1964
          %v1967 = vadd.f32 %v1921, %v1965
          %v1968 = vadd.f32 %v1922, %v1966
          %s1969 = sld [smem:[#allocation8]]
          %v1970 = vstv %s1969
          %v1971 = vadd.f32 %v1949, %v1970
          %v1972 = vadd.f32 %v1950, %v1970
          %v1973 = vxor.u32 %v1971, 2147483648
          %v1974 = vxor.u32 %v1972, 2147483648
          %v1975 = vmul.f32 %v1973, 1.442695
          %v1976 = vpow.pop %v1975
          %v1977 = vmul.f32 %v1974, 1.442695
          %v1978 = vpow.pop %v1977
          %v1979 = vadd.f32 %v1976, 1.0
          %v1980 = vadd.f32 %v1978, 1.0
          %v1981 = vrcp.pop %v1979
          %v1982 = vmul.f32 1.0, %v1981
          %v1983 = vrcp.pop %v1980
          %v1984 = vmul.f32 1.0, %v1983
          %s1985 = sld [smem:[#allocation8 + $0x1]]
          %v1986 = vstv %s1985
          %v1987 = vadd.f32 %v1955, %v1986
          %v1988 = vadd.f32 %v1956, %v1986
          %v1989 = vxor.u32 %v1987, 2147483648
          %v1990 = vxor.u32 %v1988, 2147483648
          %v1991 = vmul.f32 %v1989, 1.442695
          %v1992 = vpow.pop %v1991
          %v1993 = vmul.f32 %v1990, 1.442695
          %v1994 = vpow.pop %v1993
          %v1995 = vadd.f32 %v1992, 1.0
          %v1996 = vadd.f32 %v1994, 1.0
          %v1997 = vrcp.pop %v1995
          %v1998 = vmul.f32 1.0, %v1997
          %v1999 = vrcp.pop %v1996
          %v2000 = vmul.f32 1.0, %v1999
          %s2001 = sld [smem:[#allocation8 + $0x2]]
          %v2002 = vstv %s2001
          %v2003 = vadd.f32 %v1961, %v2002
          %v2004 = vadd.f32 %v1962, %v2002
          %v2005 = vxor.u32 %v2003, 2147483648
          %v2006 = vxor.u32 %v2004, 2147483648
          %v2007 = vmul.f32 %v2005, 1.442695
          %v2008 = vpow.pop %v2007
          %v2009 = vmul.f32 %v2006, 1.442695
          %v2010 = vpow.pop %v2009
          %v2011 = vadd.f32 %v2008, 1.0
          %v2012 = vadd.f32 %v2010, 1.0
          %v2013 = vrcp.pop %v2011
          %v2014 = vmul.f32 1.0, %v2013
          %v2015 = vrcp.pop %v2012
          %v2016 = vmul.f32 1.0, %v2015
          %s2017 = sld [smem:[#allocation8 + $0x3]]
          %v2018 = vstv %s2017
          %v2019 = vadd.f32 %v1967, %v2018
          %v2020 = vadd.f32 %v1968, %v2018
          %v2021 = vmax.f32 %v2019, 0.0
          %v2022 = vmax.f32 %v2020, 0.0
          %v2023 = vlaneseq
          %v2024 = vshrl.u32 %v2023, 7
          %v2025 = vsub.s32 7, %v2024
          %v2026 = vrot.slane %v415, %v2025
          %v2027 = vlaneseq
          %v2028 = vshrl.u32 %v2027, 7
          %v2029 = vsub.s32 7, %v2028
          %v2030 = vrot.slane %v416, %v2029
          %v2031 = vsel %vm363, 1e+10, %v2026
          %v2032 = vsel %vm363, 1e+10, %v2030
          %v2033 = vlaneseq
          %v2034 = vshrl.u32 %v2033, 7
          %v2035 = vsub.s32 3, %v2034
          %v2036 = vrot.slane %v407, %v2035
          %v2037 = vlaneseq
          %v2038 = vshrl.u32 %v2037, 7
          %v2039 = vsub.s32 3, %v2038
          %v2040 = vrot.slane %v414, %v2039
          %v2041 = vmul.f32 %v2031, %v2036
          %v2042 = vmul.f32 %v2032, %v2040
          %v2043 = vsub.f32 0.0, %v2021
          %v2044 = vsub.f32 0.0, %v2022
          %v2045 = vmul.f32 %v2043, %v2041
          %v2046 = vmul.f32 %v2044, %v2042
          %v2047 = vmul.f32 %v2045, 1.442695
          %v2048 = vpow.pop %v2047
          %v2049 = vmul.f32 %v2046, 1.442695
          %v2050 = vpow.pop %v2049
          %v2051 = vsub.f32 1.0, %v2048
          %v2052 = vsub.f32 1.0, %v2050
          %v2053 = vsub.f32 1.0, %v2051
          %v2054 = vsub.f32 1.0, %v2052
          %v2055 = vadd.f32 %v2053, 1e-10
          %v2056 = vadd.f32 %v2054, 1e-10
          %vm2057 = vcmp.eq.s32.totalorder %v360, 1
          %v2058 = vlaneseq
          %v2059 = vshrl.u32 %v2058, 7
          %v2060 = vsub.s32 0, %v2059
          %v2061 = vrot.slane %v2055, %v2060
          %v2062 = vlaneseq
          %v2063 = vshrl.u32 %v2062, 7
          %v2064 = vsub.s32 0, %v2063
          %v2065 = vrot.slane %v2056, %v2064
          %v2066 = vsel %vm2057, %v2061, 1.0
          %v2067 = vsel %vm2057, %v2065, 1.0
          %v2070 = vrot.slane %v2055, 1
          %v2071 = vrot.slane %v2056, 1
          %v2074 = vmul.f32 %v2055, %v2070
          %v2075 = vmul.f32 %v2056, %v2071
          %vm2076 = vcmp.eq.s32.totalorder %v360, 2
          %v2077 = vlaneseq
          %v2078 = vshrl.u32 %v2077, 7
          %v2079 = vsub.s32 0, %v2078
          %v2080 = vrot.slane %v2074, %v2079
          %v2081 = vlaneseq
          %v2082 = vshrl.u32 %v2081, 7
          %v2083 = vsub.s32 0, %v2082
          %v2084 = vrot.slane %v2075, %v2083
          %v2085 = vsel %vm2076, %v2080, %v2066
          %v2086 = vsel %vm2076, %v2084, %v2067
          %v2087 = vrot.slane %v2055, 2
          %v2088 = vrot.slane %v2056, 2
          %v2091 = vmul.f32 %v2074, %v2087
          %v2092 = vmul.f32 %v2075, %v2088
          %vm2093 = vcmp.eq.s32.totalorder %v360, 3
          %v2094 = vlaneseq
          %v2095 = vshrl.u32 %v2094, 7
          %v2096 = vsub.s32 0, %v2095
          %v2097 = vrot.slane %v2091, %v2096
          %v2098 = vlaneseq
          %v2099 = vshrl.u32 %v2098, 7
          %v2100 = vsub.s32 0, %v2099
          %v2101 = vrot.slane %v2092, %v2100
          %v2102 = vsel %vm2093, %v2097, %v2085
          %v2103 = vsel %vm2093, %v2101, %v2086
          %v2104 = vrot.slane %v2055, 3
          %v2105 = vrot.slane %v2056, 3
          %v2108 = vmul.f32 %v2091, %v2104
          %v2109 = vmul.f32 %v2092, %v2105
          %vm2110 = vcmp.eq.s32.totalorder %v360, 4
          %v2111 = vlaneseq
          %v2112 = vshrl.u32 %v2111, 7
          %v2113 = vsub.s32 0, %v2112
          %v2114 = vrot.slane %v2108, %v2113
          %v2115 = vlaneseq
          %v2116 = vshrl.u32 %v2115, 7
          %v2117 = vsub.s32 0, %v2116
          %v2118 = vrot.slane %v2109, %v2117
          %v2119 = vsel %vm2110, %v2114, %v2102
          %v2120 = vsel %vm2110, %v2118, %v2103
          %v2121 = vrot.slane %v2055, 4
          %v2122 = vrot.slane %v2056, 4
          %v2125 = vmul.f32 %v2108, %v2121
          %v2126 = vmul.f32 %v2109, %v2122
          %vm2127 = vcmp.eq.s32.totalorder %v360, 5
          %v2128 = vlaneseq
          %v2129 = vshrl.u32 %v2128, 7
          %v2130 = vsub.s32 0, %v2129
          %v2131 = vrot.slane %v2125, %v2130
          %v2132 = vlaneseq
          %v2133 = vshrl.u32 %v2132, 7
          %v2134 = vsub.s32 0, %v2133
          %v2135 = vrot.slane %v2126, %v2134
          %v2136 = vsel %vm2127, %v2131, %v2119
          %v2137 = vsel %vm2127, %v2135, %v2120
          %v2138 = vrot.slane %v2055, 5
          %v2139 = vrot.slane %v2056, 5
          %v2142 = vmul.f32 %v2125, %v2138
          %v2143 = vmul.f32 %v2126, %v2139
          %vm2144 = vcmp.eq.s32.totalorder %v360, 6
          %v2145 = vlaneseq
          %v2146 = vshrl.u32 %v2145, 7
          %v2147 = vsub.s32 0, %v2146
          %v2148 = vrot.slane %v2142, %v2147
          %v2149 = vlaneseq
          %v2150 = vshrl.u32 %v2149, 7
          %v2151 = vsub.s32 0, %v2150
          %v2152 = vrot.slane %v2143, %v2151
          %v2153 = vsel %vm2144, %v2148, %v2136
          %v2154 = vsel %vm2144, %v2152, %v2137
          %v2155 = vrot.slane %v2055, 6
          %v2156 = vrot.slane %v2056, 6
          %v2159 = vmul.f32 %v2142, %v2155
          %v2160 = vmul.f32 %v2143, %v2156
          %v2161 = vlaneseq
          %v2162 = vshrl.u32 %v2161, 7
          %v2163 = vsub.s32 0, %v2162
          %v2164 = vrot.slane %v2159, %v2163
          %v2165 = vlaneseq
          %v2166 = vshrl.u32 %v2165, 7
          %v2167 = vsub.s32 0, %v2166
          %v2168 = vrot.slane %v2160, %v2167
          %v2169 = vsel %vm363, %v2164, %v2153
          %v2170 = vsel %vm363, %v2168, %v2154
          %v2171 = vmul.f32 %v2051, %v2169
          %v2172 = vmul.f32 %v2052, %v2170
          %v2173 = vrot.slane %v2171, 4
          %v2174 = vadd.f32 %v2171, %v2173
          %v2175 = vrot.slane %v2174, 2
          %v2176 = vadd.f32 %v2174, %v2175
          %v2177 = vrot.slane %v2176, 1
          %v2178 = vadd.f32 %v2176, %v2177
          %v2179 = vrot.slane %v2172, 4
          %v2180 = vadd.f32 %v2172, %v2179
          %v2181 = vrot.slane %v2180, 2
          %v2182 = vadd.f32 %v2180, %v2181
          %v2183 = vrot.slane %v2182, 1
          %v2184 = vadd.f32 %v2182, %v2183
          %v2185 = vmul.f32 %v2171, %v435
          %v2186 = vmul.f32 %v2172, %v436
          %v2187 = vrot.slane %v2185, 4
          %v2188 = vadd.f32 %v2185, %v2187
          %v2189 = vrot.slane %v2188, 2
          %v2190 = vadd.f32 %v2188, %v2189
          %v2191 = vrot.slane %v2190, 1
          %v2192 = vadd.f32 %v2190, %v2191
          %v2193 = vrot.slane %v2186, 4
          %v2194 = vadd.f32 %v2186, %v2193
          %v2195 = vrot.slane %v2194, 2
          %v2196 = vadd.f32 %v2194, %v2195
          %v2197 = vrot.slane %v2196, 1
          %v2198 = vadd.f32 %v2196, %v2197
          %v2199 = vmul.f32 %v2171, %v1982
          %v2200 = vmul.f32 %v2172, %v1984
          %v2201 = vrot.slane %v2199, 4
          %v2202 = vadd.f32 %v2199, %v2201
          %v2203 = vrot.slane %v2202, 2
          %v2204 = vadd.f32 %v2202, %v2203
          %v2205 = vrot.slane %v2204, 1
          %v2206 = vadd.f32 %v2204, %v2205
          %v2207 = vrot.slane %v2200, 4
          %v2208 = vadd.f32 %v2200, %v2207
          %v2209 = vrot.slane %v2208, 2
          %v2210 = vadd.f32 %v2208, %v2209
          %v2211 = vrot.slane %v2210, 1
          %v2212 = vadd.f32 %v2210, %v2211
          %v2213 = vmul.f32 %v2171, %v1998
          %v2214 = vmul.f32 %v2172, %v2000
          %v2215 = vrot.slane %v2213, 4
          %v2216 = vadd.f32 %v2213, %v2215
          %v2217 = vrot.slane %v2216, 2
          %v2218 = vadd.f32 %v2216, %v2217
          %v2219 = vrot.slane %v2218, 1
          %v2220 = vadd.f32 %v2218, %v2219
          %v2221 = vrot.slane %v2214, 4
          %v2222 = vadd.f32 %v2214, %v2221
          %v2223 = vrot.slane %v2222, 2
          %v2224 = vadd.f32 %v2222, %v2223
          %v2225 = vrot.slane %v2224, 1
          %v2226 = vadd.f32 %v2224, %v2225
          %v2227 = vmul.f32 %v2171, %v2014
          %v2228 = vmul.f32 %v2172, %v2016
          %v2229 = vrot.slane %v2227, 4
          %v2230 = vadd.f32 %v2227, %v2229
          %v2231 = vrot.slane %v2230, 2
          %v2232 = vadd.f32 %v2230, %v2231
          %v2233 = vrot.slane %v2232, 1
          %v2234 = vadd.f32 %v2232, %v2233
          %v2235 = vrot.slane %v2228, 4
          %v2236 = vadd.f32 %v2228, %v2235
          %v2237 = vrot.slane %v2236, 2
          %v2238 = vadd.f32 %v2236, %v2237
          %v2239 = vrot.slane %v2238, 1
          %v2240 = vadd.f32 %v2238, %v2239
          %v2241 = vmax.f32 %v2178, 1e-10
          %v2242 = vmax.f32 %v2184, 1e-10
          %v2243 = vrcp.pop %v2241
          %v2244 = vrcp.pop %v2242
          %v2245 = vmul.f32 %v2192, %v2243
          %v2246 = vmul.f32 %v2198, %v2244
          %v2247 = vmax.f32 %v2245, 1e-10
          %v2248 = vmax.f32 %v2246, 1e-10
          %v2249 = vrcp.pop %v2247
          %v2250 = vrcp.pop %v2248
          %s2251 = smul.addr %s371, 8
          %s2252 = scalar_lea.vmem %s337, %s2251 [#allocation10]
          %2253 = vst [vmem:[%s2252] sm:$0xff] %v2171
          %2254 = vst [vmem:[%s2252 + $0x8] sm:$0xff] %v2172
          %s2255 = smul.addr %s371, 8
          %s2256 = scalar_lea.vmem %s344, %s2255 [#allocation11]
          %2257 = vst [vmem:[%s2256] sm:$0xff] %v2051
          %2258 = vst [vmem:[%s2256 + $0x8] sm:$0xff] %v2052
          %v2261 = vcombine.low %v2206, %v2212
          %v2263 = vunpack.c.l.s4 1966171168
          %v2264 = vunpack.c.0.s8 %v2263
          %v2265 = vlaneseq
          %v2266 = vshrl.u32 %v2265, 7
          %v2267 = vsub.s32 %v2264, %v2266
          %v2268 = vrot.slane %v2261, %v2267
          %v2270 = vunpack.c.l.s4 1966171168
          %v2271 = vunpack.c.0.s8 %v2270
          %v2272 = vlaneseq
          %v2273 = vshrl.u32 %v2272, 7
          %v2274 = vsub.s32 %v2271, %v2273
          %v2275 = vrot.slane %v2268, %v2274
          %s2277 = smul.addr %s371, 8
          %s2278 = scalar_lea.vmem %s355, %s2277
          %v2279 = vlaneseq
          %vm2280 = vcmp.ge.s32.totalorder %v2279, 0
          %vm2281 = vcmp.lt.s32.totalorder %v2279, 256
          %vm2282 = vmand %vm2280, %vm2281
          %2283 = vst.msk [vmem:[%s2278] ss:$8 sm:$0x3] %vm2282, %v2275
          %2284 = vst.msk [vmem:[%s2278] ss:$8 sm:$0x0] %vm2282, %v2275
          %v2287 = vcombine.low %v2220, %v2226
          %v2289 = vunpack.c.l.s4 1966171168
          %v2290 = vunpack.c.0.s8 %v2289
          %v2291 = vlaneseq
          %v2292 = vshrl.u32 %v2291, 7
          %v2293 = vsub.s32 %v2290, %v2292
          %v2294 = vrot.slane %v2287, %v2293
          %v2296 = vunpack.c.l.s4 1966171168
          %v2297 = vunpack.c.0.s8 %v2296
          %v2298 = vlaneseq
          %v2299 = vshrl.u32 %v2298, 7
          %v2300 = vsub.s32 %v2297, %v2299
          %v2301 = vrot.slane %v2294, %v2300
          %s2303 = scalar_lea.vmem %s2278, 1
          %2304 = vst.msk [vmem:[%s2303] ss:$8 sm:$0x3] %vm2282, %v2301
          %2305 = vst.msk [vmem:[%s2303] ss:$8 sm:$0x0] %vm2282, %v2301
          %v2308 = vcombine.low %v2234, %v2240
          %v2310 = vunpack.c.l.s4 1966171168
          %v2311 = vunpack.c.0.s8 %v2310
          %v2312 = vlaneseq
          %v2313 = vshrl.u32 %v2312, 7
          %v2314 = vsub.s32 %v2311, %v2313
          %v2315 = vrot.slane %v2308, %v2314
          %v2317 = vunpack.c.l.s4 1966171168
          %v2318 = vunpack.c.0.s8 %v2317
          %v2319 = vlaneseq
          %v2320 = vshrl.u32 %v2319, 7
          %v2321 = vsub.s32 %v2318, %v2320
          %v2322 = vrot.slane %v2315, %v2321
          %s2324 = scalar_lea.vmem %s2278, 2
          %2325 = vst.msk [vmem:[%s2324] ss:$8 sm:$0x3] %vm2282, %v2322
          %2326 = vst.msk [vmem:[%s2324] ss:$8 sm:$0x0] %vm2282, %v2322
          %v2329 = vcombine.low %v2249, %v2250
          %v2331 = vunpack.c.l.s4 1966171168
          %v2332 = vunpack.c.0.s8 %v2331
          %v2333 = vlaneseq
          %v2334 = vshrl.u32 %v2333, 7
          %v2335 = vsub.s32 %v2332, %v2334
          %v2336 = vrot.slane %v2329, %v2335
          %v2338 = vunpack.c.l.s4 1966171168
          %v2339 = vunpack.c.0.s8 %v2338
          %v2340 = vlaneseq
          %v2341 = vshrl.u32 %v2340, 7
          %v2342 = vsub.s32 %v2339, %v2341
          %v2343 = vrot.slane %v2336, %v2342
          %s2345 = scalar_lea.vmem %s2278, 3
          %2346 = vst.msk [vmem:[%s2345] ss:$8 sm:$0x3] %vm2282, %v2343
          %2347 = vst.msk [vmem:[%s2345] ss:$8 sm:$0x0] %vm2282, %v2343
          %v2350 = vcombine.low %v2178, %v2184
          %v2352 = vunpack.c.l.s4 1966171168
          %v2353 = vunpack.c.0.s8 %v2352
          %v2354 = vlaneseq
          %v2355 = vshrl.u32 %v2354, 7
          %v2356 = vsub.s32 %v2353, %v2355
          %v2357 = vrot.slane %v2350, %v2356
          %v2359 = vunpack.c.l.s4 1966171168
          %v2360 = vunpack.c.0.s8 %v2359
          %v2361 = vlaneseq
          %v2362 = vshrl.u32 %v2361, 7
          %v2363 = vsub.s32 %v2360, %v2362
          %v2364 = vrot.slane %v2357, %v2363
          %s2366 = scalar_lea.vmem %s2278, 4
          %2367 = vst.msk [vmem:[%s2366] ss:$8 sm:$0x3] %vm2282, %v2364
          %2368 = vst.msk [vmem:[%s2366] ss:$8 sm:$0x0] %vm2282, %v2364
          %2369 = vst [vmem:[%s2278] sm:$0xe0] 0.0
          %2370 = vst [vmem:[%s2278 + $0x8] sm:$0xe0] 0.0
        $region61: #{raycast_render_rays.1} parent=39 // loop_footer
          %s369 = sadd.s32 1, %s365
        $region62: #{raycast_render_rays.1} parent=39 // loop_footer_branch
          %364 = sbr.rel target = $region58
        $region63: #{raycast_render_rays.1} parent=39 // loop_exit
          _
        %s2371 = smul.u32 16, %s28
        %p2372 = scmp.lt.s32.totalorder %s2371, 31
        %s2373 = scalar_select %p2372, %s2371, 31
        %s2374 = smul.addr %s2373, 8
        %s2375 = scalar_lea.vmem %s5, %s2374
        %s2376 = sand.u32 %s172, 1
        %s2377 = scalar_lea.sflag [#allocation3], %s2376
        %s2378 = sand.u32 %s172, 1
        %s2379 = smul.addr %s2378, 128
        %s2380 = scalar_lea.vmem [#allocation10], %s2379
        %s2381 = sand.u32 %s198, 1
        %s2382 = scalar_lea.sflag [#allocation12], %s2381
        %s2383 = sand.u32 %s198, 1
        %s2384 = smul.addr %s2383, 128
        %s2385 = scalar_lea.vmem [#allocation11], %s2384
        // Predicated region
        $region64: #{raycast_render_rays.1} parent=39 // pred_check
          %p2386 = pneg %p156
        $region65: #{raycast_render_rays.1} parent=39 // pred_check_branch
          %2388 = sbr.rel (%p2386) target = $region67
        $region66: #{raycast_render_rays.1} parent=39 // pred_region
          %s2389 = smul.u32 16, %s28
        $region67: #{raycast_render_rays.1} parent=39 // pred_fallthru
          _
        // Predicated region
        $region68: #{raycast_render_rays.1} parent=39 // pred_check
          %p2390 = pneg %p182
        $region69: #{raycast_render_rays.1} parent=39 // pred_check_branch
          %2392 = sbr.rel (%p2390) target = $region71
        $region70: #{raycast_render_rays.1} parent=39 // pred_region
          %s2393 = smul.u32 16, %s28
          %s2395 = ssub.s32 2048, 2048
          %2396 = vsyncadd %s2377, %s2395
          %s2397 = smul.addr %s2393, 128
          %s2398 = scalar_lea.hbm %s6, %s2397
          %s2400 = sshll.u32 %s2380, 4
          %s2401 = int_to_ptr.vmem [resolvable:$true] %s2400
          %2403 = dma.vmem_to_hbm [thread:$0]  %s2401, 2048, %s2398, %s2377
        $region71: #{raycast_render_rays.1} parent=39 // pred_fallthru
          _
        // Predicated region
        $region72: #{raycast_render_rays.1} parent=39 // pred_check
          %p2404 = pneg %p208
        $region73: #{raycast_render_rays.1} parent=39 // pred_check_branch
          %2406 = sbr.rel (%p2404) target = $region75
        $region74: #{raycast_render_rays.1} parent=39 // pred_region
          %s2407 = smul.u32 16, %s28
          %s2409 = ssub.s32 2048, 2048
          %2410 = vsyncadd %s2382, %s2409
          %s2411 = smul.addr %s2407, 128
          %s2412 = scalar_lea.hbm %s7, %s2411
          %s2414 = sshll.u32 %s2385, 4
          %s2415 = int_to_ptr.vmem [resolvable:$true] %s2414
          %2417 = dma.vmem_to_hbm [thread:$0]  %s2415, 2048, %s2412, %s2382
        $region75: #{raycast_render_rays.1} parent=39 // pred_fallthru
          _
      $region40: #{raycast_render_rays.1} parent=5 // pred_fallthru
        _
      %p2418 = scmp.le.s32.totalorder 2, %s23
      // Predicated region
      $region76: #{raycast_render_rays.1} parent=5 // pred_check
        %p2419 = pneg %p2418
      $region77: #{raycast_render_rays.1} parent=5 // pred_check_branch
        %2421 = sbr.rel (%p2419) target = $region79
      $region78: #{raycast_render_rays.1} parent=5 // pred_region
        %s2422 = ssub.s32 %s23, 2
        // Predicated region
        $region80: #{raycast_render_rays.1} parent=78 // pred_check
          %p2423 = pneg %p162
        $region81: #{raycast_render_rays.1} parent=78 // pred_check_branch
          %2425 = sbr.rel (%p2423) target = $region83
        $region82: #{raycast_render_rays.1} parent=78 // pred_region
          %s2426 = smul.u32 16, %s29
          %p2427 = scmp.lt.s32.totalorder %s2426, 31
          %s2428 = scalar_select %p2427, %s2426, 31
          %s2429 = smul.addr %s2428, 8
          %s2430 = scalar_lea.vmem %s5, %s2429
        $region83: #{raycast_render_rays.1} parent=78 // pred_fallthru
          _
        // Predicated region
        $region84: #{raycast_render_rays.1} parent=78 // pred_check
          %p2431 = pneg %p188
        $region85: #{raycast_render_rays.1} parent=78 // pred_check_branch
          %2433 = sbr.rel (%p2431) target = $region87
        $region86: #{raycast_render_rays.1} parent=78 // pred_region
          %s2434 = sand.u32 %s173, 1
          %s2435 = scalar_lea.sflag [#allocation3], %s2434
          %s2436 = sand.u32 %s173, 1
          %s2437 = smul.addr %s2436, 128
          %s2438 = scalar_lea.vmem [#allocation10], %s2437
          %2439 = dma.done %s2435, 2048
        $region87: #{raycast_render_rays.1} parent=78 // pred_fallthru
          _
        // Predicated region
        $region88: #{raycast_render_rays.1} parent=78 // pred_check
          %p2440 = pneg %p214
        $region89: #{raycast_render_rays.1} parent=78 // pred_check_branch
          %2442 = sbr.rel (%p2440) target = $region91
        $region90: #{raycast_render_rays.1} parent=78 // pred_region
          %s2443 = sand.u32 %s199, 1
          %s2444 = scalar_lea.sflag [#allocation12], %s2443
          %s2445 = sand.u32 %s199, 1
          %s2446 = smul.addr %s2445, 128
          %s2447 = scalar_lea.vmem [#allocation11], %s2446
          %2448 = dma.done %s2444, 2048
        $region91: #{raycast_render_rays.1} parent=78 // pred_fallthru
          _
      $region79: #{raycast_render_rays.1} parent=5 // pred_fallthru
        _
    $region6: #{raycast_render_rays.1} parent=1 // loop_footer
      %s27 = sadd.s32 1, %s23
    $region7: #{raycast_render_rays.1} parent=1 // loop_footer_branch
      %22 = sbr.rel target = $region3
    $region8: #{raycast_render_rays.1} parent=1 // loop_exit
      _
    %2449 = vsyncpa [#allocation3], 1
    %s2450 = scalar_lea.sflag [#allocation3], 1
    %2451 = vsyncpa %s2450, 1
    %2452 = vsyncpa [#allocation12], 1
    %s2453 = scalar_lea.sflag [#allocation12], 1
    %2454 = vsyncpa %s2453, 1
    %2455 = vsyncpa [#allocation4], 1
    %s2456 = scalar_lea.sflag [#allocation4], 1
    %2457 = vsyncpa %s2456, 1
    %2458 = vsyncpa [#allocation6], 1
    %2459 = vsyncpa [#allocation9], 1

</llo_original>
